<compile_context>
chip_gen: v7x
topology: tpu7x:2x2x1
jax: 0.10.0
libtpu: 0.0.40
codegen_flags: <defaults>
</compile_context>

<pallas_src>
import functools

import jax
import jax.numpy as jnp
from jax.experimental import pallas as pl
from jax.experimental.pallas import tpu as pltpu

HID_DIM = 32
N_HEADS = 4
HEAD_DIM = HID_DIM // N_HEADS
PF_DIM = 64
LN_EPS = 1e-5
NEG_INF = -1e10


# ---------------- in-kernel helpers ----------------
def _layer_norm(y, gamma, beta):
    mean = jnp.mean(y, axis=-1, keepdims=True)
    var = jnp.mean((y - mean) ** 2, axis=-1, keepdims=True)
    return (y - mean) * jax.lax.rsqrt(var + LN_EPS) * gamma + beta


def _sdpa(q_b, k_b, v_b, add_mask, n_heads, head_dim, inv_scale, collect_attn):
    """Per-batch-element multi-head masked SDPA.

    q_b: [Lq, D], k_b/v_b: [Lk, D], add_mask: broadcastable to [Lq, Lk].
    Returns (ctx [Lq, D], list of per-head attn [1, Lq, Lk] if collect_attn).
    """
    ctx_parts = []
    attn_parts = []
    for h in range(n_heads):
        sl = slice(h * head_dim, (h + 1) * head_dim)
        # contract on head_dim directly -> no in-kernel transpose of K
        energy = jax.lax.dot_general(
            q_b[:, sl], k_b[:, sl], (((1,), (1,)), ((), ())),
            preferred_element_type=jnp.float32) * inv_scale + add_mask
        e_max = jnp.max(energy, axis=-1, keepdims=True)
        p = jnp.exp(energy - e_max)
        denom = jnp.sum(p, axis=-1, keepdims=True)
        # exact reciprocal when weights are returned to the caller, approx
        # (EUP slot, nearly free) when only the context is needed.
        attn = p * pl.reciprocal(denom, approx=not collect_attn)
        if collect_attn:
            attn_parts.append(attn[None])
        ctx_parts.append(
            jnp.dot(attn, v_b[:, sl], preferred_element_type=jnp.float32))
    ctx = jnp.concatenate(ctx_parts, axis=-1)        # [Lq, D] (lane concat)
    return ctx, attn_parts


# ---------------- the fused decoder-layer kernel ----------------
def _decoder_layer_kernel(
        x_ref, enc_ref, tmask_ref, smask_ref,
        wqkv_s_ref, bqkv_s_ref, wo_s_ref, bo_s_ref, g_s_ref, be_s_ref,
        wq_c_ref, bq_c_ref, wkv_c_ref, bkv_c_ref, wo_c_ref, bo_c_ref,
        g_c_ref, be_c_ref,
        w1_ref, b1_ref, w2_ref, b2_ref, g_f_ref, be_f_ref,
        out_ref, attn_ref,
        *, B, Lt, Ls, n_heads, head_dim, inv_scale):
    D = n_heads * head_dim
    x = x_ref[...]                      # [B*Lt, D]  (residual / running state)
    enc = enc_ref[...]                  # [B*Ls, D]

    # -------- stage 1: masked self-attention + residual + LayerNorm --------
    qkv = jnp.dot(x, wqkv_s_ref[...],
                  preferred_element_type=jnp.float32) + bqkv_s_ref[...]
    add_tmask = jnp.where(tmask_ref[...] > 0.0, 0.0, NEG_INF)     # [B, Lt, Lt]
    ctx_rows = []
    for b in range(B):
        rows = slice(b * Lt, (b + 1) * Lt)
        ctx_b, _ = _sdpa(qkv[rows, 0:D], qkv[rows, D:2 * D], qkv[rows, 2 * D:3 * D],
                         add_tmask[b], n_heads, head_dim, inv_scale, False)
        ctx_rows.append(ctx_b)
    ctx_all = jnp.concatenate(ctx_rows, axis=0)                    # [B*Lt, D]
    sa = jnp.dot(ctx_all, wo_s_ref[...],
                 preferred_element_type=jnp.float32) + bo_s_ref[...]
    x = _layer_norm(x + sa, g_s_ref[...], be_s_ref[...])

    # -------- stage 2: masked cross-attention + residual + LayerNorm -------
    q_all = jnp.dot(x, wq_c_ref[...],
                    preferred_element_type=jnp.float32) + bq_c_ref[...]
    kv_all = jnp.dot(enc, wkv_c_ref[...],
                     preferred_element_type=jnp.float32) + bkv_c_ref[...]
    add_smask = jnp.where(smask_ref[...] > 0.0, 0.0, NEG_INF)      # [B, 1, Ls]
    ctx_rows = []
    for b in range(B):
        qrows = slice(b * Lt, (b + 1) * Lt)
        krows = slice(b * Ls, (b + 1) * Ls)
        ctx_b, attn_parts = _sdpa(q_all[qrows], kv_all[krows, 0:D],
                                  kv_all[krows, D:2 * D], add_smask[b],
                                  n_heads, head_dim, inv_scale, True)
        ctx_rows.append(ctx_b)
        # one coalesced [H, Lt, Ls] store per batch element
        attn_ref[b] = jnp.concatenate(attn_parts, axis=0)
    ctx_all = jnp.concatenate(ctx_rows, axis=0)
    ca = jnp.dot(ctx_all, wo_c_ref[...],
                 preferred_element_type=jnp.float32) + bo_c_ref[...]
    x = _layer_norm(x + ca, g_c_ref[...], be_c_ref[...])

    # -------- stage 3: position-wise feed-forward + residual + LayerNorm ---
    h = jnp.maximum(
        jnp.dot(x, w1_ref[...], preferred_element_type=jnp.float32) + b1_ref[...],
        0.0)
    y = jnp.dot(h, w2_ref[...], preferred_element_type=jnp.float32) + b2_ref[...]
    out_ref[...] = _layer_norm(x + y, g_f_ref[...], be_f_ref[...])


# ---------------- wrapper ----------------
def _resident(shape):
    # full-extent block, same block every (single) grid step -> no re-DMA
    zeros = (0,) * len(shape)
    return pl.BlockSpec(shape, lambda i, z=zeros: z)


def decoder_layer_forward(fused, trg, enc_src, trg_mask, src_mask):
    """Matches DecoderLayer.forward(trg, enc_src, trg_mask, src_mask)."""
    B, Lt, D = trg.shape
    Ls = enc_src.shape[1]
    trg2d = trg.reshape(B * Lt, D)
    enc2d = enc_src.reshape(B * Ls, D)
    # masks shared across heads; src mask also shared across query positions
    tmask = trg_mask[:, 0].astype(jnp.float32)          # [B, Lt, Lt]
    smask = src_mask[:, 0].astype(jnp.float32)          # [B, 1, Ls]

    kernel = functools.partial(
        _decoder_layer_kernel, B=B, Lt=Lt, Ls=Ls,
        n_heads=N_HEADS, head_dim=HEAD_DIM,
        inv_scale=1.0 / float(HEAD_DIM) ** 0.5)

    in_arrays = (
        trg2d, enc2d, tmask, smask,
        fused["wqkv_s"], fused["bqkv_s"], fused["wo_s"], fused["bo_s"],
        fused["g_s"], fused["be_s"],
        fused["wq_c"], fused["bq_c"], fused["wkv_c"], fused["bkv_c"],
        fused["wo_c"], fused["bo_c"], fused["g_c"], fused["be_c"],
        fused["w1"], fused["b1"], fused["w2"], fused["b2"],
        fused["g_f"], fused["be_f"],
    )

    out2d, attn = pl.pallas_call(
        kernel,
        grid=(1,),   # single step: whole batch processed in one invocation
        out_shape=(jax.ShapeDtypeStruct((B * Lt, D), jnp.float32),
                   jax.ShapeDtypeStruct((B, N_HEADS, Lt, Ls), jnp.float32)),
        in_specs=[_resident(a.shape) for a in in_arrays],
        out_specs=(pl.BlockSpec((B * Lt, D), lambda i: (0, 0)),
                   pl.BlockSpec((B, N_HEADS, Lt, Ls), lambda i: (0, 0, 0, 0))),
        compiler_params=pltpu.CompilerParams(
            dimension_semantics=("arbitrary",)),
    )(*in_arrays)

    return out2d.reshape(B, Lt, D), attn


# ---------------- pure-JAX reference (for correctness check) ----------------
def reference_forward(params, trg, enc_src, trg_mask, src_mask):
    def mha(p, q_in, k_in, v_in, mask):
        B, Lq, D = q_in.shape
        Lk = k_in.shape[1]
        Q = (q_in @ p["wq"] + p["bq"]).reshape(B, Lq, N_HEADS, HEAD_DIM).transpose(0, 2, 1, 3)
        K = (k_in @ p["wk"] + p["bk"]).reshape(B, Lk, N_HEADS, HEAD_DIM).transpose(0, 2, 1, 3)
        V = (v_in @ p["wv"] + p["bv"]).reshape(B, Lk, N_HEADS, HEAD_DIM).transpose(0, 2, 1, 3)
        energy = jnp.einsum("bhqd,bhkd->bhqk", Q, K) / jnp.float32(HEAD_DIM) ** 0.5
        energy = jnp.where(mask, energy, NEG_INF)
        attn = jax.nn.softmax(energy, axis=-1)
        ctx = jnp.einsum("bhqk,bhkd->bhqd", attn, V)
        ctx = ctx.transpose(0, 2, 1, 3).reshape(B, Lq, D)
        return ctx @ p["wo"] + p["bo"], attn

    def ln(g, b, x):
        m = x.mean(-1, keepdims=True)
        v = ((x - m) ** 2).mean(-1, keepdims=True)
        return (x - m) / jnp.sqrt(v + LN_EPS) * g + b

    _t, _ = mha(params["self_attn"], trg, trg, trg, trg_mask)
    t = ln(*params["ln_self"], trg + _t)
    _t, attn = mha(params["enc_attn"], t, enc_src, enc_src, src_mask)
    t = ln(*params["ln_enc"], t + _t)
    _t = (jnp.maximum(t @ params["ff"]["w1"] + params["ff"]["b1"], 0.0)
          @ params["ff"]["w2"] + params["ff"]["b2"])
    t = ln(*params["ln_ff"], t + _t)
    return t, attn


# ---------------- deterministic parameter init ----------------
def init_params(key):
    keys = iter(jax.random.split(key, 32))

    def lin(i, o):
        return (jax.random.normal(next(keys), (i, o), jnp.float32) * 0.05,
                jax.random.normal(next(keys), (o,), jnp.float32) * 0.01)

    def mha_p():
        wq, bq = lin(HID_DIM, HID_DIM)
        wk, bk = lin(HID_DIM, HID_DIM)
        wv, bv = lin(HID_DIM, HID_DIM)
        wo, bo = lin(HID_DIM, HID_DIM)
        return dict(wq=wq, bq=bq, wk=wk, bk=bk, wv=wv, bv=bv, wo=wo, bo=bo)

    def ln_p():
        return (jnp.ones((HID_DIM,), jnp.float32),
                jnp.zeros((HID_DIM,), jnp.float32))

    w1, b1 = lin(HID_DIM, PF_DIM)
    w2, b2 = lin(PF_DIM, HID_DIM)
    return dict(self_attn=mha_p(), ln_self=ln_p(),
                enc_attn=mha_p(), ln_enc=ln_p(),
                ff=dict(w1=w1, b1=b1, w2=w2, b2=b2), ln_ff=ln_p())


def make_fused_params(p):
    """Precompute all weight concatenations / bias reshapes ONCE (not per fwd)."""
    D = HID_DIM
    sa, ca, ff = p["self_attn"], p["enc_attn"], p["ff"]
    return dict(
        wqkv_s=jnp.concatenate([sa["wq"], sa["wk"], sa["wv"]], axis=1),
        bqkv_s=jnp.concatenate([sa["bq"], sa["bk"], sa["bv"]]).reshape(1, 3 * D),
        wo_s=sa["wo"], bo_s=sa["bo"].reshape(1, D),
        g_s=p["ln_self"][0].reshape(1, D), be_s=p["ln_self"][1].reshape(1, D),
        wq_c=ca["wq"], bq_c=ca["bq"].reshape(1, D),
        wkv_c=jnp.concatenate([ca["wk"], ca["wv"]], axis=1),
        bkv_c=jnp.concatenate([ca["bk"], ca["bv"]]).reshape(1, 2 * D),
        wo_c=ca["wo"], bo_c=ca["bo"].reshape(1, D),
        g_c=p["ln_enc"][0].reshape(1, D), be_c=p["ln_enc"][1].reshape(1, D),
        w1=ff["w1"], b1=ff["b1"].reshape(1, PF_DIM),
        w2=ff["w2"], b2=ff["b2"].reshape(1, D),
        g_f=p["ln_ff"][0].reshape(1, D), be_f=p["ln_ff"][1].reshape(1, D),
    )


if __name__ == "__main__":
    key = jax.random.PRNGKey(0)
    pkey, tkey, ekey = jax.random.split(key, 3)
    params = init_params(pkey)
    fused = make_fused_params(params)           # one-time, outside the forward

    B, TRG_LEN, SRC_LEN = 2, 8, 10
    trg = jax.random.normal(tkey, (B, TRG_LEN, HID_DIM), jnp.float32)
    enc_src = jax.random.normal(ekey, (B, SRC_LEN, HID_DIM), jnp.float32)

    # masks exactly as the surrounding Seq2Seq would build them:
    # trg_mask = pad & causal [B,1,Lt,Lt]; src_mask = pad [B,1,1,Ls]
    trg_pad = jnp.ones((B, TRG_LEN), bool).at[:, -1:].set(False)
    src_pad = jnp.ones((B, SRC_LEN), bool).at[:, -2:].set(False)
    causal = jnp.tril(jnp.ones((TRG_LEN, TRG_LEN), bool))
    trg_mask = trg_pad[:, None, None, :] & causal[None, None, :, :]
    src_mask = src_pad[:, None, None, :]

    out, attention = jax.jit(decoder_layer_forward)(fused, trg, enc_src,
                                                    trg_mask, src_mask)
    jax.block_until_ready((out, attention))

    ref_out, ref_attn = jax.jit(reference_forward)(params, trg, enc_src,
                                                   trg_mask, src_mask)
    jax.block_until_ready((ref_out, ref_attn))

    assert out.shape == (B, TRG_LEN, HID_DIM), out.shape
    assert attention.shape == (B, N_HEADS, TRG_LEN, SRC_LEN), attention.shape
    assert bool(jnp.all(jnp.isfinite(out))) and bool(jnp.all(jnp.isfinite(attention)))
    max_out_err = float(jnp.max(jnp.abs(out - ref_out)))
    max_attn_err = float(jnp.max(jnp.abs(attention - ref_attn)))
    assert max_out_err < 5e-2, max_out_err
    assert max_attn_err < 5e-3, max_attn_err
    print("KERNEL_OK")
</pallas_src>

<mosaic_0001>
module attributes {stable_mosaic.version = 11 : i64} {
  func.func @_decoder_layer_kernel(%arg0: i32, %arg1: memref<16x32xf32, #tpu.memory_space<vmem>>, %arg2: memref<20x32xf32, #tpu.memory_space<vmem>>, %arg3: memref<2x8x8xf32, #tpu.memory_space<vmem>>, %arg4: memref<2x1x10xf32, #tpu.memory_space<vmem>>, %arg5: memref<32x96xf32, #tpu.memory_space<vmem>>, %arg6: memref<1x96xf32, #tpu.memory_space<vmem>>, %arg7: memref<32x32xf32, #tpu.memory_space<vmem>>, %arg8: memref<1x32xf32, #tpu.memory_space<vmem>>, %arg9: memref<1x32xf32, #tpu.memory_space<vmem>>, %arg10: memref<1x32xf32, #tpu.memory_space<vmem>>, %arg11: memref<32x32xf32, #tpu.memory_space<vmem>>, %arg12: memref<1x32xf32, #tpu.memory_space<vmem>>, %arg13: memref<32x64xf32, #tpu.memory_space<vmem>>, %arg14: memref<1x64xf32, #tpu.memory_space<vmem>>, %arg15: memref<32x32xf32, #tpu.memory_space<vmem>>, %arg16: memref<1x32xf32, #tpu.memory_space<vmem>>, %arg17: memref<1x32xf32, #tpu.memory_space<vmem>>, %arg18: memref<1x32xf32, #tpu.memory_space<vmem>>, %arg19: memref<32x64xf32, #tpu.memory_space<vmem>>, %arg20: memref<1x64xf32, #tpu.memory_space<vmem>>, %arg21: memref<64x32xf32, #tpu.memory_space<vmem>>, %arg22: memref<1x32xf32, #tpu.memory_space<vmem>>, %arg23: memref<1x32xf32, #tpu.memory_space<vmem>>, %arg24: memref<1x32xf32, #tpu.memory_space<vmem>>, %arg25: memref<16x32xf32, #tpu.memory_space<vmem>>, %arg26: memref<2x4x8x10xf32, #tpu.memory_space<vmem>>) attributes {dimension_semantics = [#tpu.dimension_semantics<arbitrary>], iteration_bounds = array<i64: 1>, scalar_prefetch = 0 : i64, scratch_operands = 0 : i64, tpu.core_type = #tpu.core_type<tc>, window_params = [{pipeline_mode = #tpu.pipeline_mode<synchronous>, transform_indices = @transform_0, window_bounds = array<i64: 16, 32>}, {pipeline_mode = #tpu.pipeline_mode<synchronous>, transform_indices = @transform_1, window_bounds = array<i64: 20, 32>}, {pipeline_mode = #tpu.pipeline_mode<synchronous>, transform_indices = @transform_2, window_bounds = array<i64: 2, 8, 8>}, {pipeline_mode = #tpu.pipeline_mode<synchronous>, transform_indices = @transform_3, window_bounds = array<i64: 2, 1, 10>}, {pipeline_mode = #tpu.pipeline_mode<synchronous>, transform_indices = @transform_4, window_bounds = array<i64: 32, 96>}, {pipeline_mode = #tpu.pipeline_mode<synchronous>, transform_indices = @transform_5, window_bounds = array<i64: 1, 96>}, {pipeline_mode = #tpu.pipeline_mode<synchronous>, transform_indices = @transform_6, window_bounds = array<i64: 32, 32>}, {pipeline_mode = #tpu.pipeline_mode<synchronous>, transform_indices = @transform_7, window_bounds = array<i64: 1, 32>}, {pipeline_mode = #tpu.pipeline_mode<synchronous>, transform_indices = @transform_8, window_bounds = array<i64: 1, 32>}, {pipeline_mode = #tpu.pipeline_mode<synchronous>, transform_indices = @transform_9, window_bounds = array<i64: 1, 32>}, {pipeline_mode = #tpu.pipeline_mode<synchronous>, transform_indices = @transform_10, window_bounds = array<i64: 32, 32>}, {pipeline_mode = #tpu.pipeline_mode<synchronous>, transform_indices = @transform_11, window_bounds = array<i64: 1, 32>}, {pipeline_mode = #tpu.pipeline_mode<synchronous>, transform_indices = @transform_12, window_bounds = array<i64: 32, 64>}, {pipeline_mode = #tpu.pipeline_mode<synchronous>, transform_indices = @transform_13, window_bounds = array<i64: 1, 64>}, {pipeline_mode = #tpu.pipeline_mode<synchronous>, transform_indices = @transform_14, window_bounds = array<i64: 32, 32>}, {pipeline_mode = #tpu.pipeline_mode<synchronous>, transform_indices = @transform_15, window_bounds = array<i64: 1, 32>}, {pipeline_mode = #tpu.pipeline_mode<synchronous>, transform_indices = @transform_16, window_bounds = array<i64: 1, 32>}, {pipeline_mode = #tpu.pipeline_mode<synchronous>, transform_indices = @transform_17, window_bounds = array<i64: 1, 32>}, {pipeline_mode = #tpu.pipeline_mode<synchronous>, transform_indices = @transform_18, window_bounds = array<i64: 32, 64>}, {pipeline_mode = #tpu.pipeline_mode<synchronous>, transform_indices = @transform_19, window_bounds = array<i64: 1, 64>}, {pipeline_mode = #tpu.pipeline_mode<synchronous>, transform_indices = @transform_20, window_bounds = array<i64: 64, 32>}, {pipeline_mode = #tpu.pipeline_mode<synchronous>, transform_indices = @transform_21, window_bounds = array<i64: 1, 32>}, {pipeline_mode = #tpu.pipeline_mode<synchronous>, transform_indices = @transform_22, window_bounds = array<i64: 1, 32>}, {pipeline_mode = #tpu.pipeline_mode<synchronous>, transform_indices = @transform_23, window_bounds = array<i64: 1, 32>}, {pipeline_mode = #tpu.pipeline_mode<synchronous>, transform_indices = @transform_24, window_bounds = array<i64: 16, 32>}, {pipeline_mode = #tpu.pipeline_mode<synchronous>, transform_indices = @transform_25, window_bounds = array<i64: 2, 4, 8, 10>}]} {
    %c0 = arith.constant 0 : index
    %c0_0 = arith.constant 0 : index
    %0 = vector.load %arg1[%c0, %c0_0] : memref<16x32xf32, #tpu.memory_space<vmem>>, vector<16x32xf32>
    %c0_1 = arith.constant 0 : index
    %c0_2 = arith.constant 0 : index
    %1 = vector.load %arg2[%c0_1, %c0_2] : memref<20x32xf32, #tpu.memory_space<vmem>>, vector<20x32xf32>
    %c0_3 = arith.constant 0 : index
    %c0_4 = arith.constant 0 : index
    %2 = vector.load %arg5[%c0_3, %c0_4] : memref<32x96xf32, #tpu.memory_space<vmem>>, vector<32x96xf32>
    %cst = arith.constant dense<0.000000e+00> : vector<16x96xf32>
    %3 = tpu.matmul %0, %2, %cst {dimension_numbers = #tpu.dot_dimension_numbers<[1], [0], [0], [1], [0, 0, 1, 1], [], []>} : vector<16x32xf32>, vector<32x96xf32>, vector<16x96xf32> -> vector<16x96xf32>
    %c0_5 = arith.constant 0 : index
    %c0_6 = arith.constant 0 : index
    %4 = vector.load %arg6[%c0_5, %c0_6] : memref<1x96xf32, #tpu.memory_space<vmem>>, vector<1x96xf32>
    %5 = vector.broadcast %4 : vector<1x96xf32> to vector<16x96xf32>
    %6 = arith.addf %3, %5 : vector<16x96xf32>
    %c0_7 = arith.constant 0 : index
    %c0_8 = arith.constant 0 : index
    %c0_9 = arith.constant 0 : index
    %7 = vector.load %arg3[%c0_7, %c0_8, %c0_9] : memref<2x8x8xf32, #tpu.memory_space<vmem>>, vector<2x8x8xf32>
    %cst_10 = arith.constant 0.000000e+00 : f32
    %8 = vector.broadcast %cst_10 : f32 to vector<2x8x8xf32>
    %9 = arith.cmpf ogt, %7, %8 : vector<2x8x8xf32>
    %cst_11 = arith.constant 0.000000e+00 : f32
    %cst_12 = arith.constant -1.000000e+10 : f32
    %10 = vector.broadcast %cst_11 : f32 to vector<2x8x8xf32>
    %11 = vector.broadcast %cst_12 : f32 to vector<2x8x8xf32>
    %12 = arith.select %9, %10, %11 : vector<2x8x8xi1>, vector<2x8x8xf32>
    %13 = vector.extract_strided_slice %6 {offsets = [0, 0], sizes = [8, 32], strides = [1, 1]} : vector<16x96xf32> to vector<8x32xf32>
    %14 = vector.extract_strided_slice %6 {offsets = [0, 32], sizes = [8, 32], strides = [1, 1]} : vector<16x96xf32> to vector<8x32xf32>
    %15 = vector.extract_strided_slice %6 {offsets = [0, 64], sizes = [8, 32], strides = [1, 1]} : vector<16x96xf32> to vector<8x32xf32>
    %16 = vector.extract_strided_slice %12 {offsets = [0, 0, 0], sizes = [1, 8, 8], strides = [1, 1, 1]} : vector<2x8x8xf32> to vector<1x8x8xf32>
    %17 = vector.shape_cast %16 : vector<1x8x8xf32> to vector<8x8xf32>
    %18 = vector.extract_strided_slice %13 {offsets = [0, 0], sizes = [8, 8], strides = [1, 1]} : vector<8x32xf32> to vector<8x8xf32>
    %19 = vector.extract_strided_slice %14 {offsets = [0, 0], sizes = [8, 8], strides = [1, 1]} : vector<8x32xf32> to vector<8x8xf32>
    %cst_13 = arith.constant dense<0.000000e+00> : vector<8x8xf32>
    %20 = tpu.matmul %18, %19, %cst_13 {dimension_numbers = #tpu.dot_dimension_numbers<[1], [1], [0], [0], [0, 0, 1, 0], [], []>} : vector<8x8xf32>, vector<8x8xf32>, vector<8x8xf32> -> vector<8x8xf32>
    %cst_14 = arith.constant 0.353553385 : f32
    %21 = vector.broadcast %cst_14 : f32 to vector<8x8xf32>
    %22 = arith.mulf %20, %21 : vector<8x8xf32>
    %23 = arith.addf %22, %17 : vector<8x8xf32>
    %cst_15 = arith.constant dense<0xFF800000> : vector<8xf32>
    %24 = vector.multi_reduction <maximumf>, %23, %cst_15 [1] : vector<8x8xf32> to vector<8xf32>
    %25 = vector.shape_cast %24 : vector<8xf32> to vector<8x1xf32>
    %26 = vector.broadcast %25 : vector<8x1xf32> to vector<8x8xf32>
    %27 = arith.subf %23, %26 : vector<8x8xf32>
    %28 = math.exp %27 : vector<8x8xf32>
    %cst_16 = arith.constant dense<0.000000e+00> : vector<8xf32>
    %29 = vector.multi_reduction <add>, %28, %cst_16 [1] : vector<8x8xf32> to vector<8xf32>
    %30 = vector.shape_cast %29 : vector<8xf32> to vector<8x1xf32>
    %31 = tpu.reciprocal %30 {approx = true} : vector<8x1xf32> -> vector<8x1xf32>
    %32 = vector.broadcast %31 : vector<8x1xf32> to vector<8x8xf32>
    %33 = arith.mulf %28, %32 : vector<8x8xf32>
    %34 = vector.extract_strided_slice %15 {offsets = [0, 0], sizes = [8, 8], strides = [1, 1]} : vector<8x32xf32> to vector<8x8xf32>
    %cst_17 = arith.constant dense<0.000000e+00> : vector<8x8xf32>
    %35 = tpu.matmul %33, %34, %cst_17 {dimension_numbers = #tpu.dot_dimension_numbers<[1], [0], [0], [1], [0, 0, 1, 1], [], []>} : vector<8x8xf32>, vector<8x8xf32>, vector<8x8xf32> -> vector<8x8xf32>
    %36 = vector.extract_strided_slice %13 {offsets = [0, 8], sizes = [8, 8], strides = [1, 1]} : vector<8x32xf32> to vector<8x8xf32>
    %37 = vector.extract_strided_slice %14 {offsets = [0, 8], sizes = [8, 8], strides = [1, 1]} : vector<8x32xf32> to vector<8x8xf32>
    %cst_18 = arith.constant dense<0.000000e+00> : vector<8x8xf32>
    %38 = tpu.matmul %36, %37, %cst_18 {dimension_numbers = #tpu.dot_dimension_numbers<[1], [1], [0], [0], [0, 0, 1, 0], [], []>} : vector<8x8xf32>, vector<8x8xf32>, vector<8x8xf32> -> vector<8x8xf32>
    %cst_19 = arith.constant 0.353553385 : f32
    %39 = vector.broadcast %cst_19 : f32 to vector<8x8xf32>
    %40 = arith.mulf %38, %39 : vector<8x8xf32>
    %41 = arith.addf %40, %17 : vector<8x8xf32>
    %cst_20 = arith.constant dense<0xFF800000> : vector<8xf32>
    %42 = vector.multi_reduction <maximumf>, %41, %cst_20 [1] : vector<8x8xf32> to vector<8xf32>
    %43 = vector.shape_cast %42 : vector<8xf32> to vector<8x1xf32>
    %44 = vector.broadcast %43 : vector<8x1xf32> to vector<8x8xf32>
    %45 = arith.subf %41, %44 : vector<8x8xf32>
    %46 = math.exp %45 : vector<8x8xf32>
    %cst_21 = arith.constant dense<0.000000e+00> : vector<8xf32>
    %47 = vector.multi_reduction <add>, %46, %cst_21 [1] : vector<8x8xf32> to vector<8xf32>
    %48 = vector.shape_cast %47 : vector<8xf32> to vector<8x1xf32>
    %49 = tpu.reciprocal %48 {approx = true} : vector<8x1xf32> -> vector<8x1xf32>
    %50 = vector.broadcast %49 : vector<8x1xf32> to vector<8x8xf32>
    %51 = arith.mulf %46, %50 : vector<8x8xf32>
    %52 = vector.extract_strided_slice %15 {offsets = [0, 8], sizes = [8, 8], strides = [1, 1]} : vector<8x32xf32> to vector<8x8xf32>
    %cst_22 = arith.constant dense<0.000000e+00> : vector<8x8xf32>
    %53 = tpu.matmul %51, %52, %cst_22 {dimension_numbers = #tpu.dot_dimension_numbers<[1], [0], [0], [1], [0, 0, 1, 1], [], []>} : vector<8x8xf32>, vector<8x8xf32>, vector<8x8xf32> -> vector<8x8xf32>
    %54 = vector.extract_strided_slice %13 {offsets = [0, 16], sizes = [8, 8], strides = [1, 1]} : vector<8x32xf32> to vector<8x8xf32>
    %55 = vector.extract_strided_slice %14 {offsets = [0, 16], sizes = [8, 8], strides = [1, 1]} : vector<8x32xf32> to vector<8x8xf32>
    %cst_23 = arith.constant dense<0.000000e+00> : vector<8x8xf32>
    %56 = tpu.matmul %54, %55, %cst_23 {dimension_numbers = #tpu.dot_dimension_numbers<[1], [1], [0], [0], [0, 0, 1, 0], [], []>} : vector<8x8xf32>, vector<8x8xf32>, vector<8x8xf32> -> vector<8x8xf32>
    %cst_24 = arith.constant 0.353553385 : f32
    %57 = vector.broadcast %cst_24 : f32 to vector<8x8xf32>
    %58 = arith.mulf %56, %57 : vector<8x8xf32>
    %59 = arith.addf %58, %17 : vector<8x8xf32>
    %cst_25 = arith.constant dense<0xFF800000> : vector<8xf32>
    %60 = vector.multi_reduction <maximumf>, %59, %cst_25 [1] : vector<8x8xf32> to vector<8xf32>
    %61 = vector.shape_cast %60 : vector<8xf32> to vector<8x1xf32>
    %62 = vector.broadcast %61 : vector<8x1xf32> to vector<8x8xf32>
    %63 = arith.subf %59, %62 : vector<8x8xf32>
    %64 = math.exp %63 : vector<8x8xf32>
    %cst_26 = arith.constant dense<0.000000e+00> : vector<8xf32>
    %65 = vector.multi_reduction <add>, %64, %cst_26 [1] : vector<8x8xf32> to vector<8xf32>
    %66 = vector.shape_cast %65 : vector<8xf32> to vector<8x1xf32>
    %67 = tpu.reciprocal %66 {approx = true} : vector<8x1xf32> -> vector<8x1xf32>
    %68 = vector.broadcast %67 : vector<8x1xf32> to vector<8x8xf32>
    %69 = arith.mulf %64, %68 : vector<8x8xf32>
    %70 = vector.extract_strided_slice %15 {offsets = [0, 16], sizes = [8, 8], strides = [1, 1]} : vector<8x32xf32> to vector<8x8xf32>
    %cst_27 = arith.constant dense<0.000000e+00> : vector<8x8xf32>
    %71 = tpu.matmul %69, %70, %cst_27 {dimension_numbers = #tpu.dot_dimension_numbers<[1], [0], [0], [1], [0, 0, 1, 1], [], []>} : vector<8x8xf32>, vector<8x8xf32>, vector<8x8xf32> -> vector<8x8xf32>
    %72 = vector.extract_strided_slice %13 {offsets = [0, 24], sizes = [8, 8], strides = [1, 1]} : vector<8x32xf32> to vector<8x8xf32>
    %73 = vector.extract_strided_slice %14 {offsets = [0, 24], sizes = [8, 8], strides = [1, 1]} : vector<8x32xf32> to vector<8x8xf32>
    %cst_28 = arith.constant dense<0.000000e+00> : vector<8x8xf32>
    %74 = tpu.matmul %72, %73, %cst_28 {dimension_numbers = #tpu.dot_dimension_numbers<[1], [1], [0], [0], [0, 0, 1, 0], [], []>} : vector<8x8xf32>, vector<8x8xf32>, vector<8x8xf32> -> vector<8x8xf32>
    %cst_29 = arith.constant 0.353553385 : f32
    %75 = vector.broadcast %cst_29 : f32 to vector<8x8xf32>
    %76 = arith.mulf %74, %75 : vector<8x8xf32>
    %77 = arith.addf %76, %17 : vector<8x8xf32>
    %cst_30 = arith.constant dense<0xFF800000> : vector<8xf32>
    %78 = vector.multi_reduction <maximumf>, %77, %cst_30 [1] : vector<8x8xf32> to vector<8xf32>
    %79 = vector.shape_cast %78 : vector<8xf32> to vector<8x1xf32>
    %80 = vector.broadcast %79 : vector<8x1xf32> to vector<8x8xf32>
    %81 = arith.subf %77, %80 : vector<8x8xf32>
    %82 = math.exp %81 : vector<8x8xf32>
    %cst_31 = arith.constant dense<0.000000e+00> : vector<8xf32>
    %83 = vector.multi_reduction <add>, %82, %cst_31 [1] : vector<8x8xf32> to vector<8xf32>
    %84 = vector.shape_cast %83 : vector<8xf32> to vector<8x1xf32>
    %85 = tpu.reciprocal %84 {approx = true} : vector<8x1xf32> -> vector<8x1xf32>
    %86 = vector.broadcast %85 : vector<8x1xf32> to vector<8x8xf32>
    %87 = arith.mulf %82, %86 : vector<8x8xf32>
    %88 = vector.extract_strided_slice %15 {offsets = [0, 24], sizes = [8, 8], strides = [1, 1]} : vector<8x32xf32> to vector<8x8xf32>
    %cst_32 = arith.constant dense<0.000000e+00> : vector<8x8xf32>
    %89 = tpu.matmul %87, %88, %cst_32 {dimension_numbers = #tpu.dot_dimension_numbers<[1], [0], [0], [1], [0, 0, 1, 1], [], []>} : vector<8x8xf32>, vector<8x8xf32>, vector<8x8xf32> -> vector<8x8xf32>
    %90 = tpu.concatenate %35, %53, %71, %89 in 1 : vector<8x8xf32>, vector<8x8xf32>, vector<8x8xf32>, vector<8x8xf32> -> vector<8x32xf32>
    %91 = vector.extract_strided_slice %6 {offsets = [8, 0], sizes = [8, 32], strides = [1, 1]} : vector<16x96xf32> to vector<8x32xf32>
    %92 = vector.extract_strided_slice %6 {offsets = [8, 32], sizes = [8, 32], strides = [1, 1]} : vector<16x96xf32> to vector<8x32xf32>
    %93 = vector.extract_strided_slice %6 {offsets = [8, 64], sizes = [8, 32], strides = [1, 1]} : vector<16x96xf32> to vector<8x32xf32>
    %94 = vector.extract_strided_slice %12 {offsets = [1, 0, 0], sizes = [1, 8, 8], strides = [1, 1, 1]} : vector<2x8x8xf32> to vector<1x8x8xf32>
    %95 = vector.shape_cast %94 : vector<1x8x8xf32> to vector<8x8xf32>
    %96 = vector.extract_strided_slice %91 {offsets = [0, 0], sizes = [8, 8], strides = [1, 1]} : vector<8x32xf32> to vector<8x8xf32>
    %97 = vector.extract_strided_slice %92 {offsets = [0, 0], sizes = [8, 8], strides = [1, 1]} : vector<8x32xf32> to vector<8x8xf32>
    %cst_33 = arith.constant dense<0.000000e+00> : vector<8x8xf32>
    %98 = tpu.matmul %96, %97, %cst_33 {dimension_numbers = #tpu.dot_dimension_numbers<[1], [1], [0], [0], [0, 0, 1, 0], [], []>} : vector<8x8xf32>, vector<8x8xf32>, vector<8x8xf32> -> vector<8x8xf32>
    %cst_34 = arith.constant 0.353553385 : f32
    %99 = vector.broadcast %cst_34 : f32 to vector<8x8xf32>
    %100 = arith.mulf %98, %99 : vector<8x8xf32>
    %101 = arith.addf %100, %95 : vector<8x8xf32>
    %cst_35 = arith.constant dense<0xFF800000> : vector<8xf32>
    %102 = vector.multi_reduction <maximumf>, %101, %cst_35 [1] : vector<8x8xf32> to vector<8xf32>
    %103 = vector.shape_cast %102 : vector<8xf32> to vector<8x1xf32>
    %104 = vector.broadcast %103 : vector<8x1xf32> to vector<8x8xf32>
    %105 = arith.subf %101, %104 : vector<8x8xf32>
    %106 = math.exp %105 : vector<8x8xf32>
    %cst_36 = arith.constant dense<0.000000e+00> : vector<8xf32>
    %107 = vector.multi_reduction <add>, %106, %cst_36 [1] : vector<8x8xf32> to vector<8xf32>
    %108 = vector.shape_cast %107 : vector<8xf32> to vector<8x1xf32>
    %109 = tpu.reciprocal %108 {approx = true} : vector<8x1xf32> -> vector<8x1xf32>
    %110 = vector.broadcast %109 : vector<8x1xf32> to vector<8x8xf32>
    %111 = arith.mulf %106, %110 : vector<8x8xf32>
    %112 = vector.extract_strided_slice %93 {offsets = [0, 0], sizes = [8, 8], strides = [1, 1]} : vector<8x32xf32> to vector<8x8xf32>
    %cst_37 = arith.constant dense<0.000000e+00> : vector<8x8xf32>
    %113 = tpu.matmul %111, %112, %cst_37 {dimension_numbers = #tpu.dot_dimension_numbers<[1], [0], [0], [1], [0, 0, 1, 1], [], []>} : vector<8x8xf32>, vector<8x8xf32>, vector<8x8xf32> -> vector<8x8xf32>
    %114 = vector.extract_strided_slice %91 {offsets = [0, 8], sizes = [8, 8], strides = [1, 1]} : vector<8x32xf32> to vector<8x8xf32>
    %115 = vector.extract_strided_slice %92 {offsets = [0, 8], sizes = [8, 8], strides = [1, 1]} : vector<8x32xf32> to vector<8x8xf32>
    %cst_38 = arith.constant dense<0.000000e+00> : vector<8x8xf32>
    %116 = tpu.matmul %114, %115, %cst_38 {dimension_numbers = #tpu.dot_dimension_numbers<[1], [1], [0], [0], [0, 0, 1, 0], [], []>} : vector<8x8xf32>, vector<8x8xf32>, vector<8x8xf32> -> vector<8x8xf32>
    %cst_39 = arith.constant 0.353553385 : f32
    %117 = vector.broadcast %cst_39 : f32 to vector<8x8xf32>
    %118 = arith.mulf %116, %117 : vector<8x8xf32>
    %119 = arith.addf %118, %95 : vector<8x8xf32>
    %cst_40 = arith.constant dense<0xFF800000> : vector<8xf32>
    %120 = vector.multi_reduction <maximumf>, %119, %cst_40 [1] : vector<8x8xf32> to vector<8xf32>
    %121 = vector.shape_cast %120 : vector<8xf32> to vector<8x1xf32>
    %122 = vector.broadcast %121 : vector<8x1xf32> to vector<8x8xf32>
    %123 = arith.subf %119, %122 : vector<8x8xf32>
    %124 = math.exp %123 : vector<8x8xf32>
    %cst_41 = arith.constant dense<0.000000e+00> : vector<8xf32>
    %125 = vector.multi_reduction <add>, %124, %cst_41 [1] : vector<8x8xf32> to vector<8xf32>
    %126 = vector.shape_cast %125 : vector<8xf32> to vector<8x1xf32>
    %127 = tpu.reciprocal %126 {approx = true} : vector<8x1xf32> -> vector<8x1xf32>
    %128 = vector.broadcast %127 : vector<8x1xf32> to vector<8x8xf32>
    %129 = arith.mulf %124, %128 : vector<8x8xf32>
    %130 = vector.extract_strided_slice %93 {offsets = [0, 8], sizes = [8, 8], strides = [1, 1]} : vector<8x32xf32> to vector<8x8xf32>
    %cst_42 = arith.constant dense<0.000000e+00> : vector<8x8xf32>
    %131 = tpu.matmul %129, %130, %cst_42 {dimension_numbers = #tpu.dot_dimension_numbers<[1], [0], [0], [1], [0, 0, 1, 1], [], []>} : vector<8x8xf32>, vector<8x8xf32>, vector<8x8xf32> -> vector<8x8xf32>
    %132 = vector.extract_strided_slice %91 {offsets = [0, 16], sizes = [8, 8], strides = [1, 1]} : vector<8x32xf32> to vector<8x8xf32>
    %133 = vector.extract_strided_slice %92 {offsets = [0, 16], sizes = [8, 8], strides = [1, 1]} : vector<8x32xf32> to vector<8x8xf32>
    %cst_43 = arith.constant dense<0.000000e+00> : vector<8x8xf32>
    %134 = tpu.matmul %132, %133, %cst_43 {dimension_numbers = #tpu.dot_dimension_numbers<[1], [1], [0], [0], [0, 0, 1, 0], [], []>} : vector<8x8xf32>, vector<8x8xf32>, vector<8x8xf32> -> vector<8x8xf32>
    %cst_44 = arith.constant 0.353553385 : f32
    %135 = vector.broadcast %cst_44 : f32 to vector<8x8xf32>
    %136 = arith.mulf %134, %135 : vector<8x8xf32>
    %137 = arith.addf %136, %95 : vector<8x8xf32>
    %cst_45 = arith.constant dense<0xFF800000> : vector<8xf32>
    %138 = vector.multi_reduction <maximumf>, %137, %cst_45 [1] : vector<8x8xf32> to vector<8xf32>
    %139 = vector.shape_cast %138 : vector<8xf32> to vector<8x1xf32>
    %140 = vector.broadcast %139 : vector<8x1xf32> to vector<8x8xf32>
    %141 = arith.subf %137, %140 : vector<8x8xf32>
    %142 = math.exp %141 : vector<8x8xf32>
    %cst_46 = arith.constant dense<0.000000e+00> : vector<8xf32>
    %143 = vector.multi_reduction <add>, %142, %cst_46 [1] : vector<8x8xf32> to vector<8xf32>
    %144 = vector.shape_cast %143 : vector<8xf32> to vector<8x1xf32>
    %145 = tpu.reciprocal %144 {approx = true} : vector<8x1xf32> -> vector<8x1xf32>
    %146 = vector.broadcast %145 : vector<8x1xf32> to vector<8x8xf32>
    %147 = arith.mulf %142, %146 : vector<8x8xf32>
    %148 = vector.extract_strided_slice %93 {offsets = [0, 16], sizes = [8, 8], strides = [1, 1]} : vector<8x32xf32> to vector<8x8xf32>
    %cst_47 = arith.constant dense<0.000000e+00> : vector<8x8xf32>
    %149 = tpu.matmul %147, %148, %cst_47 {dimension_numbers = #tpu.dot_dimension_numbers<[1], [0], [0], [1], [0, 0, 1, 1], [], []>} : vector<8x8xf32>, vector<8x8xf32>, vector<8x8xf32> -> vector<8x8xf32>
    %150 = vector.extract_strided_slice %91 {offsets = [0, 24], sizes = [8, 8], strides = [1, 1]} : vector<8x32xf32> to vector<8x8xf32>
    %151 = vector.extract_strided_slice %92 {offsets = [0, 24], sizes = [8, 8], strides = [1, 1]} : vector<8x32xf32> to vector<8x8xf32>
    %cst_48 = arith.constant dense<0.000000e+00> : vector<8x8xf32>
    %152 = tpu.matmul %150, %151, %cst_48 {dimension_numbers = #tpu.dot_dimension_numbers<[1], [1], [0], [0], [0, 0, 1, 0], [], []>} : vector<8x8xf32>, vector<8x8xf32>, vector<8x8xf32> -> vector<8x8xf32>
    %cst_49 = arith.constant 0.353553385 : f32
    %153 = vector.broadcast %cst_49 : f32 to vector<8x8xf32>
    %154 = arith.mulf %152, %153 : vector<8x8xf32>
    %155 = arith.addf %154, %95 : vector<8x8xf32>
    %cst_50 = arith.constant dense<0xFF800000> : vector<8xf32>
    %156 = vector.multi_reduction <maximumf>, %155, %cst_50 [1] : vector<8x8xf32> to vector<8xf32>
    %157 = vector.shape_cast %156 : vector<8xf32> to vector<8x1xf32>
    %158 = vector.broadcast %157 : vector<8x1xf32> to vector<8x8xf32>
    %159 = arith.subf %155, %158 : vector<8x8xf32>
    %160 = math.exp %159 : vector<8x8xf32>
    %cst_51 = arith.constant dense<0.000000e+00> : vector<8xf32>
    %161 = vector.multi_reduction <add>, %160, %cst_51 [1] : vector<8x8xf32> to vector<8xf32>
    %162 = vector.shape_cast %161 : vector<8xf32> to vector<8x1xf32>
    %163 = tpu.reciprocal %162 {approx = true} : vector<8x1xf32> -> vector<8x1xf32>
    %164 = vector.broadcast %163 : vector<8x1xf32> to vector<8x8xf32>
    %165 = arith.mulf %160, %164 : vector<8x8xf32>
    %166 = vector.extract_strided_slice %93 {offsets = [0, 24], sizes = [8, 8], strides = [1, 1]} : vector<8x32xf32> to vector<8x8xf32>
    %cst_52 = arith.constant dense<0.000000e+00> : vector<8x8xf32>
    %167 = tpu.matmul %165, %166, %cst_52 {dimension_numbers = #tpu.dot_dimension_numbers<[1], [0], [0], [1], [0, 0, 1, 1], [], []>} : vector<8x8xf32>, vector<8x8xf32>, vector<8x8xf32> -> vector<8x8xf32>
    %168 = tpu.concatenate %113, %131, %149, %167 in 1 : vector<8x8xf32>, vector<8x8xf32>, vector<8x8xf32>, vector<8x8xf32> -> vector<8x32xf32>
    %169 = tpu.concatenate %90, %168 in 0 : vector<8x32xf32>, vector<8x32xf32> -> vector<16x32xf32>
    %c0_53 = arith.constant 0 : index
    %c0_54 = arith.constant 0 : index
    %170 = vector.load %arg7[%c0_53, %c0_54] : memref<32x32xf32, #tpu.memory_space<vmem>>, vector<32x32xf32>
    %cst_55 = arith.constant dense<0.000000e+00> : vector<16x32xf32>
    %171 = tpu.matmul %169, %170, %cst_55 {dimension_numbers = #tpu.dot_dimension_numbers<[1], [0], [0], [1], [0, 0, 1, 1], [], []>} : vector<16x32xf32>, vector<32x32xf32>, vector<16x32xf32> -> vector<16x32xf32>
    %c0_56 = arith.constant 0 : index
    %c0_57 = arith.constant 0 : index
    %172 = vector.load %arg8[%c0_56, %c0_57] : memref<1x32xf32, #tpu.memory_space<vmem>>, vector<1x32xf32>
    %173 = vector.broadcast %172 : vector<1x32xf32> to vector<16x32xf32>
    %174 = arith.addf %171, %173 : vector<16x32xf32>
    %175 = arith.addf %0, %174 : vector<16x32xf32>
    %c0_58 = arith.constant 0 : index
    %c0_59 = arith.constant 0 : index
    %176 = vector.load %arg9[%c0_58, %c0_59] : memref<1x32xf32, #tpu.memory_space<vmem>>, vector<1x32xf32>
    %c0_60 = arith.constant 0 : index
    %c0_61 = arith.constant 0 : index
    %177 = vector.load %arg10[%c0_60, %c0_61] : memref<1x32xf32, #tpu.memory_space<vmem>>, vector<1x32xf32>
    %cst_62 = arith.constant dense<0.000000e+00> : vector<16xf32>
    %178 = vector.multi_reduction <add>, %175, %cst_62 [1] : vector<16x32xf32> to vector<16xf32>
    %179 = vector.shape_cast %178 : vector<16xf32> to vector<16x1xf32>
    %cst_63 = arith.constant 3.200000e+01 : f32
    %180 = vector.broadcast %cst_63 : f32 to vector<16x1xf32>
    %181 = arith.divf %179, %180 : vector<16x1xf32>
    %182 = vector.broadcast %181 : vector<16x1xf32> to vector<16x32xf32>
    %183 = arith.subf %175, %182 : vector<16x32xf32>
    %184 = arith.mulf %183, %183 : vector<16x32xf32>
    %cst_64 = arith.constant dense<0.000000e+00> : vector<16xf32>
    %185 = vector.multi_reduction <add>, %184, %cst_64 [1] : vector<16x32xf32> to vector<16xf32>
    %186 = vector.shape_cast %185 : vector<16xf32> to vector<16x1xf32>
    %cst_65 = arith.constant 3.200000e+01 : f32
    %187 = vector.broadcast %cst_65 : f32 to vector<16x1xf32>
    %188 = arith.divf %186, %187 : vector<16x1xf32>
    %189 = vector.broadcast %181 : vector<16x1xf32> to vector<16x32xf32>
    %190 = arith.subf %175, %189 : vector<16x32xf32>
    %cst_66 = arith.constant 9.99999974E-6 : f32
    %191 = vector.broadcast %cst_66 : f32 to vector<16x1xf32>
    %192 = arith.addf %188, %191 : vector<16x1xf32>
    %193 = math.rsqrt %192 : vector<16x1xf32>
    %194 = vector.broadcast %193 : vector<16x1xf32> to vector<16x32xf32>
    %195 = arith.mulf %190, %194 : vector<16x32xf32>
    %196 = vector.broadcast %176 : vector<1x32xf32> to vector<16x32xf32>
    %197 = arith.mulf %195, %196 : vector<16x32xf32>
    %198 = vector.broadcast %177 : vector<1x32xf32> to vector<16x32xf32>
    %199 = arith.addf %197, %198 : vector<16x32xf32>
    %c0_67 = arith.constant 0 : index
    %c0_68 = arith.constant 0 : index
    %200 = vector.load %arg11[%c0_67, %c0_68] : memref<32x32xf32, #tpu.memory_space<vmem>>, vector<32x32xf32>
    %cst_69 = arith.constant dense<0.000000e+00> : vector<16x32xf32>
    %201 = tpu.matmul %199, %200, %cst_69 {dimension_numbers = #tpu.dot_dimension_numbers<[1], [0], [0], [1], [0, 0, 1, 1], [], []>} : vector<16x32xf32>, vector<32x32xf32>, vector<16x32xf32> -> vector<16x32xf32>
    %c0_70 = arith.constant 0 : index
    %c0_71 = arith.constant 0 : index
    %202 = vector.load %arg12[%c0_70, %c0_71] : memref<1x32xf32, #tpu.memory_space<vmem>>, vector<1x32xf32>
    %203 = vector.broadcast %202 : vector<1x32xf32> to vector<16x32xf32>
    %204 = arith.addf %201, %203 : vector<16x32xf32>
    %c0_72 = arith.constant 0 : index
    %c0_73 = arith.constant 0 : index
    %205 = vector.load %arg13[%c0_72, %c0_73] : memref<32x64xf32, #tpu.memory_space<vmem>>, vector<32x64xf32>
    %cst_74 = arith.constant dense<0.000000e+00> : vector<20x64xf32>
    %206 = tpu.matmul %1, %205, %cst_74 {dimension_numbers = #tpu.dot_dimension_numbers<[1], [0], [0], [1], [0, 0, 1, 1], [], []>} : vector<20x32xf32>, vector<32x64xf32>, vector<20x64xf32> -> vector<20x64xf32>
    %c0_75 = arith.constant 0 : index
    %c0_76 = arith.constant 0 : index
    %207 = vector.load %arg14[%c0_75, %c0_76] : memref<1x64xf32, #tpu.memory_space<vmem>>, vector<1x64xf32>
    %208 = vector.broadcast %207 : vector<1x64xf32> to vector<20x64xf32>
    %209 = arith.addf %206, %208 : vector<20x64xf32>
    %c0_77 = arith.constant 0 : index
    %c0_78 = arith.constant 0 : index
    %c0_79 = arith.constant 0 : index
    %210 = vector.load %arg4[%c0_77, %c0_78, %c0_79] : memref<2x1x10xf32, #tpu.memory_space<vmem>>, vector<2x1x10xf32>
    %cst_80 = arith.constant 0.000000e+00 : f32
    %211 = vector.broadcast %cst_80 : f32 to vector<2x1x10xf32>
    %212 = arith.cmpf ogt, %210, %211 : vector<2x1x10xf32>
    %cst_81 = arith.constant 0.000000e+00 : f32
    %cst_82 = arith.constant -1.000000e+10 : f32
    %213 = vector.broadcast %cst_81 : f32 to vector<2x1x10xf32>
    %214 = vector.broadcast %cst_82 : f32 to vector<2x1x10xf32>
    %215 = arith.select %212, %213, %214 : vector<2x1x10xi1>, vector<2x1x10xf32>
    %216 = vector.extract_strided_slice %204 {offsets = [0, 0], sizes = [8, 32], strides = [1, 1]} : vector<16x32xf32> to vector<8x32xf32>
    %217 = vector.extract_strided_slice %209 {offsets = [0, 0], sizes = [10, 32], strides = [1, 1]} : vector<20x64xf32> to vector<10x32xf32>
    %218 = vector.extract_strided_slice %209 {offsets = [0, 32], sizes = [10, 32], strides = [1, 1]} : vector<20x64xf32> to vector<10x32xf32>
    %219 = vector.extract_strided_slice %215 {offsets = [0, 0, 0], sizes = [1, 1, 10], strides = [1, 1, 1]} : vector<2x1x10xf32> to vector<1x1x10xf32>
    %220 = vector.shape_cast %219 : vector<1x1x10xf32> to vector<1x10xf32>
    %221 = vector.extract_strided_slice %216 {offsets = [0, 0], sizes = [8, 8], strides = [1, 1]} : vector<8x32xf32> to vector<8x8xf32>
    %222 = vector.extract_strided_slice %217 {offsets = [0, 0], sizes = [10, 8], strides = [1, 1]} : vector<10x32xf32> to vector<10x8xf32>
    %cst_83 = arith.constant dense<0.000000e+00> : vector<8x10xf32>
    %223 = tpu.matmul %221, %222, %cst_83 {dimension_numbers = #tpu.dot_dimension_numbers<[1], [1], [0], [0], [0, 0, 1, 0], [], []>} : vector<8x8xf32>, vector<10x8xf32>, vector<8x10xf32> -> vector<8x10xf32>
    %cst_84 = arith.constant 0.353553385 : f32
    %224 = vector.broadcast %cst_84 : f32 to vector<8x10xf32>
    %225 = arith.mulf %223, %224 : vector<8x10xf32>
    %226 = vector.broadcast %220 : vector<1x10xf32> to vector<8x10xf32>
    %227 = arith.addf %225, %226 : vector<8x10xf32>
    %cst_85 = arith.constant dense<0xFF800000> : vector<8xf32>
    %228 = vector.multi_reduction <maximumf>, %227, %cst_85 [1] : vector<8x10xf32> to vector<8xf32>
    %229 = vector.shape_cast %228 : vector<8xf32> to vector<8x1xf32>
    %230 = vector.broadcast %229 : vector<8x1xf32> to vector<8x10xf32>
    %231 = arith.subf %227, %230 : vector<8x10xf32>
    %232 = math.exp %231 : vector<8x10xf32>
    %cst_86 = arith.constant dense<0.000000e+00> : vector<8xf32>
    %233 = vector.multi_reduction <add>, %232, %cst_86 [1] : vector<8x10xf32> to vector<8xf32>
    %234 = vector.shape_cast %233 : vector<8xf32> to vector<8x1xf32>
    %235 = tpu.reciprocal %234 : vector<8x1xf32> -> vector<8x1xf32>
    %236 = vector.broadcast %235 : vector<8x1xf32> to vector<8x10xf32>
    %237 = arith.mulf %232, %236 : vector<8x10xf32>
    %238 = vector.shape_cast %237 : vector<8x10xf32> to vector<1x8x10xf32>
    %239 = vector.extract_strided_slice %218 {offsets = [0, 0], sizes = [10, 8], strides = [1, 1]} : vector<10x32xf32> to vector<10x8xf32>
    %cst_87 = arith.constant dense<0.000000e+00> : vector<8x8xf32>
    %240 = tpu.matmul %237, %239, %cst_87 {dimension_numbers = #tpu.dot_dimension_numbers<[1], [0], [0], [1], [0, 0, 1, 1], [], []>} : vector<8x10xf32>, vector<10x8xf32>, vector<8x8xf32> -> vector<8x8xf32>
    %241 = vector.extract_strided_slice %216 {offsets = [0, 8], sizes = [8, 8], strides = [1, 1]} : vector<8x32xf32> to vector<8x8xf32>
    %242 = vector.extract_strided_slice %217 {offsets = [0, 8], sizes = [10, 8], strides = [1, 1]} : vector<10x32xf32> to vector<10x8xf32>
    %cst_88 = arith.constant dense<0.000000e+00> : vector<8x10xf32>
    %243 = tpu.matmul %241, %242, %cst_88 {dimension_numbers = #tpu.dot_dimension_numbers<[1], [1], [0], [0], [0, 0, 1, 0], [], []>} : vector<8x8xf32>, vector<10x8xf32>, vector<8x10xf32> -> vector<8x10xf32>
    %cst_89 = arith.constant 0.353553385 : f32
    %244 = vector.broadcast %cst_89 : f32 to vector<8x10xf32>
    %245 = arith.mulf %243, %244 : vector<8x10xf32>
    %246 = vector.broadcast %220 : vector<1x10xf32> to vector<8x10xf32>
    %247 = arith.addf %245, %246 : vector<8x10xf32>
    %cst_90 = arith.constant dense<0xFF800000> : vector<8xf32>
    %248 = vector.multi_reduction <maximumf>, %247, %cst_90 [1] : vector<8x10xf32> to vector<8xf32>
    %249 = vector.shape_cast %248 : vector<8xf32> to vector<8x1xf32>
    %250 = vector.broadcast %249 : vector<8x1xf32> to vector<8x10xf32>
    %251 = arith.subf %247, %250 : vector<8x10xf32>
    %252 = math.exp %251 : vector<8x10xf32>
    %cst_91 = arith.constant dense<0.000000e+00> : vector<8xf32>
    %253 = vector.multi_reduction <add>, %252, %cst_91 [1] : vector<8x10xf32> to vector<8xf32>
    %254 = vector.shape_cast %253 : vector<8xf32> to vector<8x1xf32>
    %255 = tpu.reciprocal %254 : vector<8x1xf32> -> vector<8x1xf32>
    %256 = vector.broadcast %255 : vector<8x1xf32> to vector<8x10xf32>
    %257 = arith.mulf %252, %256 : vector<8x10xf32>
    %258 = vector.shape_cast %257 : vector<8x10xf32> to vector<1x8x10xf32>
    %259 = vector.extract_strided_slice %218 {offsets = [0, 8], sizes = [10, 8], strides = [1, 1]} : vector<10x32xf32> to vector<10x8xf32>
    %cst_92 = arith.constant dense<0.000000e+00> : vector<8x8xf32>
    %260 = tpu.matmul %257, %259, %cst_92 {dimension_numbers = #tpu.dot_dimension_numbers<[1], [0], [0], [1], [0, 0, 1, 1], [], []>} : vector<8x10xf32>, vector<10x8xf32>, vector<8x8xf32> -> vector<8x8xf32>
    %261 = vector.extract_strided_slice %216 {offsets = [0, 16], sizes = [8, 8], strides = [1, 1]} : vector<8x32xf32> to vector<8x8xf32>
    %262 = vector.extract_strided_slice %217 {offsets = [0, 16], sizes = [10, 8], strides = [1, 1]} : vector<10x32xf32> to vector<10x8xf32>
    %cst_93 = arith.constant dense<0.000000e+00> : vector<8x10xf32>
    %263 = tpu.matmul %261, %262, %cst_93 {dimension_numbers = #tpu.dot_dimension_numbers<[1], [1], [0], [0], [0, 0, 1, 0], [], []>} : vector<8x8xf32>, vector<10x8xf32>, vector<8x10xf32> -> vector<8x10xf32>
    %cst_94 = arith.constant 0.353553385 : f32
    %264 = vector.broadcast %cst_94 : f32 to vector<8x10xf32>
    %265 = arith.mulf %263, %264 : vector<8x10xf32>
    %266 = vector.broadcast %220 : vector<1x10xf32> to vector<8x10xf32>
    %267 = arith.addf %265, %266 : vector<8x10xf32>
    %cst_95 = arith.constant dense<0xFF800000> : vector<8xf32>
    %268 = vector.multi_reduction <maximumf>, %267, %cst_95 [1] : vector<8x10xf32> to vector<8xf32>
    %269 = vector.shape_cast %268 : vector<8xf32> to vector<8x1xf32>
    %270 = vector.broadcast %269 : vector<8x1xf32> to vector<8x10xf32>
    %271 = arith.subf %267, %270 : vector<8x10xf32>
    %272 = math.exp %271 : vector<8x10xf32>
    %cst_96 = arith.constant dense<0.000000e+00> : vector<8xf32>
    %273 = vector.multi_reduction <add>, %272, %cst_96 [1] : vector<8x10xf32> to vector<8xf32>
    %274 = vector.shape_cast %273 : vector<8xf32> to vector<8x1xf32>
    %275 = tpu.reciprocal %274 : vector<8x1xf32> -> vector<8x1xf32>
    %276 = vector.broadcast %275 : vector<8x1xf32> to vector<8x10xf32>
    %277 = arith.mulf %272, %276 : vector<8x10xf32>
    %278 = vector.shape_cast %277 : vector<8x10xf32> to vector<1x8x10xf32>
    %279 = vector.extract_strided_slice %218 {offsets = [0, 16], sizes = [10, 8], strides = [1, 1]} : vector<10x32xf32> to vector<10x8xf32>
    %cst_97 = arith.constant dense<0.000000e+00> : vector<8x8xf32>
    %280 = tpu.matmul %277, %279, %cst_97 {dimension_numbers = #tpu.dot_dimension_numbers<[1], [0], [0], [1], [0, 0, 1, 1], [], []>} : vector<8x10xf32>, vector<10x8xf32>, vector<8x8xf32> -> vector<8x8xf32>
    %281 = vector.extract_strided_slice %216 {offsets = [0, 24], sizes = [8, 8], strides = [1, 1]} : vector<8x32xf32> to vector<8x8xf32>
    %282 = vector.extract_strided_slice %217 {offsets = [0, 24], sizes = [10, 8], strides = [1, 1]} : vector<10x32xf32> to vector<10x8xf32>
    %cst_98 = arith.constant dense<0.000000e+00> : vector<8x10xf32>
    %283 = tpu.matmul %281, %282, %cst_98 {dimension_numbers = #tpu.dot_dimension_numbers<[1], [1], [0], [0], [0, 0, 1, 0], [], []>} : vector<8x8xf32>, vector<10x8xf32>, vector<8x10xf32> -> vector<8x10xf32>
    %cst_99 = arith.constant 0.353553385 : f32
    %284 = vector.broadcast %cst_99 : f32 to vector<8x10xf32>
    %285 = arith.mulf %283, %284 : vector<8x10xf32>
    %286 = vector.broadcast %220 : vector<1x10xf32> to vector<8x10xf32>
    %287 = arith.addf %285, %286 : vector<8x10xf32>
    %cst_100 = arith.constant dense<0xFF800000> : vector<8xf32>
    %288 = vector.multi_reduction <maximumf>, %287, %cst_100 [1] : vector<8x10xf32> to vector<8xf32>
    %289 = vector.shape_cast %288 : vector<8xf32> to vector<8x1xf32>
    %290 = vector.broadcast %289 : vector<8x1xf32> to vector<8x10xf32>
    %291 = arith.subf %287, %290 : vector<8x10xf32>
    %292 = math.exp %291 : vector<8x10xf32>
    %cst_101 = arith.constant dense<0.000000e+00> : vector<8xf32>
    %293 = vector.multi_reduction <add>, %292, %cst_101 [1] : vector<8x10xf32> to vector<8xf32>
    %294 = vector.shape_cast %293 : vector<8xf32> to vector<8x1xf32>
    %295 = tpu.reciprocal %294 : vector<8x1xf32> -> vector<8x1xf32>
    %296 = vector.broadcast %295 : vector<8x1xf32> to vector<8x10xf32>
    %297 = arith.mulf %292, %296 : vector<8x10xf32>
    %298 = vector.shape_cast %297 : vector<8x10xf32> to vector<1x8x10xf32>
    %299 = vector.extract_strided_slice %218 {offsets = [0, 24], sizes = [10, 8], strides = [1, 1]} : vector<10x32xf32> to vector<10x8xf32>
    %cst_102 = arith.constant dense<0.000000e+00> : vector<8x8xf32>
    %300 = tpu.matmul %297, %299, %cst_102 {dimension_numbers = #tpu.dot_dimension_numbers<[1], [0], [0], [1], [0, 0, 1, 1], [], []>} : vector<8x10xf32>, vector<10x8xf32>, vector<8x8xf32> -> vector<8x8xf32>
    %301 = tpu.concatenate %240, %260, %280, %300 in 1 : vector<8x8xf32>, vector<8x8xf32>, vector<8x8xf32>, vector<8x8xf32> -> vector<8x32xf32>
    %302 = tpu.concatenate %238, %258, %278, %298 in 0 : vector<1x8x10xf32>, vector<1x8x10xf32>, vector<1x8x10xf32>, vector<1x8x10xf32> -> vector<4x8x10xf32>
    %c0_103 = arith.constant 0 : index
    %c0_104 = arith.constant 0 : index
    %c0_105 = arith.constant 0 : index
    %c0_106 = arith.constant 0 : index
    %303 = vector.load %arg26[%c0_103, %c0_104, %c0_105, %c0_106] : memref<2x4x8x10xf32, #tpu.memory_space<vmem>>, vector<1x4x8x10xf32>
    %304 = vector.shape_cast %303 : vector<1x4x8x10xf32> to vector<4x8x10xf32>
    %305 = vector.shape_cast %302 : vector<4x8x10xf32> to vector<1x4x8x10xf32>
    tpu.vector_store %arg26[%c0_103, %c0_104, %c0_105, %c0_106], %305 {strides = array<i32>} : memref<2x4x8x10xf32, #tpu.memory_space<vmem>>, vector<1x4x8x10xf32>,
    %306 = vector.extract_strided_slice %204 {offsets = [8, 0], sizes = [8, 32], strides = [1, 1]} : vector<16x32xf32> to vector<8x32xf32>
    %307 = vector.extract_strided_slice %209 {offsets = [10, 0], sizes = [10, 32], strides = [1, 1]} : vector<20x64xf32> to vector<10x32xf32>
    %308 = vector.extract_strided_slice %209 {offsets = [10, 32], sizes = [10, 32], strides = [1, 1]} : vector<20x64xf32> to vector<10x32xf32>
    %309 = vector.extract_strided_slice %215 {offsets = [1, 0, 0], sizes = [1, 1, 10], strides = [1, 1, 1]} : vector<2x1x10xf32> to vector<1x1x10xf32>
    %310 = vector.shape_cast %309 : vector<1x1x10xf32> to vector<1x10xf32>
    %311 = vector.extract_strided_slice %306 {offsets = [0, 0], sizes = [8, 8], strides = [1, 1]} : vector<8x32xf32> to vector<8x8xf32>
    %312 = vector.extract_strided_slice %307 {offsets = [0, 0], sizes = [10, 8], strides = [1, 1]} : vector<10x32xf32> to vector<10x8xf32>
    %cst_107 = arith.constant dense<0.000000e+00> : vector<8x10xf32>
    %313 = tpu.matmul %311, %312, %cst_107 {dimension_numbers = #tpu.dot_dimension_numbers<[1], [1], [0], [0], [0, 0, 1, 0], [], []>} : vector<8x8xf32>, vector<10x8xf32>, vector<8x10xf32> -> vector<8x10xf32>
    %cst_108 = arith.constant 0.353553385 : f32
    %314 = vector.broadcast %cst_108 : f32 to vector<8x10xf32>
    %315 = arith.mulf %313, %314 : vector<8x10xf32>
    %316 = vector.broadcast %310 : vector<1x10xf32> to vector<8x10xf32>
    %317 = arith.addf %315, %316 : vector<8x10xf32>
    %cst_109 = arith.constant dense<0xFF800000> : vector<8xf32>
    %318 = vector.multi_reduction <maximumf>, %317, %cst_109 [1] : vector<8x10xf32> to vector<8xf32>
    %319 = vector.shape_cast %318 : vector<8xf32> to vector<8x1xf32>
    %320 = vector.broadcast %319 : vector<8x1xf32> to vector<8x10xf32>
    %321 = arith.subf %317, %320 : vector<8x10xf32>
    %322 = math.exp %321 : vector<8x10xf32>
    %cst_110 = arith.constant dense<0.000000e+00> : vector<8xf32>
    %323 = vector.multi_reduction <add>, %322, %cst_110 [1] : vector<8x10xf32> to vector<8xf32>
    %324 = vector.shape_cast %323 : vector<8xf32> to vector<8x1xf32>
    %325 = tpu.reciprocal %324 : vector<8x1xf32> -> vector<8x1xf32>
    %326 = vector.broadcast %325 : vector<8x1xf32> to vector<8x10xf32>
    %327 = arith.mulf %322, %326 : vector<8x10xf32>
    %328 = vector.shape_cast %327 : vector<8x10xf32> to vector<1x8x10xf32>
    %329 = vector.extract_strided_slice %308 {offsets = [0, 0], sizes = [10, 8], strides = [1, 1]} : vector<10x32xf32> to vector<10x8xf32>
    %cst_111 = arith.constant dense<0.000000e+00> : vector<8x8xf32>
    %330 = tpu.matmul %327, %329, %cst_111 {dimension_numbers = #tpu.dot_dimension_numbers<[1], [0], [0], [1], [0, 0, 1, 1], [], []>} : vector<8x10xf32>, vector<10x8xf32>, vector<8x8xf32> -> vector<8x8xf32>
    %331 = vector.extract_strided_slice %306 {offsets = [0, 8], sizes = [8, 8], strides = [1, 1]} : vector<8x32xf32> to vector<8x8xf32>
    %332 = vector.extract_strided_slice %307 {offsets = [0, 8], sizes = [10, 8], strides = [1, 1]} : vector<10x32xf32> to vector<10x8xf32>
    %cst_112 = arith.constant dense<0.000000e+00> : vector<8x10xf32>
    %333 = tpu.matmul %331, %332, %cst_112 {dimension_numbers = #tpu.dot_dimension_numbers<[1], [1], [0], [0], [0, 0, 1, 0], [], []>} : vector<8x8xf32>, vector<10x8xf32>, vector<8x10xf32> -> vector<8x10xf32>
    %cst_113 = arith.constant 0.353553385 : f32
    %334 = vector.broadcast %cst_113 : f32 to vector<8x10xf32>
    %335 = arith.mulf %333, %334 : vector<8x10xf32>
    %336 = vector.broadcast %310 : vector<1x10xf32> to vector<8x10xf32>
    %337 = arith.addf %335, %336 : vector<8x10xf32>
    %cst_114 = arith.constant dense<0xFF800000> : vector<8xf32>
    %338 = vector.multi_reduction <maximumf>, %337, %cst_114 [1] : vector<8x10xf32> to vector<8xf32>
    %339 = vector.shape_cast %338 : vector<8xf32> to vector<8x1xf32>
    %340 = vector.broadcast %339 : vector<8x1xf32> to vector<8x10xf32>
    %341 = arith.subf %337, %340 : vector<8x10xf32>
    %342 = math.exp %341 : vector<8x10xf32>
    %cst_115 = arith.constant dense<0.000000e+00> : vector<8xf32>
    %343 = vector.multi_reduction <add>, %342, %cst_115 [1] : vector<8x10xf32> to vector<8xf32>
    %344 = vector.shape_cast %343 : vector<8xf32> to vector<8x1xf32>
    %345 = tpu.reciprocal %344 : vector<8x1xf32> -> vector<8x1xf32>
    %346 = vector.broadcast %345 : vector<8x1xf32> to vector<8x10xf32>
    %347 = arith.mulf %342, %346 : vector<8x10xf32>
    %348 = vector.shape_cast %347 : vector<8x10xf32> to vector<1x8x10xf32>
    %349 = vector.extract_strided_slice %308 {offsets = [0, 8], sizes = [10, 8], strides = [1, 1]} : vector<10x32xf32> to vector<10x8xf32>
    %cst_116 = arith.constant dense<0.000000e+00> : vector<8x8xf32>
    %350 = tpu.matmul %347, %349, %cst_116 {dimension_numbers = #tpu.dot_dimension_numbers<[1], [0], [0], [1], [0, 0, 1, 1], [], []>} : vector<8x10xf32>, vector<10x8xf32>, vector<8x8xf32> -> vector<8x8xf32>
    %351 = vector.extract_strided_slice %306 {offsets = [0, 16], sizes = [8, 8], strides = [1, 1]} : vector<8x32xf32> to vector<8x8xf32>
    %352 = vector.extract_strided_slice %307 {offsets = [0, 16], sizes = [10, 8], strides = [1, 1]} : vector<10x32xf32> to vector<10x8xf32>
    %cst_117 = arith.constant dense<0.000000e+00> : vector<8x10xf32>
    %353 = tpu.matmul %351, %352, %cst_117 {dimension_numbers = #tpu.dot_dimension_numbers<[1], [1], [0], [0], [0, 0, 1, 0], [], []>} : vector<8x8xf32>, vector<10x8xf32>, vector<8x10xf32> -> vector<8x10xf32>
    %cst_118 = arith.constant 0.353553385 : f32
    %354 = vector.broadcast %cst_118 : f32 to vector<8x10xf32>
    %355 = arith.mulf %353, %354 : vector<8x10xf32>
    %356 = vector.broadcast %310 : vector<1x10xf32> to vector<8x10xf32>
    %357 = arith.addf %355, %356 : vector<8x10xf32>
    %cst_119 = arith.constant dense<0xFF800000> : vector<8xf32>
    %358 = vector.multi_reduction <maximumf>, %357, %cst_119 [1] : vector<8x10xf32> to vector<8xf32>
    %359 = vector.shape_cast %358 : vector<8xf32> to vector<8x1xf32>
    %360 = vector.broadcast %359 : vector<8x1xf32> to vector<8x10xf32>
    %361 = arith.subf %357, %360 : vector<8x10xf32>
    %362 = math.exp %361 : vector<8x10xf32>
    %cst_120 = arith.constant dense<0.000000e+00> : vector<8xf32>
    %363 = vector.multi_reduction <add>, %362, %cst_120 [1] : vector<8x10xf32> to vector<8xf32>
    %364 = vector.shape_cast %363 : vector<8xf32> to vector<8x1xf32>
    %365 = tpu.reciprocal %364 : vector<8x1xf32> -> vector<8x1xf32>
    %366 = vector.broadcast %365 : vector<8x1xf32> to vector<8x10xf32>
    %367 = arith.mulf %362, %366 : vector<8x10xf32>
    %368 = vector.shape_cast %367 : vector<8x10xf32> to vector<1x8x10xf32>
    %369 = vector.extract_strided_slice %308 {offsets = [0, 16], sizes = [10, 8], strides = [1, 1]} : vector<10x32xf32> to vector<10x8xf32>
    %cst_121 = arith.constant dense<0.000000e+00> : vector<8x8xf32>
    %370 = tpu.matmul %367, %369, %cst_121 {dimension_numbers = #tpu.dot_dimension_numbers<[1], [0], [0], [1], [0, 0, 1, 1], [], []>} : vector<8x10xf32>, vector<10x8xf32>, vector<8x8xf32> -> vector<8x8xf32>
    %371 = vector.extract_strided_slice %306 {offsets = [0, 24], sizes = [8, 8], strides = [1, 1]} : vector<8x32xf32> to vector<8x8xf32>
    %372 = vector.extract_strided_slice %307 {offsets = [0, 24], sizes = [10, 8], strides = [1, 1]} : vector<10x32xf32> to vector<10x8xf32>
    %cst_122 = arith.constant dense<0.000000e+00> : vector<8x10xf32>
    %373 = tpu.matmul %371, %372, %cst_122 {dimension_numbers = #tpu.dot_dimension_numbers<[1], [1], [0], [0], [0, 0, 1, 0], [], []>} : vector<8x8xf32>, vector<10x8xf32>, vector<8x10xf32> -> vector<8x10xf32>
    %cst_123 = arith.constant 0.353553385 : f32
    %374 = vector.broadcast %cst_123 : f32 to vector<8x10xf32>
    %375 = arith.mulf %373, %374 : vector<8x10xf32>
    %376 = vector.broadcast %310 : vector<1x10xf32> to vector<8x10xf32>
    %377 = arith.addf %375, %376 : vector<8x10xf32>
    %cst_124 = arith.constant dense<0xFF800000> : vector<8xf32>
    %378 = vector.multi_reduction <maximumf>, %377, %cst_124 [1] : vector<8x10xf32> to vector<8xf32>
    %379 = vector.shape_cast %378 : vector<8xf32> to vector<8x1xf32>
    %380 = vector.broadcast %379 : vector<8x1xf32> to vector<8x10xf32>
    %381 = arith.subf %377, %380 : vector<8x10xf32>
    %382 = math.exp %381 : vector<8x10xf32>
    %cst_125 = arith.constant dense<0.000000e+00> : vector<8xf32>
    %383 = vector.multi_reduction <add>, %382, %cst_125 [1] : vector<8x10xf32> to vector<8xf32>
    %384 = vector.shape_cast %383 : vector<8xf32> to vector<8x1xf32>
    %385 = tpu.reciprocal %384 : vector<8x1xf32> -> vector<8x1xf32>
    %386 = vector.broadcast %385 : vector<8x1xf32> to vector<8x10xf32>
    %387 = arith.mulf %382, %386 : vector<8x10xf32>
    %388 = vector.shape_cast %387 : vector<8x10xf32> to vector<1x8x10xf32>
    %389 = vector.extract_strided_slice %308 {offsets = [0, 24], sizes = [10, 8], strides = [1, 1]} : vector<10x32xf32> to vector<10x8xf32>
    %cst_126 = arith.constant dense<0.000000e+00> : vector<8x8xf32>
    %390 = tpu.matmul %387, %389, %cst_126 {dimension_numbers = #tpu.dot_dimension_numbers<[1], [0], [0], [1], [0, 0, 1, 1], [], []>} : vector<8x10xf32>, vector<10x8xf32>, vector<8x8xf32> -> vector<8x8xf32>
    %391 = tpu.concatenate %330, %350, %370, %390 in 1 : vector<8x8xf32>, vector<8x8xf32>, vector<8x8xf32>, vector<8x8xf32> -> vector<8x32xf32>
    %392 = tpu.concatenate %328, %348, %368, %388 in 0 : vector<1x8x10xf32>, vector<1x8x10xf32>, vector<1x8x10xf32>, vector<1x8x10xf32> -> vector<4x8x10xf32>
    %c1 = arith.constant 1 : index
    %c0_127 = arith.constant 0 : index
    %c0_128 = arith.constant 0 : index
    %c0_129 = arith.constant 0 : index
    %393 = vector.load %arg26[%c1, %c0_127, %c0_128, %c0_129] : memref<2x4x8x10xf32, #tpu.memory_space<vmem>>, vector<1x4x8x10xf32>
    %394 = vector.shape_cast %393 : vector<1x4x8x10xf32> to vector<4x8x10xf32>
    %395 = vector.shape_cast %392 : vector<4x8x10xf32> to vector<1x4x8x10xf32>
    tpu.vector_store %arg26[%c1, %c0_127, %c0_128, %c0_129], %395 {strides = array<i32>} : memref<2x4x8x10xf32, #tpu.memory_space<vmem>>, vector<1x4x8x10xf32>,
    %396 = tpu.concatenate %301, %391 in 0 : vector<8x32xf32>, vector<8x32xf32> -> vector<16x32xf32>
    %c0_130 = arith.constant 0 : index
    %c0_131 = arith.constant 0 : index
    %397 = vector.load %arg15[%c0_130, %c0_131] : memref<32x32xf32, #tpu.memory_space<vmem>>, vector<32x32xf32>
    %cst_132 = arith.constant dense<0.000000e+00> : vector<16x32xf32>
    %398 = tpu.matmul %396, %397, %cst_132 {dimension_numbers = #tpu.dot_dimension_numbers<[1], [0], [0], [1], [0, 0, 1, 1], [], []>} : vector<16x32xf32>, vector<32x32xf32>, vector<16x32xf32> -> vector<16x32xf32>
    %c0_133 = arith.constant 0 : index
    %c0_134 = arith.constant 0 : index
    %399 = vector.load %arg16[%c0_133, %c0_134] : memref<1x32xf32, #tpu.memory_space<vmem>>, vector<1x32xf32>
    %400 = vector.broadcast %399 : vector<1x32xf32> to vector<16x32xf32>
    %401 = arith.addf %398, %400 : vector<16x32xf32>
    %402 = arith.addf %199, %401 : vector<16x32xf32>
    %c0_135 = arith.constant 0 : index
    %c0_136 = arith.constant 0 : index
    %403 = vector.load %arg17[%c0_135, %c0_136] : memref<1x32xf32, #tpu.memory_space<vmem>>, vector<1x32xf32>
    %c0_137 = arith.constant 0 : index
    %c0_138 = arith.constant 0 : index
    %404 = vector.load %arg18[%c0_137, %c0_138] : memref<1x32xf32, #tpu.memory_space<vmem>>, vector<1x32xf32>
    %cst_139 = arith.constant dense<0.000000e+00> : vector<16xf32>
    %405 = vector.multi_reduction <add>, %402, %cst_139 [1] : vector<16x32xf32> to vector<16xf32>
    %406 = vector.shape_cast %405 : vector<16xf32> to vector<16x1xf32>
    %cst_140 = arith.constant 3.200000e+01 : f32
    %407 = vector.broadcast %cst_140 : f32 to vector<16x1xf32>
    %408 = arith.divf %406, %407 : vector<16x1xf32>
    %409 = vector.broadcast %408 : vector<16x1xf32> to vector<16x32xf32>
    %410 = arith.subf %402, %409 : vector<16x32xf32>
    %411 = arith.mulf %410, %410 : vector<16x32xf32>
    %cst_141 = arith.constant dense<0.000000e+00> : vector<16xf32>
    %412 = vector.multi_reduction <add>, %411, %cst_141 [1] : vector<16x32xf32> to vector<16xf32>
    %413 = vector.shape_cast %412 : vector<16xf32> to vector<16x1xf32>
    %cst_142 = arith.constant 3.200000e+01 : f32
    %414 = vector.broadcast %cst_142 : f32 to vector<16x1xf32>
    %415 = arith.divf %413, %414 : vector<16x1xf32>
    %416 = vector.broadcast %408 : vector<16x1xf32> to vector<16x32xf32>
    %417 = arith.subf %402, %416 : vector<16x32xf32>
    %cst_143 = arith.constant 9.99999974E-6 : f32
    %418 = vector.broadcast %cst_143 : f32 to vector<16x1xf32>
    %419 = arith.addf %415, %418 : vector<16x1xf32>
    %420 = math.rsqrt %419 : vector<16x1xf32>
    %421 = vector.broadcast %420 : vector<16x1xf32> to vector<16x32xf32>
    %422 = arith.mulf %417, %421 : vector<16x32xf32>
    %423 = vector.broadcast %403 : vector<1x32xf32> to vector<16x32xf32>
    %424 = arith.mulf %422, %423 : vector<16x32xf32>
    %425 = vector.broadcast %404 : vector<1x32xf32> to vector<16x32xf32>
    %426 = arith.addf %424, %425 : vector<16x32xf32>
    %c0_144 = arith.constant 0 : index
    %c0_145 = arith.constant 0 : index
    %427 = vector.load %arg19[%c0_144, %c0_145] : memref<32x64xf32, #tpu.memory_space<vmem>>, vector<32x64xf32>
    %cst_146 = arith.constant dense<0.000000e+00> : vector<16x64xf32>
    %428 = tpu.matmul %426, %427, %cst_146 {dimension_numbers = #tpu.dot_dimension_numbers<[1], [0], [0], [1], [0, 0, 1, 1], [], []>} : vector<16x32xf32>, vector<32x64xf32>, vector<16x64xf32> -> vector<16x64xf32>
    %c0_147 = arith.constant 0 : index
    %c0_148 = arith.constant 0 : index
    %429 = vector.load %arg20[%c0_147, %c0_148] : memref<1x64xf32, #tpu.memory_space<vmem>>, vector<1x64xf32>
    %430 = vector.broadcast %429 : vector<1x64xf32> to vector<16x64xf32>
    %431 = arith.addf %428, %430 : vector<16x64xf32>
    %cst_149 = arith.constant 0.000000e+00 : f32
    %432 = vector.broadcast %cst_149 : f32 to vector<16x64xf32>
    %433 = arith.maximumf %431, %432 : vector<16x64xf32>
    %c0_150 = arith.constant 0 : index
    %c0_151 = arith.constant 0 : index
    %434 = vector.load %arg21[%c0_150, %c0_151] : memref<64x32xf32, #tpu.memory_space<vmem>>, vector<64x32xf32>
    %cst_152 = arith.constant dense<0.000000e+00> : vector<16x32xf32>
    %435 = tpu.matmul %433, %434, %cst_152 {dimension_numbers = #tpu.dot_dimension_numbers<[1], [0], [0], [1], [0, 0, 1, 1], [], []>} : vector<16x64xf32>, vector<64x32xf32>, vector<16x32xf32> -> vector<16x32xf32>
    %c0_153 = arith.constant 0 : index
    %c0_154 = arith.constant 0 : index
    %436 = vector.load %arg22[%c0_153, %c0_154] : memref<1x32xf32, #tpu.memory_space<vmem>>, vector<1x32xf32>
    %437 = vector.broadcast %436 : vector<1x32xf32> to vector<16x32xf32>
    %438 = arith.addf %435, %437 : vector<16x32xf32>
    %439 = arith.addf %426, %438 : vector<16x32xf32>
    %c0_155 = arith.constant 0 : index
    %c0_156 = arith.constant 0 : index
    %440 = vector.load %arg23[%c0_155, %c0_156] : memref<1x32xf32, #tpu.memory_space<vmem>>, vector<1x32xf32>
    %c0_157 = arith.constant 0 : index
    %c0_158 = arith.constant 0 : index
    %441 = vector.load %arg24[%c0_157, %c0_158] : memref<1x32xf32, #tpu.memory_space<vmem>>, vector<1x32xf32>
    %cst_159 = arith.constant dense<0.000000e+00> : vector<16xf32>
    %442 = vector.multi_reduction <add>, %439, %cst_159 [1] : vector<16x32xf32> to vector<16xf32>
    %443 = vector.shape_cast %442 : vector<16xf32> to vector<16x1xf32>
    %cst_160 = arith.constant 3.200000e+01 : f32
    %444 = vector.broadcast %cst_160 : f32 to vector<16x1xf32>
    %445 = arith.divf %443, %444 : vector<16x1xf32>
    %446 = vector.broadcast %445 : vector<16x1xf32> to vector<16x32xf32>
    %447 = arith.subf %439, %446 : vector<16x32xf32>
    %448 = arith.mulf %447, %447 : vector<16x32xf32>
    %cst_161 = arith.constant dense<0.000000e+00> : vector<16xf32>
    %449 = vector.multi_reduction <add>, %448, %cst_161 [1] : vector<16x32xf32> to vector<16xf32>
    %450 = vector.shape_cast %449 : vector<16xf32> to vector<16x1xf32>
    %cst_162 = arith.constant 3.200000e+01 : f32
    %451 = vector.broadcast %cst_162 : f32 to vector<16x1xf32>
    %452 = arith.divf %450, %451 : vector<16x1xf32>
    %453 = vector.broadcast %445 : vector<16x1xf32> to vector<16x32xf32>
    %454 = arith.subf %439, %453 : vector<16x32xf32>
    %cst_163 = arith.constant 9.99999974E-6 : f32
    %455 = vector.broadcast %cst_163 : f32 to vector<16x1xf32>
    %456 = arith.addf %452, %455 : vector<16x1xf32>
    %457 = math.rsqrt %456 : vector<16x1xf32>
    %458 = vector.broadcast %457 : vector<16x1xf32> to vector<16x32xf32>
    %459 = arith.mulf %454, %458 : vector<16x32xf32>
    %460 = vector.broadcast %440 : vector<1x32xf32> to vector<16x32xf32>
    %461 = arith.mulf %459, %460 : vector<16x32xf32>
    %462 = vector.broadcast %441 : vector<1x32xf32> to vector<16x32xf32>
    %463 = arith.addf %461, %462 : vector<16x32xf32>
    %c0_164 = arith.constant 0 : index
    %c0_165 = arith.constant 0 : index
    %464 = vector.load %arg25[%c0_164, %c0_165] : memref<16x32xf32, #tpu.memory_space<vmem>>, vector<16x32xf32>
    tpu.vector_store %arg25[%c0_164, %c0_165], %463 {strides = array<i32>} : memref<16x32xf32, #tpu.memory_space<vmem>>, vector<16x32xf32>,
    return
  }
  func.func @transform_0(%arg0: i32) -> (i32, i32) {
    %c0_i32 = arith.constant 0 : i32
    %c0_i32_0 = arith.constant 0 : i32
    %c0_i32_1 = arith.constant 0 : i32
    return %c0_i32, %c0_i32_0 : i32, i32
  }
  func.func @transform_1(%arg0: i32) -> (i32, i32) {
    %c0_i32 = arith.constant 0 : i32
    %c0_i32_0 = arith.constant 0 : i32
    %c0_i32_1 = arith.constant 0 : i32
    return %c0_i32, %c0_i32_0 : i32, i32
  }
  func.func @transform_2(%arg0: i32) -> (i32, i32, i32) {
    %c0_i32 = arith.constant 0 : i32
    %c0_i32_0 = arith.constant 0 : i32
    %c0_i32_1 = arith.constant 0 : i32
    %c0_i32_2 = arith.constant 0 : i32
    return %c0_i32, %c0_i32_0, %c0_i32_1 : i32, i32, i32
  }
  func.func @transform_3(%arg0: i32) -> (i32, i32, i32) {
    %c0_i32 = arith.constant 0 : i32
    %c0_i32_0 = arith.constant 0 : i32
    %c0_i32_1 = arith.constant 0 : i32
    %c0_i32_2 = arith.constant 0 : i32
    return %c0_i32, %c0_i32_0, %c0_i32_1 : i32, i32, i32
  }
  func.func @transform_4(%arg0: i32) -> (i32, i32) {
    %c0_i32 = arith.constant 0 : i32
    %c0_i32_0 = arith.constant 0 : i32
    %c0_i32_1 = arith.constant 0 : i32
    return %c0_i32, %c0_i32_0 : i32, i32
  }
  func.func @transform_5(%arg0: i32) -> (i32, i32) {
    %c0_i32 = arith.constant 0 : i32
    %c0_i32_0 = arith.constant 0 : i32
    %c0_i32_1 = arith.constant 0 : i32
    return %c0_i32, %c0_i32_0 : i32, i32
  }
  func.func @transform_6(%arg0: i32) -> (i32, i32) {
    %c0_i32 = arith.constant 0 : i32
    %c0_i32_0 = arith.constant 0 : i32
    %c0_i32_1 = arith.constant 0 : i32
    return %c0_i32, %c0_i32_0 : i32, i32
  }
  func.func @transform_7(%arg0: i32) -> (i32, i32) {
    %c0_i32 = arith.constant 0 : i32
    %c0_i32_0 = arith.constant 0 : i32
    %c0_i32_1 = arith.constant 0 : i32
    return %c0_i32, %c0_i32_0 : i32, i32
  }
  func.func @transform_8(%arg0: i32) -> (i32, i32) {
    %c0_i32 = arith.constant 0 : i32
    %c0_i32_0 = arith.constant 0 : i32
    %c0_i32_1 = arith.constant 0 : i32
    return %c0_i32, %c0_i32_0 : i32, i32
  }
  func.func @transform_9(%arg0: i32) -> (i32, i32) {
    %c0_i32 = arith.constant 0 : i32
    %c0_i32_0 = arith.constant 0 : i32
    %c0_i32_1 = arith.constant 0 : i32
    return %c0_i32, %c0_i32_0 : i32, i32
  }
  func.func @transform_10(%arg0: i32) -> (i32, i32) {
    %c0_i32 = arith.constant 0 : i32
    %c0_i32_0 = arith.constant 0 : i32
    %c0_i32_1 = arith.constant 0 : i32
    return %c0_i32, %c0_i32_0 : i32, i32
  }
  func.func @transform_11(%arg0: i32) -> (i32, i32) {
    %c0_i32 = arith.constant 0 : i32
    %c0_i32_0 = arith.constant 0 : i32
    %c0_i32_1 = arith.constant 0 : i32
    return %c0_i32, %c0_i32_0 : i32, i32
  }
  func.func @transform_12(%arg0: i32) -> (i32, i32) {
    %c0_i32 = arith.constant 0 : i32
    %c0_i32_0 = arith.constant 0 : i32
    %c0_i32_1 = arith.constant 0 : i32
    return %c0_i32, %c0_i32_0 : i32, i32
  }
  func.func @transform_13(%arg0: i32) -> (i32, i32) {
    %c0_i32 = arith.constant 0 : i32
    %c0_i32_0 = arith.constant 0 : i32
    %c0_i32_1 = arith.constant 0 : i32
    return %c0_i32, %c0_i32_0 : i32, i32
  }
  func.func @transform_14(%arg0: i32) -> (i32, i32) {
    %c0_i32 = arith.constant 0 : i32
    %c0_i32_0 = arith.constant 0 : i32
    %c0_i32_1 = arith.constant 0 : i32
    return %c0_i32, %c0_i32_0 : i32, i32
  }
  func.func @transform_15(%arg0: i32) -> (i32, i32) {
    %c0_i32 = arith.constant 0 : i32
    %c0_i32_0 = arith.constant 0 : i32
    %c0_i32_1 = arith.constant 0 : i32
    return %c0_i32, %c0_i32_0 : i32, i32
  }
  func.func @transform_16(%arg0: i32) -> (i32, i32) {
    %c0_i32 = arith.constant 0 : i32
    %c0_i32_0 = arith.constant 0 : i32
    %c0_i32_1 = arith.constant 0 : i32
    return %c0_i32, %c0_i32_0 : i32, i32
  }
  func.func @transform_17(%arg0: i32) -> (i32, i32) {
    %c0_i32 = arith.constant 0 : i32
    %c0_i32_0 = arith.constant 0 : i32
    %c0_i32_1 = arith.constant 0 : i32
    return %c0_i32, %c0_i32_0 : i32, i32
  }
  func.func @transform_18(%arg0: i32) -> (i32, i32) {
    %c0_i32 = arith.constant 0 : i32
    %c0_i32_0 = arith.constant 0 : i32
    %c0_i32_1 = arith.constant 0 : i32
    return %c0_i32, %c0_i32_0 : i32, i32
  }
  func.func @transform_19(%arg0: i32) -> (i32, i32) {
    %c0_i32 = arith.constant 0 : i32
    %c0_i32_0 = arith.constant 0 : i32
    %c0_i32_1 = arith.constant 0 : i32
    return %c0_i32, %c0_i32_0 : i32, i32
  }
  func.func @transform_20(%arg0: i32) -> (i32, i32) {
    %c0_i32 = arith.constant 0 : i32
    %c0_i32_0 = arith.constant 0 : i32
    %c0_i32_1 = arith.constant 0 : i32
    return %c0_i32, %c0_i32_0 : i32, i32
  }
  func.func @transform_21(%arg0: i32) -> (i32, i32) {
    %c0_i32 = arith.constant 0 : i32
    %c0_i32_0 = arith.constant 0 : i32
    %c0_i32_1 = arith.constant 0 : i32
    return %c0_i32, %c0_i32_0 : i32, i32
  }
  func.func @transform_22(%arg0: i32) -> (i32, i32) {
    %c0_i32 = arith.constant 0 : i32
    %c0_i32_0 = arith.constant 0 : i32
    %c0_i32_1 = arith.constant 0 : i32
    return %c0_i32, %c0_i32_0 : i32, i32
  }
  func.func @transform_23(%arg0: i32) -> (i32, i32) {
    %c0_i32 = arith.constant 0 : i32
    %c0_i32_0 = arith.constant 0 : i32
    %c0_i32_1 = arith.constant 0 : i32
    return %c0_i32, %c0_i32_0 : i32, i32
  }
  func.func @transform_24(%arg0: i32) -> (i32, i32) {
    %c0_i32 = arith.constant 0 : i32
    %c0_i32_0 = arith.constant 0 : i32
    %c0_i32_1 = arith.constant 0 : i32
    return %c0_i32, %c0_i32_0 : i32, i32
  }
  func.func @transform_25(%arg0: i32) -> (i32, i32, i32, i32) {
    %c0_i32 = arith.constant 0 : i32
    %c0_i32_0 = arith.constant 0 : i32
    %c0_i32_1 = arith.constant 0 : i32
    %c0_i32_2 = arith.constant 0 : i32
    %c0_i32_3 = arith.constant 0 : i32
    return %c0_i32, %c0_i32_0, %c0_i32_1, %c0_i32_2 : i32, i32, i32, i32
  }
}

</mosaic_0001>

<llo_original>
// kernel: decoder_layer_forward.1
$region0: #{decoder_layer_forward.1}
  #allocation0 [shape = 'u32[]', space=smem, size = 0x4, offset = 0x4, fixed_abs, tag = 'smem constant byte address 0x4 - core index']
  #allocation1 [shape = 'u32[144,128]{1,0:T(1,128)}', space=vmem, size = 0x12000, scoped, tag = 'internal scratch']
  %s0 = inlined_call_operand.vmem [shape: f32[16,32], index: 0, kind: input, shape index: {}]
  %s1 = inlined_call_operand.vmem [shape: f32[20,32], index: 1, kind: input, shape index: {}]
  %s2 = inlined_call_operand.vmem [shape: f32[2,8,8], index: 2, kind: input, shape index: {}]
  %s3 = inlined_call_operand.vmem [shape: f32[2,1,10], index: 3, kind: input, shape index: {}]
  %s4 = inlined_call_operand.vmem [shape: f32[32,96], index: 4, kind: input, shape index: {}]
  %s5 = inlined_call_operand.vmem [shape: f32[1,96], index: 5, kind: input, shape index: {}]
  %s6 = inlined_call_operand.vmem [shape: f32[32,32], index: 6, kind: input, shape index: {}]
  %s7 = inlined_call_operand.hbm [shape: f32[1,32], index: 7, kind: input, shape index: {}]
  %s8 = inlined_call_operand.vmem [shape: f32[1,32], index: 8, kind: input, shape index: {}]
  %s9 = inlined_call_operand.hbm [shape: f32[1,32], index: 9, kind: input, shape index: {}]
  %s10 = inlined_call_operand.vmem [shape: f32[32,32], index: 10, kind: input, shape index: {}]
  %s11 = inlined_call_operand.hbm [shape: f32[1,32], index: 11, kind: input, shape index: {}]
  %s12 = inlined_call_operand.vmem [shape: f32[32,64], index: 12, kind: input, shape index: {}]
  %s13 = inlined_call_operand.hbm [shape: f32[1,64], index: 13, kind: input, shape index: {}]
  %s14 = inlined_call_operand.vmem [shape: f32[32,32], index: 14, kind: input, shape index: {}]
  %s15 = inlined_call_operand.hbm [shape: f32[1,32], index: 15, kind: input, shape index: {}]
  %s16 = inlined_call_operand.vmem [shape: f32[1,32], index: 16, kind: input, shape index: {}]
  %s17 = inlined_call_operand.hbm [shape: f32[1,32], index: 17, kind: input, shape index: {}]
  %s18 = inlined_call_operand.vmem [shape: f32[32,64], index: 18, kind: input, shape index: {}]
  %s19 = inlined_call_operand.hbm [shape: f32[1,64], index: 19, kind: input, shape index: {}]
  %s20 = inlined_call_operand.vmem [shape: f32[64,32], index: 20, kind: input, shape index: {}]
  %s21 = inlined_call_operand.hbm [shape: f32[1,32], index: 21, kind: input, shape index: {}]
  %s22 = inlined_call_operand.vmem [shape: f32[1,32], index: 22, kind: input, shape index: {}]
  %s23 = inlined_call_operand.hbm [shape: f32[1,32], index: 23, kind: input, shape index: {}]
  %s24 = inlined_call_operand.hbm [shape: f32[16,32], index: 24, kind: output, shape index: {0}]
  %s25 = inlined_call_operand.hbm [shape: f32[2,4,8,10], index: 25, kind: output, shape index: {1}]
  %26 = xla_tuple %s24, %s25
  %s27 = sld [smem:[#allocation0]]
  $region150: #{decoder_layer_forward.1} parent=0
    _
  %s29 = ssub.s32 1, %s27
  %s30 = scalar_select 0, %s29, %s27
  $region1: #{decoder_layer_forward.1} parent=0
    #allocation2 [shape = 'u8[512]{0}', space=vmem, size = 0x400, scoped, tag = 'input window, operand 7, single buffered']
    #allocation3 [shape = 's32[1]{0}', space=sflag, size = 0x4, scoped, tag = 'scoped memory for decoder_layer_forward.1']
    #allocation4 [shape = 's32[1]{0}', space=sflag, size = 0x4, scoped, tag = 'scoped memory for decoder_layer_forward.1']
    #allocation5 [shape = 'u8[512]{0}', space=vmem, size = 0x400, scoped, tag = 'input window, operand 9, single buffered']
    #allocation6 [shape = 's32[1]{0}', space=sflag, size = 0x4, scoped, tag = 'scoped memory for decoder_layer_forward.1']
    #allocation7 [shape = 'u8[512]{0}', space=vmem, size = 0x400, scoped, tag = 'input window, operand 11, single buffered']
    #allocation8 [shape = 'u8[512]{0}', space=vmem, size = 0x400, scoped, tag = 'input window, operand 13, single buffered']
    #allocation9 [shape = 's32[1]{0}', space=sflag, size = 0x4, scoped, tag = 'scoped memory for decoder_layer_forward.1']
    #allocation10 [shape = 'u8[512]{0}', space=vmem, size = 0x400, scoped, tag = 'input window, operand 15, single buffered']
    #allocation11 [shape = 'u8[512]{0}', space=vmem, size = 0x400, scoped, tag = 'input window, operand 17, single buffered']
    #allocation12 [shape = 's32[1]{0}', space=sflag, size = 0x4, scoped, tag = 'scoped memory for decoder_layer_forward.1']
    #allocation13 [shape = 'u8[512]{0}', space=vmem, size = 0x400, scoped, tag = 'input window, operand 19, single buffered']
    #allocation14 [shape = 'u8[512]{0}', space=vmem, size = 0x400, scoped, tag = 'input window, operand 21, single buffered']
    #allocation15 [shape = 's32[1]{0}', space=sflag, size = 0x4, scoped, tag = 'scoped memory for decoder_layer_forward.1']
    #allocation16 [shape = 'u8[512]{0}', space=vmem, size = 0x400, scoped, tag = 'input window, operand 23, single buffered']
    #allocation17 [shape = 'u8[8192]{0}', space=vmem, size = 0x2000, scoped, tag = 'output window, operand 0, single buffered']
    #allocation18 [shape = 'u8[32768]{0}', space=vmem, size = 0x8000, scoped, tag = 'output window, operand 1, single buffered']
    #allocation19 [shape = 's32[1]{0}', space=sflag, size = 0x4, scoped, tag = 'scoped memory for decoder_layer_forward.1']
    %31 = vsyncpa [#allocation3], 0
    %32 = vsyncpa [#allocation6], 0
    %33 = vsyncpa [#allocation9], 0
    %34 = vsyncpa [#allocation12], 0
    %35 = vsyncpa [#allocation15], 0
    %36 = vsyncpa [#allocation4], 0
    %37 = vsyncpa [#allocation19], 0
    // Predicated region
    $region2: #{decoder_layer_forward.1} parent=1 // pred_check
      _
    $region3: #{decoder_layer_forward.1} parent=1 // pred_check_branch
      %39 = sbr.rel (0) target = $region5
    $region4: #{decoder_layer_forward.1} parent=1 // pred_region
      _
    $region5: #{decoder_layer_forward.1} parent=1 // pred_fallthru
      _
    // Predicated region
    $region6: #{decoder_layer_forward.1} parent=1 // pred_check
      _
    $region7: #{decoder_layer_forward.1} parent=1 // pred_check_branch
      %41 = sbr.rel (0) target = $region9
    $region8: #{decoder_layer_forward.1} parent=1 // pred_region
      _
    $region9: #{decoder_layer_forward.1} parent=1 // pred_fallthru
      _
    // Predicated region
    $region10: #{decoder_layer_forward.1} parent=1 // pred_check
      _
    $region11: #{decoder_layer_forward.1} parent=1 // pred_check_branch
      %43 = sbr.rel (0) target = $region13
    $region12: #{decoder_layer_forward.1} parent=1 // pred_region
      _
    $region13: #{decoder_layer_forward.1} parent=1 // pred_fallthru
      _
    // Predicated region
    $region14: #{decoder_layer_forward.1} parent=1 // pred_check
      _
    $region15: #{decoder_layer_forward.1} parent=1 // pred_check_branch
      %45 = sbr.rel (0) target = $region17
    $region16: #{decoder_layer_forward.1} parent=1 // pred_region
      _
    $region17: #{decoder_layer_forward.1} parent=1 // pred_fallthru
      _
    // Predicated region
    $region18: #{decoder_layer_forward.1} parent=1 // pred_check
      _
    $region19: #{decoder_layer_forward.1} parent=1 // pred_check_branch
      %47 = sbr.rel (0) target = $region21
    $region20: #{decoder_layer_forward.1} parent=1 // pred_region
      _
    $region21: #{decoder_layer_forward.1} parent=1 // pred_fallthru
      _
    // Predicated region
    $region22: #{decoder_layer_forward.1} parent=1 // pred_check
      _
    $region23: #{decoder_layer_forward.1} parent=1 // pred_check_branch
      %49 = sbr.rel (0) target = $region25
    $region24: #{decoder_layer_forward.1} parent=1 // pred_region
      _
    $region25: #{decoder_layer_forward.1} parent=1 // pred_fallthru
      _
    // Predicated region
    $region26: #{decoder_layer_forward.1} parent=1 // pred_check
      _
    $region27: #{decoder_layer_forward.1} parent=1 // pred_check_branch
      %51 = sbr.rel (0) target = $region29
    $region28: #{decoder_layer_forward.1} parent=1 // pred_region
      _
    $region29: #{decoder_layer_forward.1} parent=1 // pred_fallthru
      _
    // Predicated region
    $region30: #{decoder_layer_forward.1} parent=1 // pred_check
      _
    $region31: #{decoder_layer_forward.1} parent=1 // pred_check_branch
      %53 = sbr.rel (0) target = $region33
    $region32: #{decoder_layer_forward.1} parent=1 // pred_region
      %s55 = ssub.s32 16, 16
      %56 = vsyncadd [#allocation3], %s55
      %s58 = sshll.u32 [#allocation2], 4
      %s59 = int_to_ptr.vmem [resolvable:$true] %s58
      %61 = dma.hbm_to_vmem [thread:$0]  %s7, 16, %s59, [#allocation3]
    $region33: #{decoder_layer_forward.1} parent=1 // pred_fallthru
      _
    // Predicated region
    $region34: #{decoder_layer_forward.1} parent=1 // pred_check
      _
    $region35: #{decoder_layer_forward.1} parent=1 // pred_check_branch
      %63 = sbr.rel (0) target = $region37
    $region36: #{decoder_layer_forward.1} parent=1 // pred_region
      _
    $region37: #{decoder_layer_forward.1} parent=1 // pred_fallthru
      _
    // Predicated region
    $region38: #{decoder_layer_forward.1} parent=1 // pred_check
      _
    $region39: #{decoder_layer_forward.1} parent=1 // pred_check_branch
      %65 = sbr.rel (0) target = $region41
    $region40: #{decoder_layer_forward.1} parent=1 // pred_region
      %s67 = ssub.s32 16, 16
      %68 = vsyncadd [#allocation6], %s67
      %s70 = sshll.u32 [#allocation5], 4
      %s71 = int_to_ptr.vmem [resolvable:$true] %s70
      %73 = dma.hbm_to_vmem [thread:$0]  %s9, 16, %s71, [#allocation6]
    $region41: #{decoder_layer_forward.1} parent=1 // pred_fallthru
      _
    // Predicated region
    $region42: #{decoder_layer_forward.1} parent=1 // pred_check
      _
    $region43: #{decoder_layer_forward.1} parent=1 // pred_check_branch
      %75 = sbr.rel (0) target = $region45
    $region44: #{decoder_layer_forward.1} parent=1 // pred_region
      _
    $region45: #{decoder_layer_forward.1} parent=1 // pred_fallthru
      _
    // Predicated region
    $region46: #{decoder_layer_forward.1} parent=1 // pred_check
      _
    $region47: #{decoder_layer_forward.1} parent=1 // pred_check_branch
      %77 = sbr.rel (0) target = $region49
    $region48: #{decoder_layer_forward.1} parent=1 // pred_region
      %s79 = ssub.s32 16, 16
      %80 = vsyncadd [#allocation6], %s79
      %s82 = sshll.u32 [#allocation7], 4
      %s83 = int_to_ptr.vmem [resolvable:$true] %s82
      %85 = dma.hbm_to_vmem [thread:$0]  %s11, 16, %s83, [#allocation6]
    $region49: #{decoder_layer_forward.1} parent=1 // pred_fallthru
      _
    // Predicated region
    $region50: #{decoder_layer_forward.1} parent=1 // pred_check
      _
    $region51: #{decoder_layer_forward.1} parent=1 // pred_check_branch
      %87 = sbr.rel (0) target = $region53
    $region52: #{decoder_layer_forward.1} parent=1 // pred_region
      _
    $region53: #{decoder_layer_forward.1} parent=1 // pred_fallthru
      _
    // Predicated region
    $region54: #{decoder_layer_forward.1} parent=1 // pred_check
      _
    $region55: #{decoder_layer_forward.1} parent=1 // pred_check_branch
      %89 = sbr.rel (0) target = $region57
    $region56: #{decoder_layer_forward.1} parent=1 // pred_region
      %s91 = ssub.s32 16, 16
      %92 = vsyncadd [#allocation9], %s91
      %s94 = sshll.u32 [#allocation8], 4
      %s95 = int_to_ptr.vmem [resolvable:$true] %s94
      %97 = dma.hbm_to_vmem [thread:$0]  %s13, 16, %s95, [#allocation9]
    $region57: #{decoder_layer_forward.1} parent=1 // pred_fallthru
      _
    // Predicated region
    $region58: #{decoder_layer_forward.1} parent=1 // pred_check
      _
    $region59: #{decoder_layer_forward.1} parent=1 // pred_check_branch
      %99 = sbr.rel (0) target = $region61
    $region60: #{decoder_layer_forward.1} parent=1 // pred_region
      _
    $region61: #{decoder_layer_forward.1} parent=1 // pred_fallthru
      _
    // Predicated region
    $region62: #{decoder_layer_forward.1} parent=1 // pred_check
      _
    $region63: #{decoder_layer_forward.1} parent=1 // pred_check_branch
      %101 = sbr.rel (0) target = $region65
    $region64: #{decoder_layer_forward.1} parent=1 // pred_region
      %s103 = ssub.s32 16, 16
      %104 = vsyncadd [#allocation9], %s103
      %s106 = sshll.u32 [#allocation10], 4
      %s107 = int_to_ptr.vmem [resolvable:$true] %s106
      %109 = dma.hbm_to_vmem [thread:$0]  %s15, 16, %s107, [#allocation9]
    $region65: #{decoder_layer_forward.1} parent=1 // pred_fallthru
      _
    // Predicated region
    $region66: #{decoder_layer_forward.1} parent=1 // pred_check
      _
    $region67: #{decoder_layer_forward.1} parent=1 // pred_check_branch
      %111 = sbr.rel (0) target = $region69
    $region68: #{decoder_layer_forward.1} parent=1 // pred_region
      _
    $region69: #{decoder_layer_forward.1} parent=1 // pred_fallthru
      _
    // Predicated region
    $region70: #{decoder_layer_forward.1} parent=1 // pred_check
      _
    $region71: #{decoder_layer_forward.1} parent=1 // pred_check_branch
      %113 = sbr.rel (0) target = $region73
    $region72: #{decoder_layer_forward.1} parent=1 // pred_region
      %s115 = ssub.s32 16, 16
      %116 = vsyncadd [#allocation12], %s115
      %s118 = sshll.u32 [#allocation11], 4
      %s119 = int_to_ptr.vmem [resolvable:$true] %s118
      %121 = dma.hbm_to_vmem [thread:$0]  %s17, 16, %s119, [#allocation12]
    $region73: #{decoder_layer_forward.1} parent=1 // pred_fallthru
      _
    // Predicated region
    $region74: #{decoder_layer_forward.1} parent=1 // pred_check
      _
    $region75: #{decoder_layer_forward.1} parent=1 // pred_check_branch
      %123 = sbr.rel (0) target = $region77
    $region76: #{decoder_layer_forward.1} parent=1 // pred_region
      _
    $region77: #{decoder_layer_forward.1} parent=1 // pred_fallthru
      _
    // Predicated region
    $region78: #{decoder_layer_forward.1} parent=1 // pred_check
      _
    $region79: #{decoder_layer_forward.1} parent=1 // pred_check_branch
      %125 = sbr.rel (0) target = $region81
    $region80: #{decoder_layer_forward.1} parent=1 // pred_region
      %s127 = ssub.s32 16, 16
      %128 = vsyncadd [#allocation12], %s127
      %s130 = sshll.u32 [#allocation13], 4
      %s131 = int_to_ptr.vmem [resolvable:$true] %s130
      %133 = dma.hbm_to_vmem [thread:$0]  %s19, 16, %s131, [#allocation12]
    $region81: #{decoder_layer_forward.1} parent=1 // pred_fallthru
      _
    // Predicated region
    $region82: #{decoder_layer_forward.1} parent=1 // pred_check
      _
    $region83: #{decoder_layer_forward.1} parent=1 // pred_check_branch
      %135 = sbr.rel (0) target = $region85
    $region84: #{decoder_layer_forward.1} parent=1 // pred_region
      _
    $region85: #{decoder_layer_forward.1} parent=1 // pred_fallthru
      _
    // Predicated region
    $region86: #{decoder_layer_forward.1} parent=1 // pred_check
      _
    $region87: #{decoder_layer_forward.1} parent=1 // pred_check_branch
      %137 = sbr.rel (0) target = $region89
    $region88: #{decoder_layer_forward.1} parent=1 // pred_region
      %s139 = ssub.s32 16, 16
      %140 = vsyncadd [#allocation15], %s139
      %s142 = sshll.u32 [#allocation14], 4
      %s143 = int_to_ptr.vmem [resolvable:$true] %s142
      %145 = dma.hbm_to_vmem [thread:$0]  %s21, 16, %s143, [#allocation15]
    $region89: #{decoder_layer_forward.1} parent=1 // pred_fallthru
      _
    // Predicated region
    $region90: #{decoder_layer_forward.1} parent=1 // pred_check
      _
    $region91: #{decoder_layer_forward.1} parent=1 // pred_check_branch
      %147 = sbr.rel (0) target = $region93
    $region92: #{decoder_layer_forward.1} parent=1 // pred_region
      _
    $region93: #{decoder_layer_forward.1} parent=1 // pred_fallthru
      _
    // Predicated region
    $region94: #{decoder_layer_forward.1} parent=1 // pred_check
      _
    $region95: #{decoder_layer_forward.1} parent=1 // pred_check_branch
      %149 = sbr.rel (0) target = $region97
    $region96: #{decoder_layer_forward.1} parent=1 // pred_region
      %s151 = ssub.s32 16, 16
      %152 = vsyncadd [#allocation15], %s151
      %s154 = sshll.u32 [#allocation16], 4
      %s155 = int_to_ptr.vmem [resolvable:$true] %s154
      %157 = dma.hbm_to_vmem [thread:$0]  %s23, 16, %s155, [#allocation15]
    $region97: #{decoder_layer_forward.1} parent=1 // pred_fallthru
      _
    // Predicated region
    $region98: #{decoder_layer_forward.1} parent=1 // pred_check
      _
    $region99: #{decoder_layer_forward.1} parent=1 // pred_check_branch
      %159 = sbr.rel (0) target = $region101
    $region100: #{decoder_layer_forward.1} parent=1 // pred_region
      %160 = dma.done [#allocation3], 16
    $region101: #{decoder_layer_forward.1} parent=1 // pred_fallthru
      _
    // Predicated region
    $region102: #{decoder_layer_forward.1} parent=1 // pred_check
      _
    $region103: #{decoder_layer_forward.1} parent=1 // pred_check_branch
      %162 = sbr.rel (0) target = $region105
    $region104: #{decoder_layer_forward.1} parent=1 // pred_region
      %163 = dma.done [#allocation6], 16
    $region105: #{decoder_layer_forward.1} parent=1 // pred_fallthru
      _
    // Predicated region
    $region106: #{decoder_layer_forward.1} parent=1 // pred_check
      _
    $region107: #{decoder_layer_forward.1} parent=1 // pred_check_branch
      %165 = sbr.rel (0) target = $region109
    $region108: #{decoder_layer_forward.1} parent=1 // pred_region
      %166 = dma.done [#allocation6], 16
    $region109: #{decoder_layer_forward.1} parent=1 // pred_fallthru
      _
    // Predicated region
    $region110: #{decoder_layer_forward.1} parent=1 // pred_check
      _
    $region111: #{decoder_layer_forward.1} parent=1 // pred_check_branch
      %168 = sbr.rel (0) target = $region113
    $region112: #{decoder_layer_forward.1} parent=1 // pred_region
      %169 = dma.done [#allocation9], 16
    $region113: #{decoder_layer_forward.1} parent=1 // pred_fallthru
      _
    // Predicated region
    $region114: #{decoder_layer_forward.1} parent=1 // pred_check
      _
    $region115: #{decoder_layer_forward.1} parent=1 // pred_check_branch
      %171 = sbr.rel (0) target = $region117
    $region116: #{decoder_layer_forward.1} parent=1 // pred_region
      %172 = dma.done [#allocation9], 16
    $region117: #{decoder_layer_forward.1} parent=1 // pred_fallthru
      _
    // Predicated region
    $region118: #{decoder_layer_forward.1} parent=1 // pred_check
      _
    $region119: #{decoder_layer_forward.1} parent=1 // pred_check_branch
      %174 = sbr.rel (0) target = $region121
    $region120: #{decoder_layer_forward.1} parent=1 // pred_region
      %175 = dma.done [#allocation12], 16
    $region121: #{decoder_layer_forward.1} parent=1 // pred_fallthru
      _
    // Predicated region
    $region122: #{decoder_layer_forward.1} parent=1 // pred_check
      _
    $region123: #{decoder_layer_forward.1} parent=1 // pred_check_branch
      %177 = sbr.rel (0) target = $region125
    $region124: #{decoder_layer_forward.1} parent=1 // pred_region
      %178 = dma.done [#allocation12], 16
    $region125: #{decoder_layer_forward.1} parent=1 // pred_fallthru
      _
    // Predicated region
    $region126: #{decoder_layer_forward.1} parent=1 // pred_check
      _
    $region127: #{decoder_layer_forward.1} parent=1 // pred_check_branch
      %180 = sbr.rel (0) target = $region129
    $region128: #{decoder_layer_forward.1} parent=1 // pred_region
      %181 = dma.done [#allocation15], 16
    $region129: #{decoder_layer_forward.1} parent=1 // pred_fallthru
      _
    // Predicated region
    $region130: #{decoder_layer_forward.1} parent=1 // pred_check
      _
    $region131: #{decoder_layer_forward.1} parent=1 // pred_check_branch
      %183 = sbr.rel (0) target = $region133
    $region132: #{decoder_layer_forward.1} parent=1 // pred_region
      %184 = dma.done [#allocation15], 16
    $region133: #{decoder_layer_forward.1} parent=1 // pred_fallthru
      _
    %v185 = vld [vmem:[%s0] sm:$0xff]
    %v186 = vld [vmem:[%s0 + $0x8] sm:$0xff]
    %v187 = vld [vmem:[%s1] sm:$0xff]
    %v188 = vld [vmem:[%s1 + $0x8] sm:$0xff]
    %v189 = vld [vmem:[%s1 + $0x10] sm:$0xf]
    %v190 = vld [vmem:[%s4] sm:$0xff]
    %v191 = vld [vmem:[%s4 + $0x8] sm:$0xff]
    %v192 = vld [vmem:[%s4 + $0x10] sm:$0xff]
    %v193 = vld [vmem:[%s4 + $0x18] sm:$0xff]
    %v194 = vld [vmem:[%s5] sm:$0x1]
    %v196 = vlaneseq
    %v197 = vshrl.u32 %v196, 7
    %v198 = vsub.s32 0, %v197
    %v199 = vrot.slane %v194, %v198
    %vm201 = vcmask 261120
    %v203 = vsel %vm201, %v185, 0
    %v206 = vsel %vm201, %v186, 0
    %208 = vmatprep.subr.mxu0 0.0
    %209 = vmatpush1.msra.mxu0 %v190
    %210 = vmatprep.subr.mxu0 0.0
    %211 = vmatpush1.msra.mxu0 %v191
    %212 = vmatprep.subr.mxu0 0.0
    %213 = vmatpush1.msra.mxu0 %v192
    %214 = vmatprep.subr.mxu0 0.0
    %215 = vmatpush1.msra.mxu0 %v193
    %216 = vmatprep.subr.mxu0 0.0
    %217 = vmatpush1.msra.mxu0 0.0
    %218 = vmatprep.subr.mxu0 0.0
    %219 = vmatpush1.msra.mxu0 0.0
    %220 = vmatprep.subr.mxu0 0.0
    %221 = vmatpush1.msra.mxu0 0.0
    %222 = vmatprep.subr.mxu0 0.0
    %223 = vmatpush1.msra.mxu0 0.0
    %224 = vmatprep.subr.mxu0 0.0
    %225 = vmatpush1.msra.mxu0 0.0
    %226 = vmatprep.subr.mxu0 0.0
    %227 = vmatpush1.msra.mxu0 0.0
    %228 = vmatprep.subr.mxu0 0.0
    %229 = vmatpush1.msra.mxu0 0.0
    %230 = vmatprep.subr.mxu0 0.0
    %231 = vmatpush1.msra.mxu0 0.0
    %232 = vmatprep.subr.mxu0 0.0
    %233 = vmatpush1.msra.mxu0 0.0
    %234 = vmatprep.subr.mxu0 0.0
    %235 = vmatpush1.msra.mxu0 0.0
    %236 = vmatprep.subr.mxu0 0.0
    %237 = vmatpush1.msra.mxu0 0.0
    %238 = vmatprep.subr.mxu0 0.0
    %239 = vmatpush1.msra.mxu0 0.0
    %240 = vmatprep.subr.mxu0 0.0
    %241 = vmatpush1.msra.mxu0 0.0
    %242 = vmatprep.subr.mxu0 0.0
    %243 = vmatpush1.msra.mxu0 0.0
    %244 = vmatprep.subr.mxu0 0.0
    %245 = vmatpush1.msra.mxu0 0.0
    %246 = vmatprep.subr.mxu0 0.0
    %247 = vmatpush1.msra.mxu0 0.0
    %248 = vmatprep.subr.mxu0 0.0
    %249 = vmatpush1.msra.mxu0 0.0
    %250 = vmatprep.subr.mxu0 0.0
    %251 = vmatpush1.msra.mxu0 0.0
    %252 = vmatprep.subr.mxu0 0.0
    %253 = vmatpush1.msra.mxu0 0.0
    %254 = vmatprep.subr.mxu0 0.0
    %255 = vmatpush1.msra.mxu0 0.0
    %256 = vmatprep.subr.mxu0 0.0
    %257 = vmatpush1.msra.mxu0 0.0
    %258 = vmatprep.subr.mxu0 0.0
    %259 = vmatpush1.msra.mxu0 0.0
    %260 = vmatprep.subr.mxu0 0.0
    %261 = vmatpush1.msra.mxu0 0.0
    %262 = vmatprep.subr.mxu0 0.0
    %263 = vmatpush1.msra.mxu0 0.0
    %264 = vmatprep.subr.mxu0 0.0
    %265 = vmatpush1.msra.mxu0 0.0
    %266 = vmatprep.subr.mxu0 0.0
    %267 = vmatpush1.msra.mxu0 0.0
    %268 = vmatprep.subr.mxu0 0.0
    %269 = vmatpush1.msra.mxu0 0.0
    %270 = vmatprep.subr.mxu0 0.0
    %271 = vmatpush1.msra.mxu0 0.0
    %272 = vmatprep.mubr.f32.mxu0 0.0
    %273 = vmatmul.mubr.f32.gmra.mrb[0].mxu0 %v203
    %v274 = vpop.f32.mrb[0].mxu0
    %v275 = vadd.f32 %v199, %v274
    %v276 = vpop.f32.mrb[0].mxu0
    %277 = vmatprep.mubr.f32.mxu0 0.0
    %278 = vmatmul.mubr.f32.gmra.mrb[0].mxu0 %v206
    %v279 = vpop.f32.mrb[0].mxu0
    %v280 = vadd.f32 %v199, %v279
    %v281 = vpop.f32.mrb[0].mxu0
    %282 = vdwg.mxu0
    %v283 = vld [vmem:[%s2] sm:$0xff]
    %v284 = vld [vmem:[%s2 + $0x8] sm:$0xff]
    %vm285 = vcmp.gt.f32.partialorder %v283, 0.0
    %vm286 = vcmp.gt.f32.partialorder %v284, 0.0
    %v287 = vsel %vm285, 0.0, -1e+10
    %v288 = vsel %vm286, 0.0, -1e+10
    %290 = vrot.lane.b32.xlu0 %v275, 96
    %v291 = vpop.permute.xlu0 %290
    %vm292 = vcmask 64512
    %v293 = vsel %vm292, %v275, 0
    %v295 = vsel %vm292, %v291, 0
    %297 = vmatprep.subr.mxu0 0.0
    %298 = vmatpush1.xpose.msra.mxu0 %v295
    %299 = vmatprep.subr.mxu0 0.0
    %300 = vmatpush1.xpose.msra.mxu0 0.0
    %301 = vmatprep.subr.mxu0 0.0
    %302 = vmatpush1.xpose.msra.mxu0 0.0
    %303 = vmatprep.subr.mxu0 0.0
    %304 = vmatpush1.xpose.msra.mxu0 0.0
    %305 = vmatprep.subr.mxu0 0.0
    %306 = vmatpush1.xpose.msra.mxu0 0.0
    %307 = vmatprep.subr.mxu0 0.0
    %308 = vmatpush1.xpose.msra.mxu0 0.0
    %309 = vmatprep.subr.mxu0 0.0
    %310 = vmatpush1.xpose.msra.mxu0 0.0
    %311 = vmatprep.subr.mxu0 0.0
    %312 = vmatpush1.xpose.msra.mxu0 0.0
    %313 = vmatprep.subr.mxu0 0.0
    %314 = vmatpush1.xpose.msra.mxu0 0.0
    %315 = vmatprep.subr.mxu0 0.0
    %316 = vmatpush1.xpose.msra.mxu0 0.0
    %317 = vmatprep.subr.mxu0 0.0
    %318 = vmatpush1.xpose.msra.mxu0 0.0
    %319 = vmatprep.subr.mxu0 0.0
    %320 = vmatpush1.xpose.msra.mxu0 0.0
    %321 = vmatprep.subr.mxu0 0.0
    %322 = vmatpush1.xpose.msra.mxu0 0.0
    %323 = vmatprep.subr.mxu0 0.0
    %324 = vmatpush1.xpose.msra.mxu0 0.0
    %325 = vmatprep.subr.mxu0 0.0
    %326 = vmatpush1.xpose.msra.mxu0 0.0
    %327 = vmatprep.subr.mxu0 0.0
    %328 = vmatpush1.xpose.msra.mxu0 0.0
    %329 = vmatprep.subr.mxu0 0.0
    %330 = vmatpush1.xpose.msra.mxu0 0.0
    %331 = vmatprep.subr.mxu0 0.0
    %332 = vmatpush1.xpose.msra.mxu0 0.0
    %333 = vmatprep.subr.mxu0 0.0
    %334 = vmatpush1.xpose.msra.mxu0 0.0
    %335 = vmatprep.subr.mxu0 0.0
    %336 = vmatpush1.xpose.msra.mxu0 0.0
    %337 = vmatprep.subr.mxu0 0.0
    %338 = vmatpush1.xpose.msra.mxu0 0.0
    %339 = vmatprep.subr.mxu0 0.0
    %340 = vmatpush1.xpose.msra.mxu0 0.0
    %341 = vmatprep.subr.mxu0 0.0
    %342 = vmatpush1.xpose.msra.mxu0 0.0
    %343 = vmatprep.subr.mxu0 0.0
    %344 = vmatpush1.xpose.msra.mxu0 0.0
    %345 = vmatprep.subr.mxu0 0.0
    %346 = vmatpush1.xpose.msra.mxu0 0.0
    %347 = vmatprep.subr.mxu0 0.0
    %348 = vmatpush1.xpose.msra.mxu0 0.0
    %349 = vmatprep.subr.mxu0 0.0
    %350 = vmatpush1.xpose.msra.mxu0 0.0
    %351 = vmatprep.subr.mxu0 0.0
    %352 = vmatpush1.xpose.msra.mxu0 0.0
    %353 = vmatprep.subr.mxu0 0.0
    %354 = vmatpush1.xpose.msra.mxu0 0.0
    %355 = vmatprep.subr.mxu0 0.0
    %356 = vmatpush1.xpose.msra.mxu0 0.0
    %357 = vmatprep.subr.mxu0 0.0
    %358 = vmatpush1.xpose.msra.mxu0 0.0
    %359 = vmatprep.subr.mxu0 0.0
    %360 = vmatpush1.xpose.msra.mxu0 0.0
    %361 = vmatprep.mubr.f32.mxu0 0.0
    %362 = vmatmul.mubr.f32.gmra.mrb[0].mxu0 %v293
    %v363 = vpop.f32.mrb[0].mxu0
    %v364 = vadd.f32 0.0, %v363
    %v365 = vpop.f32.mrb[0].mxu0
    %366 = vdwg.mxu0
    %v367 = vmul.f32 %v364, 0.35355338
    %v368 = vadd.f32 %v367, %v287
    %v369 = vsel %vm292, %v368, -inf
    %370 = vmax.xlane.f32.xlu0 %v369
    %v371 = vpop.xlane.xlu0 %370
    %v372 = vsub.f32 %v368, %v371
    %v373 = vmul.f32 %v372, 1.442695
    %v374 = vpow.pop %v373
    %v375 = vsel %vm292, %v374, 0.0
    %376 = vadd.xlane.f32.xlu0 %v375
    %v377 = vpop.xlane.xlu0 %376
    %v378 = vrcp.pop %v377
    %v379 = vmul.f32 %v374, %v378
    %380 = vrot.lane.b32.xlu0 %v275, 64
    %v381 = vpop.permute.xlu0 %380
    %v384 = vsel %vm292, %v379, 0
    %386 = vmatprep.subr.mxu0 0.0
    %387 = vmatpush1.msra.mxu0 %v381
    %388 = vmatprep.subr.mxu0 0.0
    %389 = vmatpush1.msra.mxu0 0.0
    %390 = vmatprep.subr.mxu0 0.0
    %391 = vmatpush1.msra.mxu0 0.0
    %392 = vmatprep.subr.mxu0 0.0
    %393 = vmatpush1.msra.mxu0 0.0
    %394 = vmatprep.subr.mxu0 0.0
    %395 = vmatpush1.msra.mxu0 0.0
    %396 = vmatprep.subr.mxu0 0.0
    %397 = vmatpush1.msra.mxu0 0.0
    %398 = vmatprep.subr.mxu0 0.0
    %399 = vmatpush1.msra.mxu0 0.0
    %400 = vmatprep.subr.mxu0 0.0
    %401 = vmatpush1.msra.mxu0 0.0
    %402 = vmatprep.subr.mxu0 0.0
    %403 = vmatpush1.msra.mxu0 0.0
    %404 = vmatprep.subr.mxu0 0.0
    %405 = vmatpush1.msra.mxu0 0.0
    %406 = vmatprep.subr.mxu0 0.0
    %407 = vmatpush1.msra.mxu0 0.0
    %408 = vmatprep.subr.mxu0 0.0
    %409 = vmatpush1.msra.mxu0 0.0
    %410 = vmatprep.subr.mxu0 0.0
    %411 = vmatpush1.msra.mxu0 0.0
    %412 = vmatprep.subr.mxu0 0.0
    %413 = vmatpush1.msra.mxu0 0.0
    %414 = vmatprep.subr.mxu0 0.0
    %415 = vmatpush1.msra.mxu0 0.0
    %416 = vmatprep.subr.mxu0 0.0
    %417 = vmatpush1.msra.mxu0 0.0
    %418 = vmatprep.subr.mxu0 0.0
    %419 = vmatpush1.msra.mxu0 0.0
    %420 = vmatprep.subr.mxu0 0.0
    %421 = vmatpush1.msra.mxu0 0.0
    %422 = vmatprep.subr.mxu0 0.0
    %423 = vmatpush1.msra.mxu0 0.0
    %424 = vmatprep.subr.mxu0 0.0
    %425 = vmatpush1.msra.mxu0 0.0
    %426 = vmatprep.subr.mxu0 0.0
    %427 = vmatpush1.msra.mxu0 0.0
    %428 = vmatprep.subr.mxu0 0.0
    %429 = vmatpush1.msra.mxu0 0.0
    %430 = vmatprep.subr.mxu0 0.0
    %431 = vmatpush1.msra.mxu0 0.0
    %432 = vmatprep.subr.mxu0 0.0
    %433 = vmatpush1.msra.mxu0 0.0
    %434 = vmatprep.subr.mxu0 0.0
    %435 = vmatpush1.msra.mxu0 0.0
    %436 = vmatprep.subr.mxu0 0.0
    %437 = vmatpush1.msra.mxu0 0.0
    %438 = vmatprep.subr.mxu0 0.0
    %439 = vmatpush1.msra.mxu0 0.0
    %440 = vmatprep.subr.mxu0 0.0
    %441 = vmatpush1.msra.mxu0 0.0
    %442 = vmatprep.subr.mxu0 0.0
    %443 = vmatpush1.msra.mxu0 0.0
    %444 = vmatprep.subr.mxu0 0.0
    %445 = vmatpush1.msra.mxu0 0.0
    %446 = vmatprep.subr.mxu0 0.0
    %447 = vmatpush1.msra.mxu0 0.0
    %448 = vmatprep.subr.mxu0 0.0
    %449 = vmatpush1.msra.mxu0 0.0
    %450 = vmatprep.mubr.f32.mxu0 0.0
    %451 = vmatmul.mubr.f32.gmra.mrb[0].mxu0 %v384
    %v452 = vpop.f32.mrb[0].mxu0
    %v453 = vadd.f32 0.0, %v452
    %v454 = vpop.f32.mrb[0].mxu0
    %455 = vdwg.mxu0
    %456 = vrot.lane.b32.xlu0 %v275, 120
    %v457 = vpop.permute.xlu0 %456
    %458 = vrot.lane.b32.xlu0 %v275, 88
    %v459 = vpop.permute.xlu0 %458
    %v460 = vsel %vm292, %v457, 0
    %v462 = vsel %vm292, %v459, 0
    %464 = vmatprep.subr.mxu0 0.0
    %465 = vmatpush1.xpose.msra.mxu0 %v462
    %466 = vmatprep.subr.mxu0 0.0
    %467 = vmatpush1.xpose.msra.mxu0 0.0
    %468 = vmatprep.subr.mxu0 0.0
    %469 = vmatpush1.xpose.msra.mxu0 0.0
    %470 = vmatprep.subr.mxu0 0.0
    %471 = vmatpush1.xpose.msra.mxu0 0.0
    %472 = vmatprep.subr.mxu0 0.0
    %473 = vmatpush1.xpose.msra.mxu0 0.0
    %474 = vmatprep.subr.mxu0 0.0
    %475 = vmatpush1.xpose.msra.mxu0 0.0
    %476 = vmatprep.subr.mxu0 0.0
    %477 = vmatpush1.xpose.msra.mxu0 0.0
    %478 = vmatprep.subr.mxu0 0.0
    %479 = vmatpush1.xpose.msra.mxu0 0.0
    %480 = vmatprep.subr.mxu0 0.0
    %481 = vmatpush1.xpose.msra.mxu0 0.0
    %482 = vmatprep.subr.mxu0 0.0
    %483 = vmatpush1.xpose.msra.mxu0 0.0
    %484 = vmatprep.subr.mxu0 0.0
    %485 = vmatpush1.xpose.msra.mxu0 0.0
    %486 = vmatprep.subr.mxu0 0.0
    %487 = vmatpush1.xpose.msra.mxu0 0.0
    %488 = vmatprep.subr.mxu0 0.0
    %489 = vmatpush1.xpose.msra.mxu0 0.0
    %490 = vmatprep.subr.mxu0 0.0
    %491 = vmatpush1.xpose.msra.mxu0 0.0
    %492 = vmatprep.subr.mxu0 0.0
    %493 = vmatpush1.xpose.msra.mxu0 0.0
    %494 = vmatprep.subr.mxu0 0.0
    %495 = vmatpush1.xpose.msra.mxu0 0.0
    %496 = vmatprep.subr.mxu0 0.0
    %497 = vmatpush1.xpose.msra.mxu0 0.0
    %498 = vmatprep.subr.mxu0 0.0
    %499 = vmatpush1.xpose.msra.mxu0 0.0
    %500 = vmatprep.subr.mxu0 0.0
    %501 = vmatpush1.xpose.msra.mxu0 0.0
    %502 = vmatprep.subr.mxu0 0.0
    %503 = vmatpush1.xpose.msra.mxu0 0.0
    %504 = vmatprep.subr.mxu0 0.0
    %505 = vmatpush1.xpose.msra.mxu0 0.0
    %506 = vmatprep.subr.mxu0 0.0
    %507 = vmatpush1.xpose.msra.mxu0 0.0
    %508 = vmatprep.subr.mxu0 0.0
    %509 = vmatpush1.xpose.msra.mxu0 0.0
    %510 = vmatprep.subr.mxu0 0.0
    %511 = vmatpush1.xpose.msra.mxu0 0.0
    %512 = vmatprep.subr.mxu0 0.0
    %513 = vmatpush1.xpose.msra.mxu0 0.0
    %514 = vmatprep.subr.mxu0 0.0
    %515 = vmatpush1.xpose.msra.mxu0 0.0
    %516 = vmatprep.subr.mxu0 0.0
    %517 = vmatpush1.xpose.msra.mxu0 0.0
    %518 = vmatprep.subr.mxu0 0.0
    %519 = vmatpush1.xpose.msra.mxu0 0.0
    %520 = vmatprep.subr.mxu0 0.0
    %521 = vmatpush1.xpose.msra.mxu0 0.0
    %522 = vmatprep.subr.mxu0 0.0
    %523 = vmatpush1.xpose.msra.mxu0 0.0
    %524 = vmatprep.subr.mxu0 0.0
    %525 = vmatpush1.xpose.msra.mxu0 0.0
    %526 = vmatprep.subr.mxu0 0.0
    %527 = vmatpush1.xpose.msra.mxu0 0.0
    %528 = vmatprep.mubr.f32.mxu0 0.0
    %529 = vmatmul.mubr.f32.gmra.mrb[0].mxu0 %v460
    %v530 = vpop.f32.mrb[0].mxu0
    %v531 = vadd.f32 0.0, %v530
    %v532 = vpop.f32.mrb[0].mxu0
    %533 = vdwg.mxu0
    %v534 = vmul.f32 %v531, 0.35355338
    %v535 = vadd.f32 %v534, %v287
    %v536 = vsel %vm292, %v535, -inf
    %537 = vmax.xlane.f32.xlu0 %v536
    %v538 = vpop.xlane.xlu0 %537
    %v539 = vsub.f32 %v535, %v538
    %v540 = vmul.f32 %v539, 1.442695
    %v541 = vpow.pop %v540
    %v542 = vsel %vm292, %v541, 0.0
    %543 = vadd.xlane.f32.xlu0 %v542
    %v544 = vpop.xlane.xlu0 %543
    %v545 = vrcp.pop %v544
    %v546 = vmul.f32 %v541, %v545
    %547 = vrot.lane.b32.xlu0 %v275, 56
    %v548 = vpop.permute.xlu0 %547
    %v551 = vsel %vm292, %v546, 0
    %553 = vmatprep.subr.mxu0 0.0
    %554 = vmatpush1.msra.mxu0 %v548
    %555 = vmatprep.subr.mxu0 0.0
    %556 = vmatpush1.msra.mxu0 0.0
    %557 = vmatprep.subr.mxu0 0.0
    %558 = vmatpush1.msra.mxu0 0.0
    %559 = vmatprep.subr.mxu0 0.0
    %560 = vmatpush1.msra.mxu0 0.0
    %561 = vmatprep.subr.mxu0 0.0
    %562 = vmatpush1.msra.mxu0 0.0
    %563 = vmatprep.subr.mxu0 0.0
    %564 = vmatpush1.msra.mxu0 0.0
    %565 = vmatprep.subr.mxu0 0.0
    %566 = vmatpush1.msra.mxu0 0.0
    %567 = vmatprep.subr.mxu0 0.0
    %568 = vmatpush1.msra.mxu0 0.0
    %569 = vmatprep.subr.mxu0 0.0
    %570 = vmatpush1.msra.mxu0 0.0
    %571 = vmatprep.subr.mxu0 0.0
    %572 = vmatpush1.msra.mxu0 0.0
    %573 = vmatprep.subr.mxu0 0.0
    %574 = vmatpush1.msra.mxu0 0.0
    %575 = vmatprep.subr.mxu0 0.0
    %576 = vmatpush1.msra.mxu0 0.0
    %577 = vmatprep.subr.mxu0 0.0
    %578 = vmatpush1.msra.mxu0 0.0
    %579 = vmatprep.subr.mxu0 0.0
    %580 = vmatpush1.msra.mxu0 0.0
    %581 = vmatprep.subr.mxu0 0.0
    %582 = vmatpush1.msra.mxu0 0.0
    %583 = vmatprep.subr.mxu0 0.0
    %584 = vmatpush1.msra.mxu0 0.0
    %585 = vmatprep.subr.mxu0 0.0
    %586 = vmatpush1.msra.mxu0 0.0
    %587 = vmatprep.subr.mxu0 0.0
    %588 = vmatpush1.msra.mxu0 0.0
    %589 = vmatprep.subr.mxu0 0.0
    %590 = vmatpush1.msra.mxu0 0.0
    %591 = vmatprep.subr.mxu0 0.0
    %592 = vmatpush1.msra.mxu0 0.0
    %593 = vmatprep.subr.mxu0 0.0
    %594 = vmatpush1.msra.mxu0 0.0
    %595 = vmatprep.subr.mxu0 0.0
    %596 = vmatpush1.msra.mxu0 0.0
    %597 = vmatprep.subr.mxu0 0.0
    %598 = vmatpush1.msra.mxu0 0.0
    %599 = vmatprep.subr.mxu0 0.0
    %600 = vmatpush1.msra.mxu0 0.0
    %601 = vmatprep.subr.mxu0 0.0
    %602 = vmatpush1.msra.mxu0 0.0
    %603 = vmatprep.subr.mxu0 0.0
    %604 = vmatpush1.msra.mxu0 0.0
    %605 = vmatprep.subr.mxu0 0.0
    %606 = vmatpush1.msra.mxu0 0.0
    %607 = vmatprep.subr.mxu0 0.0
    %608 = vmatpush1.msra.mxu0 0.0
    %609 = vmatprep.subr.mxu0 0.0
    %610 = vmatpush1.msra.mxu0 0.0
    %611 = vmatprep.subr.mxu0 0.0
    %612 = vmatpush1.msra.mxu0 0.0
    %613 = vmatprep.subr.mxu0 0.0
    %614 = vmatpush1.msra.mxu0 0.0
    %615 = vmatprep.subr.mxu0 0.0
    %616 = vmatpush1.msra.mxu0 0.0
    %617 = vmatprep.mubr.f32.mxu0 0.0
    %618 = vmatmul.mubr.f32.gmra.mrb[0].mxu0 %v551
    %v619 = vpop.f32.mrb[0].mxu0
    %v620 = vadd.f32 0.0, %v619
    %v621 = vpop.f32.mrb[0].mxu0
    %622 = vdwg.mxu0
    %623 = vrot.lane.b32.xlu0 %v275, 112
    %v624 = vpop.permute.xlu0 %623
    %625 = vrot.lane.b32.xlu0 %v275, 80
    %v626 = vpop.permute.xlu0 %625
    %v627 = vsel %vm292, %v624, 0
    %v629 = vsel %vm292, %v626, 0
    %631 = vmatprep.subr.mxu0 0.0
    %632 = vmatpush1.xpose.msra.mxu0 %v629
    %633 = vmatprep.subr.mxu0 0.0
    %634 = vmatpush1.xpose.msra.mxu0 0.0
    %635 = vmatprep.subr.mxu0 0.0
    %636 = vmatpush1.xpose.msra.mxu0 0.0
    %637 = vmatprep.subr.mxu0 0.0
    %638 = vmatpush1.xpose.msra.mxu0 0.0
    %639 = vmatprep.subr.mxu0 0.0
    %640 = vmatpush1.xpose.msra.mxu0 0.0
    %641 = vmatprep.subr.mxu0 0.0
    %642 = vmatpush1.xpose.msra.mxu0 0.0
    %643 = vmatprep.subr.mxu0 0.0
    %644 = vmatpush1.xpose.msra.mxu0 0.0
    %645 = vmatprep.subr.mxu0 0.0
    %646 = vmatpush1.xpose.msra.mxu0 0.0
    %647 = vmatprep.subr.mxu0 0.0
    %648 = vmatpush1.xpose.msra.mxu0 0.0
    %649 = vmatprep.subr.mxu0 0.0
    %650 = vmatpush1.xpose.msra.mxu0 0.0
    %651 = vmatprep.subr.mxu0 0.0
    %652 = vmatpush1.xpose.msra.mxu0 0.0
    %653 = vmatprep.subr.mxu0 0.0
    %654 = vmatpush1.xpose.msra.mxu0 0.0
    %655 = vmatprep.subr.mxu0 0.0
    %656 = vmatpush1.xpose.msra.mxu0 0.0
    %657 = vmatprep.subr.mxu0 0.0
    %658 = vmatpush1.xpose.msra.mxu0 0.0
    %659 = vmatprep.subr.mxu0 0.0
    %660 = vmatpush1.xpose.msra.mxu0 0.0
    %661 = vmatprep.subr.mxu0 0.0
    %662 = vmatpush1.xpose.msra.mxu0 0.0
    %663 = vmatprep.subr.mxu0 0.0
    %664 = vmatpush1.xpose.msra.mxu0 0.0
    %665 = vmatprep.subr.mxu0 0.0
    %666 = vmatpush1.xpose.msra.mxu0 0.0
    %667 = vmatprep.subr.mxu0 0.0
    %668 = vmatpush1.xpose.msra.mxu0 0.0
    %669 = vmatprep.subr.mxu0 0.0
    %670 = vmatpush1.xpose.msra.mxu0 0.0
    %671 = vmatprep.subr.mxu0 0.0
    %672 = vmatpush1.xpose.msra.mxu0 0.0
    %673 = vmatprep.subr.mxu0 0.0
    %674 = vmatpush1.xpose.msra.mxu0 0.0
    %675 = vmatprep.subr.mxu0 0.0
    %676 = vmatpush1.xpose.msra.mxu0 0.0
    %677 = vmatprep.subr.mxu0 0.0
    %678 = vmatpush1.xpose.msra.mxu0 0.0
    %679 = vmatprep.subr.mxu0 0.0
    %680 = vmatpush1.xpose.msra.mxu0 0.0
    %681 = vmatprep.subr.mxu0 0.0
    %682 = vmatpush1.xpose.msra.mxu0 0.0
    %683 = vmatprep.subr.mxu0 0.0
    %684 = vmatpush1.xpose.msra.mxu0 0.0
    %685 = vmatprep.subr.mxu0 0.0
    %686 = vmatpush1.xpose.msra.mxu0 0.0
    %687 = vmatprep.subr.mxu0 0.0
    %688 = vmatpush1.xpose.msra.mxu0 0.0
    %689 = vmatprep.subr.mxu0 0.0
    %690 = vmatpush1.xpose.msra.mxu0 0.0
    %691 = vmatprep.subr.mxu0 0.0
    %692 = vmatpush1.xpose.msra.mxu0 0.0
    %693 = vmatprep.subr.mxu0 0.0
    %694 = vmatpush1.xpose.msra.mxu0 0.0
    %695 = vmatprep.mubr.f32.mxu0 0.0
    %696 = vmatmul.mubr.f32.gmra.mrb[0].mxu0 %v627
    %v697 = vpop.f32.mrb[0].mxu0
    %v698 = vadd.f32 0.0, %v697
    %v699 = vpop.f32.mrb[0].mxu0
    %700 = vdwg.mxu0
    %v701 = vmul.f32 %v698, 0.35355338
    %v702 = vadd.f32 %v701, %v287
    %v703 = vsel %vm292, %v702, -inf
    %704 = vmax.xlane.f32.xlu0 %v703
    %v705 = vpop.xlane.xlu0 %704
    %v706 = vsub.f32 %v702, %v705
    %v707 = vmul.f32 %v706, 1.442695
    %v708 = vpow.pop %v707
    %v709 = vsel %vm292, %v708, 0.0
    %710 = vadd.xlane.f32.xlu0 %v709
    %v711 = vpop.xlane.xlu0 %710
    %v712 = vrcp.pop %v711
    %v713 = vmul.f32 %v708, %v712
    %714 = vrot.lane.b32.xlu0 %v275, 48
    %v715 = vpop.permute.xlu0 %714
    %v718 = vsel %vm292, %v713, 0
    %720 = vmatprep.subr.mxu0 0.0
    %721 = vmatpush1.msra.mxu0 %v715
    %722 = vmatprep.subr.mxu0 0.0
    %723 = vmatpush1.msra.mxu0 0.0
    %724 = vmatprep.subr.mxu0 0.0
    %725 = vmatpush1.msra.mxu0 0.0
    %726 = vmatprep.subr.mxu0 0.0
    %727 = vmatpush1.msra.mxu0 0.0
    %728 = vmatprep.subr.mxu0 0.0
    %729 = vmatpush1.msra.mxu0 0.0
    %730 = vmatprep.subr.mxu0 0.0
    %731 = vmatpush1.msra.mxu0 0.0
    %732 = vmatprep.subr.mxu0 0.0
    %733 = vmatpush1.msra.mxu0 0.0
    %734 = vmatprep.subr.mxu0 0.0
    %735 = vmatpush1.msra.mxu0 0.0
    %736 = vmatprep.subr.mxu0 0.0
    %737 = vmatpush1.msra.mxu0 0.0
    %738 = vmatprep.subr.mxu0 0.0
    %739 = vmatpush1.msra.mxu0 0.0
    %740 = vmatprep.subr.mxu0 0.0
    %741 = vmatpush1.msra.mxu0 0.0
    %742 = vmatprep.subr.mxu0 0.0
    %743 = vmatpush1.msra.mxu0 0.0
    %744 = vmatprep.subr.mxu0 0.0
    %745 = vmatpush1.msra.mxu0 0.0
    %746 = vmatprep.subr.mxu0 0.0
    %747 = vmatpush1.msra.mxu0 0.0
    %748 = vmatprep.subr.mxu0 0.0
    %749 = vmatpush1.msra.mxu0 0.0
    %750 = vmatprep.subr.mxu0 0.0
    %751 = vmatpush1.msra.mxu0 0.0
    %752 = vmatprep.subr.mxu0 0.0
    %753 = vmatpush1.msra.mxu0 0.0
    %754 = vmatprep.subr.mxu0 0.0
    %755 = vmatpush1.msra.mxu0 0.0
    %756 = vmatprep.subr.mxu0 0.0
    %757 = vmatpush1.msra.mxu0 0.0
    %758 = vmatprep.subr.mxu0 0.0
    %759 = vmatpush1.msra.mxu0 0.0
    %760 = vmatprep.subr.mxu0 0.0
    %761 = vmatpush1.msra.mxu0 0.0
    %762 = vmatprep.subr.mxu0 0.0
    %763 = vmatpush1.msra.mxu0 0.0
    %764 = vmatprep.subr.mxu0 0.0
    %765 = vmatpush1.msra.mxu0 0.0
    %766 = vmatprep.subr.mxu0 0.0
    %767 = vmatpush1.msra.mxu0 0.0
    %768 = vmatprep.subr.mxu0 0.0
    %769 = vmatpush1.msra.mxu0 0.0
    %770 = vmatprep.subr.mxu0 0.0
    %771 = vmatpush1.msra.mxu0 0.0
    %772 = vmatprep.subr.mxu0 0.0
    %773 = vmatpush1.msra.mxu0 0.0
    %774 = vmatprep.subr.mxu0 0.0
    %775 = vmatpush1.msra.mxu0 0.0
    %776 = vmatprep.subr.mxu0 0.0
    %777 = vmatpush1.msra.mxu0 0.0
    %778 = vmatprep.subr.mxu0 0.0
    %779 = vmatpush1.msra.mxu0 0.0
    %780 = vmatprep.subr.mxu0 0.0
    %781 = vmatpush1.msra.mxu0 0.0
    %782 = vmatprep.subr.mxu0 0.0
    %783 = vmatpush1.msra.mxu0 0.0
    %784 = vmatprep.mubr.f32.mxu0 0.0
    %785 = vmatmul.mubr.f32.gmra.mrb[0].mxu0 %v718
    %v786 = vpop.f32.mrb[0].mxu0
    %v787 = vadd.f32 0.0, %v786
    %v788 = vpop.f32.mrb[0].mxu0
    %789 = vdwg.mxu0
    %790 = vrot.lane.b32.xlu0 %v275, 104
    %v791 = vpop.permute.xlu0 %790
    %792 = vrot.lane.b32.xlu0 %v275, 72
    %v793 = vpop.permute.xlu0 %792
    %v794 = vsel %vm292, %v791, 0
    %v796 = vsel %vm292, %v793, 0
    %798 = vmatprep.subr.mxu0 0.0
    %799 = vmatpush1.xpose.msra.mxu0 %v796
    %800 = vmatprep.subr.mxu0 0.0
    %801 = vmatpush1.xpose.msra.mxu0 0.0
    %802 = vmatprep.subr.mxu0 0.0
    %803 = vmatpush1.xpose.msra.mxu0 0.0
    %804 = vmatprep.subr.mxu0 0.0
    %805 = vmatpush1.xpose.msra.mxu0 0.0
    %806 = vmatprep.subr.mxu0 0.0
    %807 = vmatpush1.xpose.msra.mxu0 0.0
    %808 = vmatprep.subr.mxu0 0.0
    %809 = vmatpush1.xpose.msra.mxu0 0.0
    %810 = vmatprep.subr.mxu0 0.0
    %811 = vmatpush1.xpose.msra.mxu0 0.0
    %812 = vmatprep.subr.mxu0 0.0
    %813 = vmatpush1.xpose.msra.mxu0 0.0
    %814 = vmatprep.subr.mxu0 0.0
    %815 = vmatpush1.xpose.msra.mxu0 0.0
    %816 = vmatprep.subr.mxu0 0.0
    %817 = vmatpush1.xpose.msra.mxu0 0.0
    %818 = vmatprep.subr.mxu0 0.0
    %819 = vmatpush1.xpose.msra.mxu0 0.0
    %820 = vmatprep.subr.mxu0 0.0
    %821 = vmatpush1.xpose.msra.mxu0 0.0
    %822 = vmatprep.subr.mxu0 0.0
    %823 = vmatpush1.xpose.msra.mxu0 0.0
    %824 = vmatprep.subr.mxu0 0.0
    %825 = vmatpush1.xpose.msra.mxu0 0.0
    %826 = vmatprep.subr.mxu0 0.0
    %827 = vmatpush1.xpose.msra.mxu0 0.0
    %828 = vmatprep.subr.mxu0 0.0
    %829 = vmatpush1.xpose.msra.mxu0 0.0
    %830 = vmatprep.subr.mxu0 0.0
    %831 = vmatpush1.xpose.msra.mxu0 0.0
    %832 = vmatprep.subr.mxu0 0.0
    %833 = vmatpush1.xpose.msra.mxu0 0.0
    %834 = vmatprep.subr.mxu0 0.0
    %835 = vmatpush1.xpose.msra.mxu0 0.0
    %836 = vmatprep.subr.mxu0 0.0
    %837 = vmatpush1.xpose.msra.mxu0 0.0
    %838 = vmatprep.subr.mxu0 0.0
    %839 = vmatpush1.xpose.msra.mxu0 0.0
    %840 = vmatprep.subr.mxu0 0.0
    %841 = vmatpush1.xpose.msra.mxu0 0.0
    %842 = vmatprep.subr.mxu0 0.0
    %843 = vmatpush1.xpose.msra.mxu0 0.0
    %844 = vmatprep.subr.mxu0 0.0
    %845 = vmatpush1.xpose.msra.mxu0 0.0
    %846 = vmatprep.subr.mxu0 0.0
    %847 = vmatpush1.xpose.msra.mxu0 0.0
    %848 = vmatprep.subr.mxu0 0.0
    %849 = vmatpush1.xpose.msra.mxu0 0.0
    %850 = vmatprep.subr.mxu0 0.0
    %851 = vmatpush1.xpose.msra.mxu0 0.0
    %852 = vmatprep.subr.mxu0 0.0
    %853 = vmatpush1.xpose.msra.mxu0 0.0
    %854 = vmatprep.subr.mxu0 0.0
    %855 = vmatpush1.xpose.msra.mxu0 0.0
    %856 = vmatprep.subr.mxu0 0.0
    %857 = vmatpush1.xpose.msra.mxu0 0.0
    %858 = vmatprep.subr.mxu0 0.0
    %859 = vmatpush1.xpose.msra.mxu0 0.0
    %860 = vmatprep.subr.mxu0 0.0
    %861 = vmatpush1.xpose.msra.mxu0 0.0
    %862 = vmatprep.mubr.f32.mxu0 0.0
    %863 = vmatmul.mubr.f32.gmra.mrb[0].mxu0 %v794
    %v864 = vpop.f32.mrb[0].mxu0
    %v865 = vadd.f32 0.0, %v864
    %v866 = vpop.f32.mrb[0].mxu0
    %867 = vdwg.mxu0
    %v868 = vmul.f32 %v865, 0.35355338
    %v869 = vadd.f32 %v868, %v287
    %v870 = vsel %vm292, %v869, -inf
    %871 = vmax.xlane.f32.xlu0 %v870
    %v872 = vpop.xlane.xlu0 %871
    %v873 = vsub.f32 %v869, %v872
    %v874 = vmul.f32 %v873, 1.442695
    %v875 = vpow.pop %v874
    %v876 = vsel %vm292, %v875, 0.0
    %877 = vadd.xlane.f32.xlu0 %v876
    %v878 = vpop.xlane.xlu0 %877
    %v879 = vrcp.pop %v878
    %v880 = vmul.f32 %v875, %v879
    %881 = vrot.lane.b32.xlu0 %v275, 40
    %v882 = vpop.permute.xlu0 %881
    %v885 = vsel %vm292, %v880, 0
    %887 = vmatprep.subr.mxu0 0.0
    %888 = vmatpush1.msra.mxu0 %v882
    %889 = vmatprep.subr.mxu0 0.0
    %890 = vmatpush1.msra.mxu0 0.0
    %891 = vmatprep.subr.mxu0 0.0
    %892 = vmatpush1.msra.mxu0 0.0
    %893 = vmatprep.subr.mxu0 0.0
    %894 = vmatpush1.msra.mxu0 0.0
    %895 = vmatprep.subr.mxu0 0.0
    %896 = vmatpush1.msra.mxu0 0.0
    %897 = vmatprep.subr.mxu0 0.0
    %898 = vmatpush1.msra.mxu0 0.0
    %899 = vmatprep.subr.mxu0 0.0
    %900 = vmatpush1.msra.mxu0 0.0
    %901 = vmatprep.subr.mxu0 0.0
    %902 = vmatpush1.msra.mxu0 0.0
    %903 = vmatprep.subr.mxu0 0.0
    %904 = vmatpush1.msra.mxu0 0.0
    %905 = vmatprep.subr.mxu0 0.0
    %906 = vmatpush1.msra.mxu0 0.0
    %907 = vmatprep.subr.mxu0 0.0
    %908 = vmatpush1.msra.mxu0 0.0
    %909 = vmatprep.subr.mxu0 0.0
    %910 = vmatpush1.msra.mxu0 0.0
    %911 = vmatprep.subr.mxu0 0.0
    %912 = vmatpush1.msra.mxu0 0.0
    %913 = vmatprep.subr.mxu0 0.0
    %914 = vmatpush1.msra.mxu0 0.0
    %915 = vmatprep.subr.mxu0 0.0
    %916 = vmatpush1.msra.mxu0 0.0
    %917 = vmatprep.subr.mxu0 0.0
    %918 = vmatpush1.msra.mxu0 0.0
    %919 = vmatprep.subr.mxu0 0.0
    %920 = vmatpush1.msra.mxu0 0.0
    %921 = vmatprep.subr.mxu0 0.0
    %922 = vmatpush1.msra.mxu0 0.0
    %923 = vmatprep.subr.mxu0 0.0
    %924 = vmatpush1.msra.mxu0 0.0
    %925 = vmatprep.subr.mxu0 0.0
    %926 = vmatpush1.msra.mxu0 0.0
    %927 = vmatprep.subr.mxu0 0.0
    %928 = vmatpush1.msra.mxu0 0.0
    %929 = vmatprep.subr.mxu0 0.0
    %930 = vmatpush1.msra.mxu0 0.0
    %931 = vmatprep.subr.mxu0 0.0
    %932 = vmatpush1.msra.mxu0 0.0
    %933 = vmatprep.subr.mxu0 0.0
    %934 = vmatpush1.msra.mxu0 0.0
    %935 = vmatprep.subr.mxu0 0.0
    %936 = vmatpush1.msra.mxu0 0.0
    %937 = vmatprep.subr.mxu0 0.0
    %938 = vmatpush1.msra.mxu0 0.0
    %939 = vmatprep.subr.mxu0 0.0
    %940 = vmatpush1.msra.mxu0 0.0
    %941 = vmatprep.subr.mxu0 0.0
    %942 = vmatpush1.msra.mxu0 0.0
    %943 = vmatprep.subr.mxu0 0.0
    %944 = vmatpush1.msra.mxu0 0.0
    %945 = vmatprep.subr.mxu0 0.0
    %946 = vmatpush1.msra.mxu0 0.0
    %947 = vmatprep.subr.mxu0 0.0
    %948 = vmatpush1.msra.mxu0 0.0
    %949 = vmatprep.subr.mxu0 0.0
    %950 = vmatpush1.msra.mxu0 0.0
    %951 = vmatprep.mubr.f32.mxu0 0.0
    %952 = vmatmul.mubr.f32.gmra.mrb[0].mxu0 %v885
    %v953 = vpop.f32.mrb[0].mxu0
    %v954 = vadd.f32 0.0, %v953
    %v955 = vpop.f32.mrb[0].mxu0
    %956 = vdwg.mxu0
    %958 = vrot.lane.b32.xlu0 %v620, 8
    %v959 = vpop.permute.xlu0 %958
    %962 = vrot.lane.b32.xlu0 %v787, 16
    %v963 = vpop.permute.xlu0 %962
    %966 = vrot.lane.b32.xlu0 %v954, 24
    %v967 = vpop.permute.xlu0 %966
    %v969 = vsel %vm292, %v453, %v959
    %vm970 = vcmask 130048
    %v971 = vsel %vm970, %v969, %v963
    %vm972 = vcmask 195584
    %v973 = vsel %vm972, %v971, %v967
    %975 = vrot.lane.b32.xlu0 %v280, 96
    %v976 = vpop.permute.xlu0 %975
    %v977 = vsel %vm292, %v280, 0
    %v979 = vsel %vm292, %v976, 0
    %981 = vmatprep.subr.mxu0 0.0
    %982 = vmatpush1.xpose.msra.mxu0 %v979
    %983 = vmatprep.subr.mxu0 0.0
    %984 = vmatpush1.xpose.msra.mxu0 0.0
    %985 = vmatprep.subr.mxu0 0.0
    %986 = vmatpush1.xpose.msra.mxu0 0.0
    %987 = vmatprep.subr.mxu0 0.0
    %988 = vmatpush1.xpose.msra.mxu0 0.0
    %989 = vmatprep.subr.mxu0 0.0
    %990 = vmatpush1.xpose.msra.mxu0 0.0
    %991 = vmatprep.subr.mxu0 0.0
    %992 = vmatpush1.xpose.msra.mxu0 0.0
    %993 = vmatprep.subr.mxu0 0.0
    %994 = vmatpush1.xpose.msra.mxu0 0.0
    %995 = vmatprep.subr.mxu0 0.0
    %996 = vmatpush1.xpose.msra.mxu0 0.0
    %997 = vmatprep.subr.mxu0 0.0
    %998 = vmatpush1.xpose.msra.mxu0 0.0
    %999 = vmatprep.subr.mxu0 0.0
    %1000 = vmatpush1.xpose.msra.mxu0 0.0
    %1001 = vmatprep.subr.mxu0 0.0
    %1002 = vmatpush1.xpose.msra.mxu0 0.0
    %1003 = vmatprep.subr.mxu0 0.0
    %1004 = vmatpush1.xpose.msra.mxu0 0.0
    %1005 = vmatprep.subr.mxu0 0.0
    %1006 = vmatpush1.xpose.msra.mxu0 0.0
    %1007 = vmatprep.subr.mxu0 0.0
    %1008 = vmatpush1.xpose.msra.mxu0 0.0
    %1009 = vmatprep.subr.mxu0 0.0
    %1010 = vmatpush1.xpose.msra.mxu0 0.0
    %1011 = vmatprep.subr.mxu0 0.0
    %1012 = vmatpush1.xpose.msra.mxu0 0.0
    %1013 = vmatprep.subr.mxu0 0.0
    %1014 = vmatpush1.xpose.msra.mxu0 0.0
    %1015 = vmatprep.subr.mxu0 0.0
    %1016 = vmatpush1.xpose.msra.mxu0 0.0
    %1017 = vmatprep.subr.mxu0 0.0
    %1018 = vmatpush1.xpose.msra.mxu0 0.0
    %1019 = vmatprep.subr.mxu0 0.0
    %1020 = vmatpush1.xpose.msra.mxu0 0.0
    %1021 = vmatprep.subr.mxu0 0.0
    %1022 = vmatpush1.xpose.msra.mxu0 0.0
    %1023 = vmatprep.subr.mxu0 0.0
    %1024 = vmatpush1.xpose.msra.mxu0 0.0
    %1025 = vmatprep.subr.mxu0 0.0
    %1026 = vmatpush1.xpose.msra.mxu0 0.0
    %1027 = vmatprep.subr.mxu0 0.0
    %1028 = vmatpush1.xpose.msra.mxu0 0.0
    %1029 = vmatprep.subr.mxu0 0.0
    %1030 = vmatpush1.xpose.msra.mxu0 0.0
    %1031 = vmatprep.subr.mxu0 0.0
    %1032 = vmatpush1.xpose.msra.mxu0 0.0
    %1033 = vmatprep.subr.mxu0 0.0
    %1034 = vmatpush1.xpose.msra.mxu0 0.0
    %1035 = vmatprep.subr.mxu0 0.0
    %1036 = vmatpush1.xpose.msra.mxu0 0.0
    %1037 = vmatprep.subr.mxu0 0.0
    %1038 = vmatpush1.xpose.msra.mxu0 0.0
    %1039 = vmatprep.subr.mxu0 0.0
    %1040 = vmatpush1.xpose.msra.mxu0 0.0
    %1041 = vmatprep.subr.mxu0 0.0
    %1042 = vmatpush1.xpose.msra.mxu0 0.0
    %1043 = vmatprep.subr.mxu0 0.0
    %1044 = vmatpush1.xpose.msra.mxu0 0.0
    %1045 = vmatprep.mubr.f32.mxu0 0.0
    %1046 = vmatmul.mubr.f32.gmra.mrb[0].mxu0 %v977
    %v1047 = vpop.f32.mrb[0].mxu0
    %v1048 = vadd.f32 0.0, %v1047
    %v1049 = vpop.f32.mrb[0].mxu0
    %1050 = vdwg.mxu0
    %v1051 = vmul.f32 %v1048, 0.35355338
    %v1052 = vadd.f32 %v1051, %v288
    %v1053 = vsel %vm292, %v1052, -inf
    %1054 = vmax.xlane.f32.xlu0 %v1053
    %v1055 = vpop.xlane.xlu0 %1054
    %v1056 = vsub.f32 %v1052, %v1055
    %v1057 = vmul.f32 %v1056, 1.442695
    %v1058 = vpow.pop %v1057
    %v1059 = vsel %vm292, %v1058, 0.0
    %1060 = vadd.xlane.f32.xlu0 %v1059
    %v1061 = vpop.xlane.xlu0 %1060
    %v1062 = vrcp.pop %v1061
    %v1063 = vmul.f32 %v1058, %v1062
    %1064 = vrot.lane.b32.xlu0 %v280, 64
    %v1065 = vpop.permute.xlu0 %1064
    %v1068 = vsel %vm292, %v1063, 0
    %1070 = vmatprep.subr.mxu0 0.0
    %1071 = vmatpush1.msra.mxu0 %v1065
    %1072 = vmatprep.subr.mxu0 0.0
    %1073 = vmatpush1.msra.mxu0 0.0
    %1074 = vmatprep.subr.mxu0 0.0
    %1075 = vmatpush1.msra.mxu0 0.0
    %1076 = vmatprep.subr.mxu0 0.0
    %1077 = vmatpush1.msra.mxu0 0.0
    %1078 = vmatprep.subr.mxu0 0.0
    %1079 = vmatpush1.msra.mxu0 0.0
    %1080 = vmatprep.subr.mxu0 0.0
    %1081 = vmatpush1.msra.mxu0 0.0
    %1082 = vmatprep.subr.mxu0 0.0
    %1083 = vmatpush1.msra.mxu0 0.0
    %1084 = vmatprep.subr.mxu0 0.0
    %1085 = vmatpush1.msra.mxu0 0.0
    %1086 = vmatprep.subr.mxu0 0.0
    %1087 = vmatpush1.msra.mxu0 0.0
    %1088 = vmatprep.subr.mxu0 0.0
    %1089 = vmatpush1.msra.mxu0 0.0
    %1090 = vmatprep.subr.mxu0 0.0
    %1091 = vmatpush1.msra.mxu0 0.0
    %1092 = vmatprep.subr.mxu0 0.0
    %1093 = vmatpush1.msra.mxu0 0.0
    %1094 = vmatprep.subr.mxu0 0.0
    %1095 = vmatpush1.msra.mxu0 0.0
    %1096 = vmatprep.subr.mxu0 0.0
    %1097 = vmatpush1.msra.mxu0 0.0
    %1098 = vmatprep.subr.mxu0 0.0
    %1099 = vmatpush1.msra.mxu0 0.0
    %1100 = vmatprep.subr.mxu0 0.0
    %1101 = vmatpush1.msra.mxu0 0.0
    %1102 = vmatprep.subr.mxu0 0.0
    %1103 = vmatpush1.msra.mxu0 0.0
    %1104 = vmatprep.subr.mxu0 0.0
    %1105 = vmatpush1.msra.mxu0 0.0
    %1106 = vmatprep.subr.mxu0 0.0
    %1107 = vmatpush1.msra.mxu0 0.0
    %1108 = vmatprep.subr.mxu0 0.0
    %1109 = vmatpush1.msra.mxu0 0.0
    %1110 = vmatprep.subr.mxu0 0.0
    %1111 = vmatpush1.msra.mxu0 0.0
    %1112 = vmatprep.subr.mxu0 0.0
    %1113 = vmatpush1.msra.mxu0 0.0
    %1114 = vmatprep.subr.mxu0 0.0
    %1115 = vmatpush1.msra.mxu0 0.0
    %1116 = vmatprep.subr.mxu0 0.0
    %1117 = vmatpush1.msra.mxu0 0.0
    %1118 = vmatprep.subr.mxu0 0.0
    %1119 = vmatpush1.msra.mxu0 0.0
    %1120 = vmatprep.subr.mxu0 0.0
    %1121 = vmatpush1.msra.mxu0 0.0
    %1122 = vmatprep.subr.mxu0 0.0
    %1123 = vmatpush1.msra.mxu0 0.0
    %1124 = vmatprep.subr.mxu0 0.0
    %1125 = vmatpush1.msra.mxu0 0.0
    %1126 = vmatprep.subr.mxu0 0.0
    %1127 = vmatpush1.msra.mxu0 0.0
    %1128 = vmatprep.subr.mxu0 0.0
    %1129 = vmatpush1.msra.mxu0 0.0
    %1130 = vmatprep.subr.mxu0 0.0
    %1131 = vmatpush1.msra.mxu0 0.0
    %1132 = vmatprep.subr.mxu0 0.0
    %1133 = vmatpush1.msra.mxu0 0.0
    %1134 = vmatprep.mubr.f32.mxu0 0.0
    %1135 = vmatmul.mubr.f32.gmra.mrb[0].mxu0 %v1068
    %v1136 = vpop.f32.mrb[0].mxu0
    %v1137 = vadd.f32 0.0, %v1136
    %v1138 = vpop.f32.mrb[0].mxu0
    %1139 = vdwg.mxu0
    %1140 = vrot.lane.b32.xlu0 %v280, 120
    %v1141 = vpop.permute.xlu0 %1140
    %1142 = vrot.lane.b32.xlu0 %v280, 88
    %v1143 = vpop.permute.xlu0 %1142
    %v1144 = vsel %vm292, %v1141, 0
    %v1146 = vsel %vm292, %v1143, 0
    %1148 = vmatprep.subr.mxu0 0.0
    %1149 = vmatpush1.xpose.msra.mxu0 %v1146
    %1150 = vmatprep.subr.mxu0 0.0
    %1151 = vmatpush1.xpose.msra.mxu0 0.0
    %1152 = vmatprep.subr.mxu0 0.0
    %1153 = vmatpush1.xpose.msra.mxu0 0.0
    %1154 = vmatprep.subr.mxu0 0.0
    %1155 = vmatpush1.xpose.msra.mxu0 0.0
    %1156 = vmatprep.subr.mxu0 0.0
    %1157 = vmatpush1.xpose.msra.mxu0 0.0
    %1158 = vmatprep.subr.mxu0 0.0
    %1159 = vmatpush1.xpose.msra.mxu0 0.0
    %1160 = vmatprep.subr.mxu0 0.0
    %1161 = vmatpush1.xpose.msra.mxu0 0.0
    %1162 = vmatprep.subr.mxu0 0.0
    %1163 = vmatpush1.xpose.msra.mxu0 0.0
    %1164 = vmatprep.subr.mxu0 0.0
    %1165 = vmatpush1.xpose.msra.mxu0 0.0
    %1166 = vmatprep.subr.mxu0 0.0
    %1167 = vmatpush1.xpose.msra.mxu0 0.0
    %1168 = vmatprep.subr.mxu0 0.0
    %1169 = vmatpush1.xpose.msra.mxu0 0.0
    %1170 = vmatprep.subr.mxu0 0.0
    %1171 = vmatpush1.xpose.msra.mxu0 0.0
    %1172 = vmatprep.subr.mxu0 0.0
    %1173 = vmatpush1.xpose.msra.mxu0 0.0
    %1174 = vmatprep.subr.mxu0 0.0
    %1175 = vmatpush1.xpose.msra.mxu0 0.0
    %1176 = vmatprep.subr.mxu0 0.0
    %1177 = vmatpush1.xpose.msra.mxu0 0.0
    %1178 = vmatprep.subr.mxu0 0.0
    %1179 = vmatpush1.xpose.msra.mxu0 0.0
    %1180 = vmatprep.subr.mxu0 0.0
    %1181 = vmatpush1.xpose.msra.mxu0 0.0
    %1182 = vmatprep.subr.mxu0 0.0
    %1183 = vmatpush1.xpose.msra.mxu0 0.0
    %1184 = vmatprep.subr.mxu0 0.0
    %1185 = vmatpush1.xpose.msra.mxu0 0.0
    %1186 = vmatprep.subr.mxu0 0.0
    %1187 = vmatpush1.xpose.msra.mxu0 0.0
    %1188 = vmatprep.subr.mxu0 0.0
    %1189 = vmatpush1.xpose.msra.mxu0 0.0
    %1190 = vmatprep.subr.mxu0 0.0
    %1191 = vmatpush1.xpose.msra.mxu0 0.0
    %1192 = vmatprep.subr.mxu0 0.0
    %1193 = vmatpush1.xpose.msra.mxu0 0.0
    %1194 = vmatprep.subr.mxu0 0.0
    %1195 = vmatpush1.xpose.msra.mxu0 0.0
    %1196 = vmatprep.subr.mxu0 0.0
    %1197 = vmatpush1.xpose.msra.mxu0 0.0
    %1198 = vmatprep.subr.mxu0 0.0
    %1199 = vmatpush1.xpose.msra.mxu0 0.0
    %1200 = vmatprep.subr.mxu0 0.0
    %1201 = vmatpush1.xpose.msra.mxu0 0.0
    %1202 = vmatprep.subr.mxu0 0.0
    %1203 = vmatpush1.xpose.msra.mxu0 0.0
    %1204 = vmatprep.subr.mxu0 0.0
    %1205 = vmatpush1.xpose.msra.mxu0 0.0
    %1206 = vmatprep.subr.mxu0 0.0
    %1207 = vmatpush1.xpose.msra.mxu0 0.0
    %1208 = vmatprep.subr.mxu0 0.0
    %1209 = vmatpush1.xpose.msra.mxu0 0.0
    %1210 = vmatprep.subr.mxu0 0.0
    %1211 = vmatpush1.xpose.msra.mxu0 0.0
    %1212 = vmatprep.mubr.f32.mxu0 0.0
    %1213 = vmatmul.mubr.f32.gmra.mrb[0].mxu0 %v1144
    %v1214 = vpop.f32.mrb[0].mxu0
    %v1215 = vadd.f32 0.0, %v1214
    %v1216 = vpop.f32.mrb[0].mxu0
    %1217 = vdwg.mxu0
    %v1218 = vmul.f32 %v1215, 0.35355338
    %v1219 = vadd.f32 %v1218, %v288
    %v1220 = vsel %vm292, %v1219, -inf
    %1221 = vmax.xlane.f32.xlu0 %v1220
    %v1222 = vpop.xlane.xlu0 %1221
    %v1223 = vsub.f32 %v1219, %v1222
    %v1224 = vmul.f32 %v1223, 1.442695
    %v1225 = vpow.pop %v1224
    %v1226 = vsel %vm292, %v1225, 0.0
    %1227 = vadd.xlane.f32.xlu0 %v1226
    %v1228 = vpop.xlane.xlu0 %1227
    %v1229 = vrcp.pop %v1228
    %v1230 = vmul.f32 %v1225, %v1229
    %1231 = vrot.lane.b32.xlu0 %v280, 56
    %v1232 = vpop.permute.xlu0 %1231
    %v1235 = vsel %vm292, %v1230, 0
    %1237 = vmatprep.subr.mxu0 0.0
    %1238 = vmatpush1.msra.mxu0 %v1232
    %1239 = vmatprep.subr.mxu0 0.0
    %1240 = vmatpush1.msra.mxu0 0.0
    %1241 = vmatprep.subr.mxu0 0.0
    %1242 = vmatpush1.msra.mxu0 0.0
    %1243 = vmatprep.subr.mxu0 0.0
    %1244 = vmatpush1.msra.mxu0 0.0
    %1245 = vmatprep.subr.mxu0 0.0
    %1246 = vmatpush1.msra.mxu0 0.0
    %1247 = vmatprep.subr.mxu0 0.0
    %1248 = vmatpush1.msra.mxu0 0.0
    %1249 = vmatprep.subr.mxu0 0.0
    %1250 = vmatpush1.msra.mxu0 0.0
    %1251 = vmatprep.subr.mxu0 0.0
    %1252 = vmatpush1.msra.mxu0 0.0
    %1253 = vmatprep.subr.mxu0 0.0
    %1254 = vmatpush1.msra.mxu0 0.0
    %1255 = vmatprep.subr.mxu0 0.0
    %1256 = vmatpush1.msra.mxu0 0.0
    %1257 = vmatprep.subr.mxu0 0.0
    %1258 = vmatpush1.msra.mxu0 0.0
    %1259 = vmatprep.subr.mxu0 0.0
    %1260 = vmatpush1.msra.mxu0 0.0
    %1261 = vmatprep.subr.mxu0 0.0
    %1262 = vmatpush1.msra.mxu0 0.0
    %1263 = vmatprep.subr.mxu0 0.0
    %1264 = vmatpush1.msra.mxu0 0.0
    %1265 = vmatprep.subr.mxu0 0.0
    %1266 = vmatpush1.msra.mxu0 0.0
    %1267 = vmatprep.subr.mxu0 0.0
    %1268 = vmatpush1.msra.mxu0 0.0
    %1269 = vmatprep.subr.mxu0 0.0
    %1270 = vmatpush1.msra.mxu0 0.0
    %1271 = vmatprep.subr.mxu0 0.0
    %1272 = vmatpush1.msra.mxu0 0.0
    %1273 = vmatprep.subr.mxu0 0.0
    %1274 = vmatpush1.msra.mxu0 0.0
    %1275 = vmatprep.subr.mxu0 0.0
    %1276 = vmatpush1.msra.mxu0 0.0
    %1277 = vmatprep.subr.mxu0 0.0
    %1278 = vmatpush1.msra.mxu0 0.0
    %1279 = vmatprep.subr.mxu0 0.0
    %1280 = vmatpush1.msra.mxu0 0.0
    %1281 = vmatprep.subr.mxu0 0.0
    %1282 = vmatpush1.msra.mxu0 0.0
    %1283 = vmatprep.subr.mxu0 0.0
    %1284 = vmatpush1.msra.mxu0 0.0
    %1285 = vmatprep.subr.mxu0 0.0
    %1286 = vmatpush1.msra.mxu0 0.0
    %1287 = vmatprep.subr.mxu0 0.0
    %1288 = vmatpush1.msra.mxu0 0.0
    %1289 = vmatprep.subr.mxu0 0.0
    %1290 = vmatpush1.msra.mxu0 0.0
    %1291 = vmatprep.subr.mxu0 0.0
    %1292 = vmatpush1.msra.mxu0 0.0
    %1293 = vmatprep.subr.mxu0 0.0
    %1294 = vmatpush1.msra.mxu0 0.0
    %1295 = vmatprep.subr.mxu0 0.0
    %1296 = vmatpush1.msra.mxu0 0.0
    %1297 = vmatprep.subr.mxu0 0.0
    %1298 = vmatpush1.msra.mxu0 0.0
    %1299 = vmatprep.subr.mxu0 0.0
    %1300 = vmatpush1.msra.mxu0 0.0
    %1301 = vmatprep.mubr.f32.mxu0 0.0
    %1302 = vmatmul.mubr.f32.gmra.mrb[0].mxu0 %v1235
    %v1303 = vpop.f32.mrb[0].mxu0
    %v1304 = vadd.f32 0.0, %v1303
    %v1305 = vpop.f32.mrb[0].mxu0
    %1306 = vdwg.mxu0
    %1307 = vrot.lane.b32.xlu0 %v280, 112
    %v1308 = vpop.permute.xlu0 %1307
    %1309 = vrot.lane.b32.xlu0 %v280, 80
    %v1310 = vpop.permute.xlu0 %1309
    %v1311 = vsel %vm292, %v1308, 0
    %v1313 = vsel %vm292, %v1310, 0
    %1315 = vmatprep.subr.mxu0 0.0
    %1316 = vmatpush1.xpose.msra.mxu0 %v1313
    %1317 = vmatprep.subr.mxu0 0.0
    %1318 = vmatpush1.xpose.msra.mxu0 0.0
    %1319 = vmatprep.subr.mxu0 0.0
    %1320 = vmatpush1.xpose.msra.mxu0 0.0
    %1321 = vmatprep.subr.mxu0 0.0
    %1322 = vmatpush1.xpose.msra.mxu0 0.0
    %1323 = vmatprep.subr.mxu0 0.0
    %1324 = vmatpush1.xpose.msra.mxu0 0.0
    %1325 = vmatprep.subr.mxu0 0.0
    %1326 = vmatpush1.xpose.msra.mxu0 0.0
    %1327 = vmatprep.subr.mxu0 0.0
    %1328 = vmatpush1.xpose.msra.mxu0 0.0
    %1329 = vmatprep.subr.mxu0 0.0
    %1330 = vmatpush1.xpose.msra.mxu0 0.0
    %1331 = vmatprep.subr.mxu0 0.0
    %1332 = vmatpush1.xpose.msra.mxu0 0.0
    %1333 = vmatprep.subr.mxu0 0.0
    %1334 = vmatpush1.xpose.msra.mxu0 0.0
    %1335 = vmatprep.subr.mxu0 0.0
    %1336 = vmatpush1.xpose.msra.mxu0 0.0
    %1337 = vmatprep.subr.mxu0 0.0
    %1338 = vmatpush1.xpose.msra.mxu0 0.0
    %1339 = vmatprep.subr.mxu0 0.0
    %1340 = vmatpush1.xpose.msra.mxu0 0.0
    %1341 = vmatprep.subr.mxu0 0.0
    %1342 = vmatpush1.xpose.msra.mxu0 0.0
    %1343 = vmatprep.subr.mxu0 0.0
    %1344 = vmatpush1.xpose.msra.mxu0 0.0
    %1345 = vmatprep.subr.mxu0 0.0
    %1346 = vmatpush1.xpose.msra.mxu0 0.0
    %1347 = vmatprep.subr.mxu0 0.0
    %1348 = vmatpush1.xpose.msra.mxu0 0.0
    %1349 = vmatprep.subr.mxu0 0.0
    %1350 = vmatpush1.xpose.msra.mxu0 0.0
    %1351 = vmatprep.subr.mxu0 0.0
    %1352 = vmatpush1.xpose.msra.mxu0 0.0
    %1353 = vmatprep.subr.mxu0 0.0
    %1354 = vmatpush1.xpose.msra.mxu0 0.0
    %1355 = vmatprep.subr.mxu0 0.0
    %1356 = vmatpush1.xpose.msra.mxu0 0.0
    %1357 = vmatprep.subr.mxu0 0.0
    %1358 = vmatpush1.xpose.msra.mxu0 0.0
    %1359 = vmatprep.subr.mxu0 0.0
    %1360 = vmatpush1.xpose.msra.mxu0 0.0
    %1361 = vmatprep.subr.mxu0 0.0
    %1362 = vmatpush1.xpose.msra.mxu0 0.0
    %1363 = vmatprep.subr.mxu0 0.0
    %1364 = vmatpush1.xpose.msra.mxu0 0.0
    %1365 = vmatprep.subr.mxu0 0.0
    %1366 = vmatpush1.xpose.msra.mxu0 0.0
    %1367 = vmatprep.subr.mxu0 0.0
    %1368 = vmatpush1.xpose.msra.mxu0 0.0
    %1369 = vmatprep.subr.mxu0 0.0
    %1370 = vmatpush1.xpose.msra.mxu0 0.0
    %1371 = vmatprep.subr.mxu0 0.0
    %1372 = vmatpush1.xpose.msra.mxu0 0.0
    %1373 = vmatprep.subr.mxu0 0.0
    %1374 = vmatpush1.xpose.msra.mxu0 0.0
    %1375 = vmatprep.subr.mxu0 0.0
    %1376 = vmatpush1.xpose.msra.mxu0 0.0
    %1377 = vmatprep.subr.mxu0 0.0
    %1378 = vmatpush1.xpose.msra.mxu0 0.0
    %1379 = vmatprep.mubr.f32.mxu0 0.0
    %1380 = vmatmul.mubr.f32.gmra.mrb[0].mxu0 %v1311
    %v1381 = vpop.f32.mrb[0].mxu0
    %v1382 = vadd.f32 0.0, %v1381
    %v1383 = vpop.f32.mrb[0].mxu0
    %1384 = vdwg.mxu0
    %v1385 = vmul.f32 %v1382, 0.35355338
    %v1386 = vadd.f32 %v1385, %v288
    %v1387 = vsel %vm292, %v1386, -inf
    %1388 = vmax.xlane.f32.xlu0 %v1387
    %v1389 = vpop.xlane.xlu0 %1388
    %v1390 = vsub.f32 %v1386, %v1389
    %v1391 = vmul.f32 %v1390, 1.442695
    %v1392 = vpow.pop %v1391
    %v1393 = vsel %vm292, %v1392, 0.0
    %1394 = vadd.xlane.f32.xlu0 %v1393
    %v1395 = vpop.xlane.xlu0 %1394
    %v1396 = vrcp.pop %v1395
    %v1397 = vmul.f32 %v1392, %v1396
    %1398 = vrot.lane.b32.xlu0 %v280, 48
    %v1399 = vpop.permute.xlu0 %1398
    %v1402 = vsel %vm292, %v1397, 0
    %1404 = vmatprep.subr.mxu0 0.0
    %1405 = vmatpush1.msra.mxu0 %v1399
    %1406 = vmatprep.subr.mxu0 0.0
    %1407 = vmatpush1.msra.mxu0 0.0
    %1408 = vmatprep.subr.mxu0 0.0
    %1409 = vmatpush1.msra.mxu0 0.0
    %1410 = vmatprep.subr.mxu0 0.0
    %1411 = vmatpush1.msra.mxu0 0.0
    %1412 = vmatprep.subr.mxu0 0.0
    %1413 = vmatpush1.msra.mxu0 0.0
    %1414 = vmatprep.subr.mxu0 0.0
    %1415 = vmatpush1.msra.mxu0 0.0
    %1416 = vmatprep.subr.mxu0 0.0
    %1417 = vmatpush1.msra.mxu0 0.0
    %1418 = vmatprep.subr.mxu0 0.0
    %1419 = vmatpush1.msra.mxu0 0.0
    %1420 = vmatprep.subr.mxu0 0.0
    %1421 = vmatpush1.msra.mxu0 0.0
    %1422 = vmatprep.subr.mxu0 0.0
    %1423 = vmatpush1.msra.mxu0 0.0
    %1424 = vmatprep.subr.mxu0 0.0
    %1425 = vmatpush1.msra.mxu0 0.0
    %1426 = vmatprep.subr.mxu0 0.0
    %1427 = vmatpush1.msra.mxu0 0.0
    %1428 = vmatprep.subr.mxu0 0.0
    %1429 = vmatpush1.msra.mxu0 0.0
    %1430 = vmatprep.subr.mxu0 0.0
    %1431 = vmatpush1.msra.mxu0 0.0
    %1432 = vmatprep.subr.mxu0 0.0
    %1433 = vmatpush1.msra.mxu0 0.0
    %1434 = vmatprep.subr.mxu0 0.0
    %1435 = vmatpush1.msra.mxu0 0.0
    %1436 = vmatprep.subr.mxu0 0.0
    %1437 = vmatpush1.msra.mxu0 0.0
    %1438 = vmatprep.subr.mxu0 0.0
    %1439 = vmatpush1.msra.mxu0 0.0
    %1440 = vmatprep.subr.mxu0 0.0
    %1441 = vmatpush1.msra.mxu0 0.0
    %1442 = vmatprep.subr.mxu0 0.0
    %1443 = vmatpush1.msra.mxu0 0.0
    %1444 = vmatprep.subr.mxu0 0.0
    %1445 = vmatpush1.msra.mxu0 0.0
    %1446 = vmatprep.subr.mxu0 0.0
    %1447 = vmatpush1.msra.mxu0 0.0
    %1448 = vmatprep.subr.mxu0 0.0
    %1449 = vmatpush1.msra.mxu0 0.0
    %1450 = vmatprep.subr.mxu0 0.0
    %1451 = vmatpush1.msra.mxu0 0.0
    %1452 = vmatprep.subr.mxu0 0.0
    %1453 = vmatpush1.msra.mxu0 0.0
    %1454 = vmatprep.subr.mxu0 0.0
    %1455 = vmatpush1.msra.mxu0 0.0
    %1456 = vmatprep.subr.mxu0 0.0
    %1457 = vmatpush1.msra.mxu0 0.0
    %1458 = vmatprep.subr.mxu0 0.0
    %1459 = vmatpush1.msra.mxu0 0.0
    %1460 = vmatprep.subr.mxu0 0.0
    %1461 = vmatpush1.msra.mxu0 0.0
    %1462 = vmatprep.subr.mxu0 0.0
    %1463 = vmatpush1.msra.mxu0 0.0
    %1464 = vmatprep.subr.mxu0 0.0
    %1465 = vmatpush1.msra.mxu0 0.0
    %1466 = vmatprep.subr.mxu0 0.0
    %1467 = vmatpush1.msra.mxu0 0.0
    %1468 = vmatprep.mubr.f32.mxu0 0.0
    %1469 = vmatmul.mubr.f32.gmra.mrb[0].mxu0 %v1402
    %v1470 = vpop.f32.mrb[0].mxu0
    %v1471 = vadd.f32 0.0, %v1470
    %v1472 = vpop.f32.mrb[0].mxu0
    %1473 = vdwg.mxu0
    %1474 = vrot.lane.b32.xlu0 %v280, 104
    %v1475 = vpop.permute.xlu0 %1474
    %1476 = vrot.lane.b32.xlu0 %v280, 72
    %v1477 = vpop.permute.xlu0 %1476
    %v1478 = vsel %vm292, %v1475, 0
    %v1480 = vsel %vm292, %v1477, 0
    %1482 = vmatprep.subr.mxu0 0.0
    %1483 = vmatpush1.xpose.msra.mxu0 %v1480
    %1484 = vmatprep.subr.mxu0 0.0
    %1485 = vmatpush1.xpose.msra.mxu0 0.0
    %1486 = vmatprep.subr.mxu0 0.0
    %1487 = vmatpush1.xpose.msra.mxu0 0.0
    %1488 = vmatprep.subr.mxu0 0.0
    %1489 = vmatpush1.xpose.msra.mxu0 0.0
    %1490 = vmatprep.subr.mxu0 0.0
    %1491 = vmatpush1.xpose.msra.mxu0 0.0
    %1492 = vmatprep.subr.mxu0 0.0
    %1493 = vmatpush1.xpose.msra.mxu0 0.0
    %1494 = vmatprep.subr.mxu0 0.0
    %1495 = vmatpush1.xpose.msra.mxu0 0.0
    %1496 = vmatprep.subr.mxu0 0.0
    %1497 = vmatpush1.xpose.msra.mxu0 0.0
    %1498 = vmatprep.subr.mxu0 0.0
    %1499 = vmatpush1.xpose.msra.mxu0 0.0
    %1500 = vmatprep.subr.mxu0 0.0
    %1501 = vmatpush1.xpose.msra.mxu0 0.0
    %1502 = vmatprep.subr.mxu0 0.0
    %1503 = vmatpush1.xpose.msra.mxu0 0.0
    %1504 = vmatprep.subr.mxu0 0.0
    %1505 = vmatpush1.xpose.msra.mxu0 0.0
    %1506 = vmatprep.subr.mxu0 0.0
    %1507 = vmatpush1.xpose.msra.mxu0 0.0
    %1508 = vmatprep.subr.mxu0 0.0
    %1509 = vmatpush1.xpose.msra.mxu0 0.0
    %1510 = vmatprep.subr.mxu0 0.0
    %1511 = vmatpush1.xpose.msra.mxu0 0.0
    %1512 = vmatprep.subr.mxu0 0.0
    %1513 = vmatpush1.xpose.msra.mxu0 0.0
    %1514 = vmatprep.subr.mxu0 0.0
    %1515 = vmatpush1.xpose.msra.mxu0 0.0
    %1516 = vmatprep.subr.mxu0 0.0
    %1517 = vmatpush1.xpose.msra.mxu0 0.0
    %1518 = vmatprep.subr.mxu0 0.0
    %1519 = vmatpush1.xpose.msra.mxu0 0.0
    %1520 = vmatprep.subr.mxu0 0.0
    %1521 = vmatpush1.xpose.msra.mxu0 0.0
    %1522 = vmatprep.subr.mxu0 0.0
    %1523 = vmatpush1.xpose.msra.mxu0 0.0
    %1524 = vmatprep.subr.mxu0 0.0
    %1525 = vmatpush1.xpose.msra.mxu0 0.0
    %1526 = vmatprep.subr.mxu0 0.0
    %1527 = vmatpush1.xpose.msra.mxu0 0.0
    %1528 = vmatprep.subr.mxu0 0.0
    %1529 = vmatpush1.xpose.msra.mxu0 0.0
    %1530 = vmatprep.subr.mxu0 0.0
    %1531 = vmatpush1.xpose.msra.mxu0 0.0
    %1532 = vmatprep.subr.mxu0 0.0
    %1533 = vmatpush1.xpose.msra.mxu0 0.0
    %1534 = vmatprep.subr.mxu0 0.0
    %1535 = vmatpush1.xpose.msra.mxu0 0.0
    %1536 = vmatprep.subr.mxu0 0.0
    %1537 = vmatpush1.xpose.msra.mxu0 0.0
    %1538 = vmatprep.subr.mxu0 0.0
    %1539 = vmatpush1.xpose.msra.mxu0 0.0
    %1540 = vmatprep.subr.mxu0 0.0
    %1541 = vmatpush1.xpose.msra.mxu0 0.0
    %1542 = vmatprep.subr.mxu0 0.0
    %1543 = vmatpush1.xpose.msra.mxu0 0.0
    %1544 = vmatprep.subr.mxu0 0.0
    %1545 = vmatpush1.xpose.msra.mxu0 0.0
    %1546 = vmatprep.mubr.f32.mxu0 0.0
    %1547 = vmatmul.mubr.f32.gmra.mrb[0].mxu0 %v1478
    %v1548 = vpop.f32.mrb[0].mxu0
    %v1549 = vadd.f32 0.0, %v1548
    %v1550 = vpop.f32.mrb[0].mxu0
    %1551 = vdwg.mxu0
    %v1552 = vmul.f32 %v1549, 0.35355338
    %v1553 = vadd.f32 %v1552, %v288
    %v1554 = vsel %vm292, %v1553, -inf
    %1555 = vmax.xlane.f32.xlu0 %v1554
    %v1556 = vpop.xlane.xlu0 %1555
    %v1557 = vsub.f32 %v1553, %v1556
    %v1558 = vmul.f32 %v1557, 1.442695
    %v1559 = vpow.pop %v1558
    %v1560 = vsel %vm292, %v1559, 0.0
    %1561 = vadd.xlane.f32.xlu0 %v1560
    %v1562 = vpop.xlane.xlu0 %1561
    %v1563 = vrcp.pop %v1562
    %v1564 = vmul.f32 %v1559, %v1563
    %1565 = vrot.lane.b32.xlu0 %v280, 40
    %v1566 = vpop.permute.xlu0 %1565
    %v1569 = vsel %vm292, %v1564, 0
    %1571 = vmatprep.subr.mxu0 0.0
    %1572 = vmatpush1.msra.mxu0 %v1566
    %1573 = vmatprep.subr.mxu0 0.0
    %1574 = vmatpush1.msra.mxu0 0.0
    %1575 = vmatprep.subr.mxu0 0.0
    %1576 = vmatpush1.msra.mxu0 0.0
    %1577 = vmatprep.subr.mxu0 0.0
    %1578 = vmatpush1.msra.mxu0 0.0
    %1579 = vmatprep.subr.mxu0 0.0
    %1580 = vmatpush1.msra.mxu0 0.0
    %1581 = vmatprep.subr.mxu0 0.0
    %1582 = vmatpush1.msra.mxu0 0.0
    %1583 = vmatprep.subr.mxu0 0.0
    %1584 = vmatpush1.msra.mxu0 0.0
    %1585 = vmatprep.subr.mxu0 0.0
    %1586 = vmatpush1.msra.mxu0 0.0
    %1587 = vmatprep.subr.mxu0 0.0
    %1588 = vmatpush1.msra.mxu0 0.0
    %1589 = vmatprep.subr.mxu0 0.0
    %1590 = vmatpush1.msra.mxu0 0.0
    %1591 = vmatprep.subr.mxu0 0.0
    %1592 = vmatpush1.msra.mxu0 0.0
    %1593 = vmatprep.subr.mxu0 0.0
    %1594 = vmatpush1.msra.mxu0 0.0
    %1595 = vmatprep.subr.mxu0 0.0
    %1596 = vmatpush1.msra.mxu0 0.0
    %1597 = vmatprep.subr.mxu0 0.0
    %1598 = vmatpush1.msra.mxu0 0.0
    %1599 = vmatprep.subr.mxu0 0.0
    %1600 = vmatpush1.msra.mxu0 0.0
    %1601 = vmatprep.subr.mxu0 0.0
    %1602 = vmatpush1.msra.mxu0 0.0
    %1603 = vmatprep.subr.mxu0 0.0
    %1604 = vmatpush1.msra.mxu0 0.0
    %1605 = vmatprep.subr.mxu0 0.0
    %1606 = vmatpush1.msra.mxu0 0.0
    %1607 = vmatprep.subr.mxu0 0.0
    %1608 = vmatpush1.msra.mxu0 0.0
    %1609 = vmatprep.subr.mxu0 0.0
    %1610 = vmatpush1.msra.mxu0 0.0
    %1611 = vmatprep.subr.mxu0 0.0
    %1612 = vmatpush1.msra.mxu0 0.0
    %1613 = vmatprep.subr.mxu0 0.0
    %1614 = vmatpush1.msra.mxu0 0.0
    %1615 = vmatprep.subr.mxu0 0.0
    %1616 = vmatpush1.msra.mxu0 0.0
    %1617 = vmatprep.subr.mxu0 0.0
    %1618 = vmatpush1.msra.mxu0 0.0
    %1619 = vmatprep.subr.mxu0 0.0
    %1620 = vmatpush1.msra.mxu0 0.0
    %1621 = vmatprep.subr.mxu0 0.0
    %1622 = vmatpush1.msra.mxu0 0.0
    %1623 = vmatprep.subr.mxu0 0.0
    %1624 = vmatpush1.msra.mxu0 0.0
    %1625 = vmatprep.subr.mxu0 0.0
    %1626 = vmatpush1.msra.mxu0 0.0
    %1627 = vmatprep.subr.mxu0 0.0
    %1628 = vmatpush1.msra.mxu0 0.0
    %1629 = vmatprep.subr.mxu0 0.0
    %1630 = vmatpush1.msra.mxu0 0.0
    %1631 = vmatprep.subr.mxu0 0.0
    %1632 = vmatpush1.msra.mxu0 0.0
    %1633 = vmatprep.subr.mxu0 0.0
    %1634 = vmatpush1.msra.mxu0 0.0
    %1635 = vmatprep.mubr.f32.mxu0 0.0
    %1636 = vmatmul.mubr.f32.gmra.mrb[0].mxu0 %v1569
    %v1637 = vpop.f32.mrb[0].mxu0
    %v1638 = vadd.f32 0.0, %v1637
    %v1639 = vpop.f32.mrb[0].mxu0
    %1640 = vdwg.mxu0
    %1642 = vrot.lane.b32.xlu0 %v1304, 8
    %v1643 = vpop.permute.xlu0 %1642
    %1646 = vrot.lane.b32.xlu0 %v1471, 16
    %v1647 = vpop.permute.xlu0 %1646
    %1650 = vrot.lane.b32.xlu0 %v1638, 24
    %v1651 = vpop.permute.xlu0 %1650
    %v1653 = vsel %vm292, %v1137, %v1643
    %v1654 = vsel %vm970, %v1653, %v1647
    %v1655 = vsel %vm972, %v1654, %v1651
    %v1656 = vld [vmem:[%s6] sm:$0xff]
    %v1657 = vld [vmem:[%s6 + $0x8] sm:$0xff]
    %v1658 = vld [vmem:[%s6 + $0x10] sm:$0xff]
    %v1659 = vld [vmem:[%s6 + $0x18] sm:$0xff]
    %v1660 = vld [vmem:[#allocation2] sm:$0x1]
    %v1662 = vlaneseq
    %v1663 = vshrl.u32 %v1662, 7
    %v1664 = vsub.s32 0, %v1663
    %v1665 = vrot.slane %v1660, %v1664
    %v1668 = vsel %vm201, %v973, 0
    %v1671 = vsel %vm201, %v1655, 0
    %1673 = vmatprep.subr.mxu0 0.0
    %1674 = vmatpush1.msra.mxu0 %v1656
    %1675 = vmatprep.subr.mxu0 0.0
    %1676 = vmatpush1.msra.mxu0 %v1657
    %1677 = vmatprep.subr.mxu0 0.0
    %1678 = vmatpush1.msra.mxu0 %v1658
    %1679 = vmatprep.subr.mxu0 0.0
    %1680 = vmatpush1.msra.mxu0 %v1659
    %1681 = vmatprep.subr.mxu0 0.0
    %1682 = vmatpush1.msra.mxu0 0.0
    %1683 = vmatprep.subr.mxu0 0.0
    %1684 = vmatpush1.msra.mxu0 0.0
    %1685 = vmatprep.subr.mxu0 0.0
    %1686 = vmatpush1.msra.mxu0 0.0
    %1687 = vmatprep.subr.mxu0 0.0
    %1688 = vmatpush1.msra.mxu0 0.0
    %1689 = vmatprep.subr.mxu0 0.0
    %1690 = vmatpush1.msra.mxu0 0.0
    %1691 = vmatprep.subr.mxu0 0.0
    %1692 = vmatpush1.msra.mxu0 0.0
    %1693 = vmatprep.subr.mxu0 0.0
    %1694 = vmatpush1.msra.mxu0 0.0
    %1695 = vmatprep.subr.mxu0 0.0
    %1696 = vmatpush1.msra.mxu0 0.0
    %1697 = vmatprep.subr.mxu0 0.0
    %1698 = vmatpush1.msra.mxu0 0.0
    %1699 = vmatprep.subr.mxu0 0.0
    %1700 = vmatpush1.msra.mxu0 0.0
    %1701 = vmatprep.subr.mxu0 0.0
    %1702 = vmatpush1.msra.mxu0 0.0
    %1703 = vmatprep.subr.mxu0 0.0
    %1704 = vmatpush1.msra.mxu0 0.0
    %1705 = vmatprep.subr.mxu0 0.0
    %1706 = vmatpush1.msra.mxu0 0.0
    %1707 = vmatprep.subr.mxu0 0.0
    %1708 = vmatpush1.msra.mxu0 0.0
    %1709 = vmatprep.subr.mxu0 0.0
    %1710 = vmatpush1.msra.mxu0 0.0
    %1711 = vmatprep.subr.mxu0 0.0
    %1712 = vmatpush1.msra.mxu0 0.0
    %1713 = vmatprep.subr.mxu0 0.0
    %1714 = vmatpush1.msra.mxu0 0.0
    %1715 = vmatprep.subr.mxu0 0.0
    %1716 = vmatpush1.msra.mxu0 0.0
    %1717 = vmatprep.subr.mxu0 0.0
    %1718 = vmatpush1.msra.mxu0 0.0
    %1719 = vmatprep.subr.mxu0 0.0
    %1720 = vmatpush1.msra.mxu0 0.0
    %1721 = vmatprep.subr.mxu0 0.0
    %1722 = vmatpush1.msra.mxu0 0.0
    %1723 = vmatprep.subr.mxu0 0.0
    %1724 = vmatpush1.msra.mxu0 0.0
    %1725 = vmatprep.subr.mxu0 0.0
    %1726 = vmatpush1.msra.mxu0 0.0
    %1727 = vmatprep.subr.mxu0 0.0
    %1728 = vmatpush1.msra.mxu0 0.0
    %1729 = vmatprep.subr.mxu0 0.0
    %1730 = vmatpush1.msra.mxu0 0.0
    %1731 = vmatprep.subr.mxu0 0.0
    %1732 = vmatpush1.msra.mxu0 0.0
    %1733 = vmatprep.subr.mxu0 0.0
    %1734 = vmatpush1.msra.mxu0 0.0
    %1735 = vmatprep.subr.mxu0 0.0
    %1736 = vmatpush1.msra.mxu0 0.0
    %1737 = vmatprep.mubr.f32.mxu0 0.0
    %1738 = vmatmul.mubr.f32.gmra.mrb[0].mxu0 %v1668
    %v1739 = vpop.f32.mrb[0].mxu0
    %v1740 = vadd.f32 %v1665, %v1739
    %v1741 = vpop.f32.mrb[0].mxu0
    %1742 = vmatprep.mubr.f32.mxu0 0.0
    %1743 = vmatmul.mubr.f32.gmra.mrb[0].mxu0 %v1671
    %v1744 = vpop.f32.mrb[0].mxu0
    %v1745 = vadd.f32 %v1665, %v1744
    %v1746 = vpop.f32.mrb[0].mxu0
    %1747 = vdwg.mxu0
    %v1748 = vadd.f32 %v185, %v1740
    %v1749 = vadd.f32 %v186, %v1745
    %v1750 = vld [vmem:[%s8] sm:$0x1]
    %v1751 = vld [vmem:[#allocation5] sm:$0x1]
    %v1752 = vsel %vm201, %v1748, 0.0
    %1753 = vadd.xlane.f32.xlu0 %v1752
    %v1754 = vpop.xlane.xlu0 %1753
    %v1755 = vsel %vm201, %v1749, 0.0
    %1756 = vadd.xlane.f32.xlu0 %v1755
    %v1757 = vpop.xlane.xlu0 %1756
    %v1758 = vrcp.pop 32.0
    %v1759 = vmul.f32 %v1754, %v1758
    %v1760 = vmul.f32 %v1757, %v1758
    %v1761 = vsub.f32 %v1748, %v1759
    %v1762 = vsub.f32 %v1749, %v1760
    %v1763 = vmul.f32 %v1761, %v1761
    %v1764 = vmul.f32 %v1762, %v1762
    %v1765 = vsel %vm201, %v1763, 0.0
    %1766 = vadd.xlane.f32.xlu0 %v1765
    %v1767 = vpop.xlane.xlu0 %1766
    %v1768 = vsel %vm201, %v1764, 0.0
    %1769 = vadd.xlane.f32.xlu0 %v1768
    %v1770 = vpop.xlane.xlu0 %1769
    %v1771 = vmul.f32 %v1767, %v1758
    %v1772 = vmul.f32 %v1770, %v1758
    %v1773 = vadd.f32 %v1771, 1e-05
    %v1774 = vadd.f32 %v1772, 1e-05
    %v1775 = vrsqrt.pop %v1773
    %v1776 = vrsqrt.pop %v1774
    %v1777 = vmul.f32 %v1761, %v1775
    %v1778 = vmul.f32 %v1762, %v1776
    %v1780 = vlaneseq
    %v1781 = vshrl.u32 %v1780, 7
    %v1782 = vsub.s32 0, %v1781
    %v1783 = vrot.slane %v1750, %v1782
    %v1785 = vmul.f32 %v1777, %v1783
    %v1786 = vmul.f32 %v1778, %v1783
    %v1788 = vlaneseq
    %v1789 = vshrl.u32 %v1788, 7
    %v1790 = vsub.s32 0, %v1789
    %v1791 = vrot.slane %v1751, %v1790
    %v1793 = vadd.f32 %v1785, %v1791
    %v1794 = vadd.f32 %v1786, %v1791
    %v1795 = vld [vmem:[%s10] sm:$0xff]
    %v1796 = vld [vmem:[%s10 + $0x8] sm:$0xff]
    %v1797 = vld [vmem:[%s10 + $0x10] sm:$0xff]
    %v1798 = vld [vmem:[%s10 + $0x18] sm:$0xff]
    %v1799 = vld [vmem:[#allocation7] sm:$0x1]
    %v1801 = vlaneseq
    %v1802 = vshrl.u32 %v1801, 7
    %v1803 = vsub.s32 0, %v1802
    %v1804 = vrot.slane %v1799, %v1803
    %v1807 = vsel %vm201, %v1793, 0
    %v1810 = vsel %vm201, %v1794, 0
    %1812 = vmatprep.subr.mxu0 0.0
    %1813 = vmatpush1.msra.mxu0 %v1795
    %1814 = vmatprep.subr.mxu0 0.0
    %1815 = vmatpush1.msra.mxu0 %v1796
    %1816 = vmatprep.subr.mxu0 0.0
    %1817 = vmatpush1.msra.mxu0 %v1797
    %1818 = vmatprep.subr.mxu0 0.0
    %1819 = vmatpush1.msra.mxu0 %v1798
    %1820 = vmatprep.subr.mxu0 0.0
    %1821 = vmatpush1.msra.mxu0 0.0
    %1822 = vmatprep.subr.mxu0 0.0
    %1823 = vmatpush1.msra.mxu0 0.0
    %1824 = vmatprep.subr.mxu0 0.0
    %1825 = vmatpush1.msra.mxu0 0.0
    %1826 = vmatprep.subr.mxu0 0.0
    %1827 = vmatpush1.msra.mxu0 0.0
    %1828 = vmatprep.subr.mxu0 0.0
    %1829 = vmatpush1.msra.mxu0 0.0
    %1830 = vmatprep.subr.mxu0 0.0
    %1831 = vmatpush1.msra.mxu0 0.0
    %1832 = vmatprep.subr.mxu0 0.0
    %1833 = vmatpush1.msra.mxu0 0.0
    %1834 = vmatprep.subr.mxu0 0.0
    %1835 = vmatpush1.msra.mxu0 0.0
    %1836 = vmatprep.subr.mxu0 0.0
    %1837 = vmatpush1.msra.mxu0 0.0
    %1838 = vmatprep.subr.mxu0 0.0
    %1839 = vmatpush1.msra.mxu0 0.0
    %1840 = vmatprep.subr.mxu0 0.0
    %1841 = vmatpush1.msra.mxu0 0.0
    %1842 = vmatprep.subr.mxu0 0.0
    %1843 = vmatpush1.msra.mxu0 0.0
    %1844 = vmatprep.subr.mxu0 0.0
    %1845 = vmatpush1.msra.mxu0 0.0
    %1846 = vmatprep.subr.mxu0 0.0
    %1847 = vmatpush1.msra.mxu0 0.0
    %1848 = vmatprep.subr.mxu0 0.0
    %1849 = vmatpush1.msra.mxu0 0.0
    %1850 = vmatprep.subr.mxu0 0.0
    %1851 = vmatpush1.msra.mxu0 0.0
    %1852 = vmatprep.subr.mxu0 0.0
    %1853 = vmatpush1.msra.mxu0 0.0
    %1854 = vmatprep.subr.mxu0 0.0
    %1855 = vmatpush1.msra.mxu0 0.0
    %1856 = vmatprep.subr.mxu0 0.0
    %1857 = vmatpush1.msra.mxu0 0.0
    %1858 = vmatprep.subr.mxu0 0.0
    %1859 = vmatpush1.msra.mxu0 0.0
    %1860 = vmatprep.subr.mxu0 0.0
    %1861 = vmatpush1.msra.mxu0 0.0
    %1862 = vmatprep.subr.mxu0 0.0
    %1863 = vmatpush1.msra.mxu0 0.0
    %1864 = vmatprep.subr.mxu0 0.0
    %1865 = vmatpush1.msra.mxu0 0.0
    %1866 = vmatprep.subr.mxu0 0.0
    %1867 = vmatpush1.msra.mxu0 0.0
    %1868 = vmatprep.subr.mxu0 0.0
    %1869 = vmatpush1.msra.mxu0 0.0
    %1870 = vmatprep.subr.mxu0 0.0
    %1871 = vmatpush1.msra.mxu0 0.0
    %1872 = vmatprep.subr.mxu0 0.0
    %1873 = vmatpush1.msra.mxu0 0.0
    %1874 = vmatprep.subr.mxu0 0.0
    %1875 = vmatpush1.msra.mxu0 0.0
    %1876 = vmatprep.mubr.f32.mxu0 0.0
    %1877 = vmatmul.mubr.f32.gmra.mrb[0].mxu0 %v1807
    %v1878 = vpop.f32.mrb[0].mxu0
    %v1879 = vadd.f32 %v1804, %v1878
    %v1880 = vpop.f32.mrb[0].mxu0
    %1881 = vmatprep.mubr.f32.mxu0 0.0
    %1882 = vmatmul.mubr.f32.gmra.mrb[0].mxu0 %v1810
    %v1883 = vpop.f32.mrb[0].mxu0
    %v1884 = vadd.f32 %v1804, %v1883
    %v1885 = vpop.f32.mrb[0].mxu0
    %1886 = vdwg.mxu0
    %v1887 = vld [vmem:[%s12] sm:$0xff]
    %v1888 = vld [vmem:[%s12 + $0x8] sm:$0xff]
    %v1889 = vld [vmem:[%s12 + $0x10] sm:$0xff]
    %v1890 = vld [vmem:[%s12 + $0x18] sm:$0xff]
    %v1891 = vld [vmem:[#allocation8] sm:$0x1]
    %v1893 = vlaneseq
    %v1894 = vshrl.u32 %v1893, 7
    %v1895 = vsub.s32 0, %v1894
    %v1896 = vrot.slane %v1891, %v1895
    %v1899 = vsel %vm201, %v187, 0
    %v1902 = vsel %vm201, %v188, 0
    %v1905 = vsel %vm201, %v189, 0
    %1907 = vmatprep.subr.mxu0 0.0
    %1908 = vmatpush1.msra.mxu0 %v1887
    %1909 = vmatprep.subr.mxu0 0.0
    %1910 = vmatpush1.msra.mxu0 %v1888
    %1911 = vmatprep.subr.mxu0 0.0
    %1912 = vmatpush1.msra.mxu0 %v1889
    %1913 = vmatprep.subr.mxu0 0.0
    %1914 = vmatpush1.msra.mxu0 %v1890
    %1915 = vmatprep.subr.mxu0 0.0
    %1916 = vmatpush1.msra.mxu0 0.0
    %1917 = vmatprep.subr.mxu0 0.0
    %1918 = vmatpush1.msra.mxu0 0.0
    %1919 = vmatprep.subr.mxu0 0.0
    %1920 = vmatpush1.msra.mxu0 0.0
    %1921 = vmatprep.subr.mxu0 0.0
    %1922 = vmatpush1.msra.mxu0 0.0
    %1923 = vmatprep.subr.mxu0 0.0
    %1924 = vmatpush1.msra.mxu0 0.0
    %1925 = vmatprep.subr.mxu0 0.0
    %1926 = vmatpush1.msra.mxu0 0.0
    %1927 = vmatprep.subr.mxu0 0.0
    %1928 = vmatpush1.msra.mxu0 0.0
    %1929 = vmatprep.subr.mxu0 0.0
    %1930 = vmatpush1.msra.mxu0 0.0
    %1931 = vmatprep.subr.mxu0 0.0
    %1932 = vmatpush1.msra.mxu0 0.0
    %1933 = vmatprep.subr.mxu0 0.0
    %1934 = vmatpush1.msra.mxu0 0.0
    %1935 = vmatprep.subr.mxu0 0.0
    %1936 = vmatpush1.msra.mxu0 0.0
    %1937 = vmatprep.subr.mxu0 0.0
    %1938 = vmatpush1.msra.mxu0 0.0
    %1939 = vmatprep.subr.mxu0 0.0
    %1940 = vmatpush1.msra.mxu0 0.0
    %1941 = vmatprep.subr.mxu0 0.0
    %1942 = vmatpush1.msra.mxu0 0.0
    %1943 = vmatprep.subr.mxu0 0.0
    %1944 = vmatpush1.msra.mxu0 0.0
    %1945 = vmatprep.subr.mxu0 0.0
    %1946 = vmatpush1.msra.mxu0 0.0
    %1947 = vmatprep.subr.mxu0 0.0
    %1948 = vmatpush1.msra.mxu0 0.0
    %1949 = vmatprep.subr.mxu0 0.0
    %1950 = vmatpush1.msra.mxu0 0.0
    %1951 = vmatprep.subr.mxu0 0.0
    %1952 = vmatpush1.msra.mxu0 0.0
    %1953 = vmatprep.subr.mxu0 0.0
    %1954 = vmatpush1.msra.mxu0 0.0
    %1955 = vmatprep.subr.mxu0 0.0
    %1956 = vmatpush1.msra.mxu0 0.0
    %1957 = vmatprep.subr.mxu0 0.0
    %1958 = vmatpush1.msra.mxu0 0.0
    %1959 = vmatprep.subr.mxu0 0.0
    %1960 = vmatpush1.msra.mxu0 0.0
    %1961 = vmatprep.subr.mxu0 0.0
    %1962 = vmatpush1.msra.mxu0 0.0
    %1963 = vmatprep.subr.mxu0 0.0
    %1964 = vmatpush1.msra.mxu0 0.0
    %1965 = vmatprep.subr.mxu0 0.0
    %1966 = vmatpush1.msra.mxu0 0.0
    %1967 = vmatprep.subr.mxu0 0.0
    %1968 = vmatpush1.msra.mxu0 0.0
    %1969 = vmatprep.subr.mxu0 0.0
    %1970 = vmatpush1.msra.mxu0 0.0
    %1971 = vmatprep.mubr.f32.mxu0 0.0
    %1972 = vmatmul.mubr.f32.gmra.mrb[0].mxu0 %v1899
    %v1973 = vpop.f32.mrb[0].mxu0
    %v1974 = vadd.f32 %v1896, %v1973
    %v1975 = vpop.f32.mrb[0].mxu0
    %1976 = vmatprep.mubr.f32.mxu0 0.0
    %1977 = vmatmul.mubr.f32.gmra.mrb[0].mxu0 %v1902
    %v1978 = vpop.f32.mrb[0].mxu0
    %v1979 = vadd.f32 %v1896, %v1978
    %v1980 = vpop.f32.mrb[0].mxu0
    %1981 = vmatprep.mubr.f32.mxu0 0.0
    %1982 = vmatmul.mubr.f32.gmra.mrb[0].mxu0 %v1905
    %v1983 = vpop.f32.mrb[0].mxu0
    %v1984 = vadd.f32 %v1896, %v1983
    %v1985 = vpop.f32.mrb[0].mxu0
    %1986 = vdwg.mxu0
    %v1987 = vld [vmem:[%s3] sm:$0x1]
    %v1988 = vld [vmem:[%s3 + $0x1] sm:$0x1]
    %vm1989 = vcmp.gt.f32.partialorder %v1987, 0.0
    %vm1990 = vcmp.gt.f32.partialorder %v1988, 0.0
    %v1991 = vsel %vm1989, 0.0, -1e+10
    %v1992 = vsel %vm1990, 0.0, -1e+10
    %v1994 = vsel %vm292, %v1879, 0
    %v1997 = vsel %vm292, %v1974, 0
    %v2000 = vsel %vm292, %v1979, 0
    %2002 = vmatprep.subr.mxu0 0.0
    %2003 = vmatpush1.xpose.msra.mxu0 %v1997
    %2004 = vmatprep.subr.mxu0 0.0
    %2005 = vmatpush1.xpose.msra.mxu0 %v2000
    %2006 = vmatprep.subr.mxu0 0.0
    %2007 = vmatpush1.xpose.msra.mxu0 0.0
    %2008 = vmatprep.subr.mxu0 0.0
    %2009 = vmatpush1.xpose.msra.mxu0 0.0
    %2010 = vmatprep.subr.mxu0 0.0
    %2011 = vmatpush1.xpose.msra.mxu0 0.0
    %2012 = vmatprep.subr.mxu0 0.0
    %2013 = vmatpush1.xpose.msra.mxu0 0.0
    %2014 = vmatprep.subr.mxu0 0.0
    %2015 = vmatpush1.xpose.msra.mxu0 0.0
    %2016 = vmatprep.subr.mxu0 0.0
    %2017 = vmatpush1.xpose.msra.mxu0 0.0
    %2018 = vmatprep.subr.mxu0 0.0
    %2019 = vmatpush1.xpose.msra.mxu0 0.0
    %2020 = vmatprep.subr.mxu0 0.0
    %2021 = vmatpush1.xpose.msra.mxu0 0.0
    %2022 = vmatprep.subr.mxu0 0.0
    %2023 = vmatpush1.xpose.msra.mxu0 0.0
    %2024 = vmatprep.subr.mxu0 0.0
    %2025 = vmatpush1.xpose.msra.mxu0 0.0
    %2026 = vmatprep.subr.mxu0 0.0
    %2027 = vmatpush1.xpose.msra.mxu0 0.0
    %2028 = vmatprep.subr.mxu0 0.0
    %2029 = vmatpush1.xpose.msra.mxu0 0.0
    %2030 = vmatprep.subr.mxu0 0.0
    %2031 = vmatpush1.xpose.msra.mxu0 0.0
    %2032 = vmatprep.subr.mxu0 0.0
    %2033 = vmatpush1.xpose.msra.mxu0 0.0
    %2034 = vmatprep.subr.mxu0 0.0
    %2035 = vmatpush1.xpose.msra.mxu0 0.0
    %2036 = vmatprep.subr.mxu0 0.0
    %2037 = vmatpush1.xpose.msra.mxu0 0.0
    %2038 = vmatprep.subr.mxu0 0.0
    %2039 = vmatpush1.xpose.msra.mxu0 0.0
    %2040 = vmatprep.subr.mxu0 0.0
    %2041 = vmatpush1.xpose.msra.mxu0 0.0
    %2042 = vmatprep.subr.mxu0 0.0
    %2043 = vmatpush1.xpose.msra.mxu0 0.0
    %2044 = vmatprep.subr.mxu0 0.0
    %2045 = vmatpush1.xpose.msra.mxu0 0.0
    %2046 = vmatprep.subr.mxu0 0.0
    %2047 = vmatpush1.xpose.msra.mxu0 0.0
    %2048 = vmatprep.subr.mxu0 0.0
    %2049 = vmatpush1.xpose.msra.mxu0 0.0
    %2050 = vmatprep.subr.mxu0 0.0
    %2051 = vmatpush1.xpose.msra.mxu0 0.0
    %2052 = vmatprep.subr.mxu0 0.0
    %2053 = vmatpush1.xpose.msra.mxu0 0.0
    %2054 = vmatprep.subr.mxu0 0.0
    %2055 = vmatpush1.xpose.msra.mxu0 0.0
    %2056 = vmatprep.subr.mxu0 0.0
    %2057 = vmatpush1.xpose.msra.mxu0 0.0
    %2058 = vmatprep.subr.mxu0 0.0
    %2059 = vmatpush1.xpose.msra.mxu0 0.0
    %2060 = vmatprep.subr.mxu0 0.0
    %2061 = vmatpush1.xpose.msra.mxu0 0.0
    %2062 = vmatprep.subr.mxu0 0.0
    %2063 = vmatpush1.xpose.msra.mxu0 0.0
    %2064 = vmatprep.subr.mxu0 0.0
    %2065 = vmatpush1.xpose.msra.mxu0 0.0
    %2066 = vmatprep.mubr.f32.mxu0 0.0
    %2067 = vmatmul.mubr.f32.gmra.mrb[0].mxu0 %v1994
    %v2068 = vpop.f32.mrb[0].mxu0
    %v2069 = vadd.f32 0.0, %v2068
    %v2070 = vpop.f32.mrb[0].mxu0
    %2071 = vdwg.mxu0
    %v2072 = vmul.f32 %v2069, 0.35355338
    %v2074 = vlaneseq
    %v2075 = vshrl.u32 %v2074, 7
    %v2076 = vsub.s32 0, %v2075
    %v2077 = vrot.slane %v1991, %v2076
    %v2079 = vadd.f32 %v2072, %v2077
    %vm2080 = vcmask 80896
    %v2081 = vsel %vm2080, %v2079, -inf
    %2082 = vmax.xlane.f32.xlu0 %v2081
    %v2083 = vpop.xlane.xlu0 %2082
    %v2084 = vsub.f32 %v2079, %v2083
    %v2085 = vmul.f32 %v2084, 1.442695
    %v2086 = vpow.pop %v2085
    %v2087 = vsel %vm2080, %v2086, 0.0
    %2088 = vadd.xlane.f32.xlu0 %v2087
    %v2089 = vpop.xlane.xlu0 %2088
    %v2090 = vrcp.pop %v2089
    %v2091 = vmul.f32 %v2086, %v2090
    %2092 = vrot.lane.b32.xlu0 %v1974, 96
    %v2093 = vpop.permute.xlu0 %2092
    %2094 = vrot.lane.b32.xlu0 %v1979, 96
    %v2095 = vpop.permute.xlu0 %2094
    %v2098 = vsel %vm2080, %v2091, 0
    %vm2100 = vcmask 1041408
    %v2101 = vsel %vm2100, %v2095, 0
    %2103 = vmatprep.subr.mxu0 0.0
    %2104 = vmatpush1.msra.mxu0 %v2093
    %2105 = vmatprep.subr.mxu0 0.0
    %2106 = vmatpush1.msra.mxu0 %v2101
    %2107 = vmatprep.subr.mxu0 0.0
    %2108 = vmatpush1.msra.mxu0 0.0
    %2109 = vmatprep.subr.mxu0 0.0
    %2110 = vmatpush1.msra.mxu0 0.0
    %2111 = vmatprep.subr.mxu0 0.0
    %2112 = vmatpush1.msra.mxu0 0.0
    %2113 = vmatprep.subr.mxu0 0.0
    %2114 = vmatpush1.msra.mxu0 0.0
    %2115 = vmatprep.subr.mxu0 0.0
    %2116 = vmatpush1.msra.mxu0 0.0
    %2117 = vmatprep.subr.mxu0 0.0
    %2118 = vmatpush1.msra.mxu0 0.0
    %2119 = vmatprep.subr.mxu0 0.0
    %2120 = vmatpush1.msra.mxu0 0.0
    %2121 = vmatprep.subr.mxu0 0.0
    %2122 = vmatpush1.msra.mxu0 0.0
    %2123 = vmatprep.subr.mxu0 0.0
    %2124 = vmatpush1.msra.mxu0 0.0
    %2125 = vmatprep.subr.mxu0 0.0
    %2126 = vmatpush1.msra.mxu0 0.0
    %2127 = vmatprep.subr.mxu0 0.0
    %2128 = vmatpush1.msra.mxu0 0.0
    %2129 = vmatprep.subr.mxu0 0.0
    %2130 = vmatpush1.msra.mxu0 0.0
    %2131 = vmatprep.subr.mxu0 0.0
    %2132 = vmatpush1.msra.mxu0 0.0
    %2133 = vmatprep.subr.mxu0 0.0
    %2134 = vmatpush1.msra.mxu0 0.0
    %2135 = vmatprep.subr.mxu0 0.0
    %2136 = vmatpush1.msra.mxu0 0.0
    %2137 = vmatprep.subr.mxu0 0.0
    %2138 = vmatpush1.msra.mxu0 0.0
    %2139 = vmatprep.subr.mxu0 0.0
    %2140 = vmatpush1.msra.mxu0 0.0
    %2141 = vmatprep.subr.mxu0 0.0
    %2142 = vmatpush1.msra.mxu0 0.0
    %2143 = vmatprep.subr.mxu0 0.0
    %2144 = vmatpush1.msra.mxu0 0.0
    %2145 = vmatprep.subr.mxu0 0.0
    %2146 = vmatpush1.msra.mxu0 0.0
    %2147 = vmatprep.subr.mxu0 0.0
    %2148 = vmatpush1.msra.mxu0 0.0
    %2149 = vmatprep.subr.mxu0 0.0
    %2150 = vmatpush1.msra.mxu0 0.0
    %2151 = vmatprep.subr.mxu0 0.0
    %2152 = vmatpush1.msra.mxu0 0.0
    %2153 = vmatprep.subr.mxu0 0.0
    %2154 = vmatpush1.msra.mxu0 0.0
    %2155 = vmatprep.subr.mxu0 0.0
    %2156 = vmatpush1.msra.mxu0 0.0
    %2157 = vmatprep.subr.mxu0 0.0
    %2158 = vmatpush1.msra.mxu0 0.0
    %2159 = vmatprep.subr.mxu0 0.0
    %2160 = vmatpush1.msra.mxu0 0.0
    %2161 = vmatprep.subr.mxu0 0.0
    %2162 = vmatpush1.msra.mxu0 0.0
    %2163 = vmatprep.subr.mxu0 0.0
    %2164 = vmatpush1.msra.mxu0 0.0
    %2165 = vmatprep.subr.mxu0 0.0
    %2166 = vmatpush1.msra.mxu0 0.0
    %2167 = vmatprep.mubr.f32.mxu0 0.0
    %2168 = vmatmul.mubr.f32.gmra.mrb[0].mxu0 %v2098
    %v2169 = vpop.f32.mrb[0].mxu0
    %v2170 = vadd.f32 0.0, %v2169
    %v2171 = vpop.f32.mrb[0].mxu0
    %2172 = vdwg.mxu0
    %2173 = vrot.lane.b32.xlu0 %v1879, 120
    %v2174 = vpop.permute.xlu0 %2173
    %2175 = vrot.lane.b32.xlu0 %v1974, 120
    %v2176 = vpop.permute.xlu0 %2175
    %2177 = vrot.lane.b32.xlu0 %v1979, 120
    %v2178 = vpop.permute.xlu0 %2177
    %v2179 = vsel %vm292, %v2174, 0
    %v2181 = vsel %vm292, %v2176, 0
    %v2183 = vsel %vm292, %v2178, 0
    %2185 = vmatprep.subr.mxu0 0.0
    %2186 = vmatpush1.xpose.msra.mxu0 %v2181
    %2187 = vmatprep.subr.mxu0 0.0
    %2188 = vmatpush1.xpose.msra.mxu0 %v2183
    %2189 = vmatprep.subr.mxu0 0.0
    %2190 = vmatpush1.xpose.msra.mxu0 0.0
    %2191 = vmatprep.subr.mxu0 0.0
    %2192 = vmatpush1.xpose.msra.mxu0 0.0
    %2193 = vmatprep.subr.mxu0 0.0
    %2194 = vmatpush1.xpose.msra.mxu0 0.0
    %2195 = vmatprep.subr.mxu0 0.0
    %2196 = vmatpush1.xpose.msra.mxu0 0.0
    %2197 = vmatprep.subr.mxu0 0.0
    %2198 = vmatpush1.xpose.msra.mxu0 0.0
    %2199 = vmatprep.subr.mxu0 0.0
    %2200 = vmatpush1.xpose.msra.mxu0 0.0
    %2201 = vmatprep.subr.mxu0 0.0
    %2202 = vmatpush1.xpose.msra.mxu0 0.0
    %2203 = vmatprep.subr.mxu0 0.0
    %2204 = vmatpush1.xpose.msra.mxu0 0.0
    %2205 = vmatprep.subr.mxu0 0.0
    %2206 = vmatpush1.xpose.msra.mxu0 0.0
    %2207 = vmatprep.subr.mxu0 0.0
    %2208 = vmatpush1.xpose.msra.mxu0 0.0
    %2209 = vmatprep.subr.mxu0 0.0
    %2210 = vmatpush1.xpose.msra.mxu0 0.0
    %2211 = vmatprep.subr.mxu0 0.0
    %2212 = vmatpush1.xpose.msra.mxu0 0.0
    %2213 = vmatprep.subr.mxu0 0.0
    %2214 = vmatpush1.xpose.msra.mxu0 0.0
    %2215 = vmatprep.subr.mxu0 0.0
    %2216 = vmatpush1.xpose.msra.mxu0 0.0
    %2217 = vmatprep.subr.mxu0 0.0
    %2218 = vmatpush1.xpose.msra.mxu0 0.0
    %2219 = vmatprep.subr.mxu0 0.0
    %2220 = vmatpush1.xpose.msra.mxu0 0.0
    %2221 = vmatprep.subr.mxu0 0.0
    %2222 = vmatpush1.xpose.msra.mxu0 0.0
    %2223 = vmatprep.subr.mxu0 0.0
    %2224 = vmatpush1.xpose.msra.mxu0 0.0
    %2225 = vmatprep.subr.mxu0 0.0
    %2226 = vmatpush1.xpose.msra.mxu0 0.0
    %2227 = vmatprep.subr.mxu0 0.0
    %2228 = vmatpush1.xpose.msra.mxu0 0.0
    %2229 = vmatprep.subr.mxu0 0.0
    %2230 = vmatpush1.xpose.msra.mxu0 0.0
    %2231 = vmatprep.subr.mxu0 0.0
    %2232 = vmatpush1.xpose.msra.mxu0 0.0
    %2233 = vmatprep.subr.mxu0 0.0
    %2234 = vmatpush1.xpose.msra.mxu0 0.0
    %2235 = vmatprep.subr.mxu0 0.0
    %2236 = vmatpush1.xpose.msra.mxu0 0.0
    %2237 = vmatprep.subr.mxu0 0.0
    %2238 = vmatpush1.xpose.msra.mxu0 0.0
    %2239 = vmatprep.subr.mxu0 0.0
    %2240 = vmatpush1.xpose.msra.mxu0 0.0
    %2241 = vmatprep.subr.mxu0 0.0
    %2242 = vmatpush1.xpose.msra.mxu0 0.0
    %2243 = vmatprep.subr.mxu0 0.0
    %2244 = vmatpush1.xpose.msra.mxu0 0.0
    %2245 = vmatprep.subr.mxu0 0.0
    %2246 = vmatpush1.xpose.msra.mxu0 0.0
    %2247 = vmatprep.subr.mxu0 0.0
    %2248 = vmatpush1.xpose.msra.mxu0 0.0
    %2249 = vmatprep.mubr.f32.mxu0 0.0
    %2250 = vmatmul.mubr.f32.gmra.mrb[0].mxu0 %v2179
    %v2251 = vpop.f32.mrb[0].mxu0
    %v2252 = vadd.f32 0.0, %v2251
    %v2253 = vpop.f32.mrb[0].mxu0
    %2254 = vdwg.mxu0
    %v2255 = vmul.f32 %v2252, 0.35355338
    %v2256 = vadd.f32 %v2255, %v2077
    %v2257 = vsel %vm2080, %v2256, -inf
    %2258 = vmax.xlane.f32.xlu0 %v2257
    %v2259 = vpop.xlane.xlu0 %2258
    %v2260 = vsub.f32 %v2256, %v2259
    %v2261 = vmul.f32 %v2260, 1.442695
    %v2262 = vpow.pop %v2261
    %v2263 = vsel %vm2080, %v2262, 0.0
    %2264 = vadd.xlane.f32.xlu0 %v2263
    %v2265 = vpop.xlane.xlu0 %2264
    %v2266 = vrcp.pop %v2265
    %v2267 = vmul.f32 %v2262, %v2266
    %2268 = vrot.lane.b32.xlu0 %v1974, 88
    %v2269 = vpop.permute.xlu0 %2268
    %2270 = vrot.lane.b32.xlu0 %v1979, 88
    %v2271 = vpop.permute.xlu0 %2270
    %v2274 = vsel %vm2080, %v2267, 0
    %v2276 = vsel %vm2100, %v2271, 0
    %2278 = vmatprep.subr.mxu0 0.0
    %2279 = vmatpush1.msra.mxu0 %v2269
    %2280 = vmatprep.subr.mxu0 0.0
    %2281 = vmatpush1.msra.mxu0 %v2276
    %2282 = vmatprep.subr.mxu0 0.0
    %2283 = vmatpush1.msra.mxu0 0.0
    %2284 = vmatprep.subr.mxu0 0.0
    %2285 = vmatpush1.msra.mxu0 0.0
    %2286 = vmatprep.subr.mxu0 0.0
    %2287 = vmatpush1.msra.mxu0 0.0
    %2288 = vmatprep.subr.mxu0 0.0
    %2289 = vmatpush1.msra.mxu0 0.0
    %2290 = vmatprep.subr.mxu0 0.0
    %2291 = vmatpush1.msra.mxu0 0.0
    %2292 = vmatprep.subr.mxu0 0.0
    %2293 = vmatpush1.msra.mxu0 0.0
    %2294 = vmatprep.subr.mxu0 0.0
    %2295 = vmatpush1.msra.mxu0 0.0
    %2296 = vmatprep.subr.mxu0 0.0
    %2297 = vmatpush1.msra.mxu0 0.0
    %2298 = vmatprep.subr.mxu0 0.0
    %2299 = vmatpush1.msra.mxu0 0.0
    %2300 = vmatprep.subr.mxu0 0.0
    %2301 = vmatpush1.msra.mxu0 0.0
    %2302 = vmatprep.subr.mxu0 0.0
    %2303 = vmatpush1.msra.mxu0 0.0
    %2304 = vmatprep.subr.mxu0 0.0
    %2305 = vmatpush1.msra.mxu0 0.0
    %2306 = vmatprep.subr.mxu0 0.0
    %2307 = vmatpush1.msra.mxu0 0.0
    %2308 = vmatprep.subr.mxu0 0.0
    %2309 = vmatpush1.msra.mxu0 0.0
    %2310 = vmatprep.subr.mxu0 0.0
    %2311 = vmatpush1.msra.mxu0 0.0
    %2312 = vmatprep.subr.mxu0 0.0
    %2313 = vmatpush1.msra.mxu0 0.0
    %2314 = vmatprep.subr.mxu0 0.0
    %2315 = vmatpush1.msra.mxu0 0.0
    %2316 = vmatprep.subr.mxu0 0.0
    %2317 = vmatpush1.msra.mxu0 0.0
    %2318 = vmatprep.subr.mxu0 0.0
    %2319 = vmatpush1.msra.mxu0 0.0
    %2320 = vmatprep.subr.mxu0 0.0
    %2321 = vmatpush1.msra.mxu0 0.0
    %2322 = vmatprep.subr.mxu0 0.0
    %2323 = vmatpush1.msra.mxu0 0.0
    %2324 = vmatprep.subr.mxu0 0.0
    %2325 = vmatpush1.msra.mxu0 0.0
    %2326 = vmatprep.subr.mxu0 0.0
    %2327 = vmatpush1.msra.mxu0 0.0
    %2328 = vmatprep.subr.mxu0 0.0
    %2329 = vmatpush1.msra.mxu0 0.0
    %2330 = vmatprep.subr.mxu0 0.0
    %2331 = vmatpush1.msra.mxu0 0.0
    %2332 = vmatprep.subr.mxu0 0.0
    %2333 = vmatpush1.msra.mxu0 0.0
    %2334 = vmatprep.subr.mxu0 0.0
    %2335 = vmatpush1.msra.mxu0 0.0
    %2336 = vmatprep.subr.mxu0 0.0
    %2337 = vmatpush1.msra.mxu0 0.0
    %2338 = vmatprep.subr.mxu0 0.0
    %2339 = vmatpush1.msra.mxu0 0.0
    %2340 = vmatprep.subr.mxu0 0.0
    %2341 = vmatpush1.msra.mxu0 0.0
    %2342 = vmatprep.mubr.f32.mxu0 0.0
    %2343 = vmatmul.mubr.f32.gmra.mrb[0].mxu0 %v2274
    %v2344 = vpop.f32.mrb[0].mxu0
    %v2345 = vadd.f32 0.0, %v2344
    %v2346 = vpop.f32.mrb[0].mxu0
    %2347 = vdwg.mxu0
    %2348 = vrot.lane.b32.xlu0 %v1879, 112
    %v2349 = vpop.permute.xlu0 %2348
    %2350 = vrot.lane.b32.xlu0 %v1974, 112
    %v2351 = vpop.permute.xlu0 %2350
    %2352 = vrot.lane.b32.xlu0 %v1979, 112
    %v2353 = vpop.permute.xlu0 %2352
    %v2354 = vsel %vm292, %v2349, 0
    %v2356 = vsel %vm292, %v2351, 0
    %v2358 = vsel %vm292, %v2353, 0
    %2360 = vmatprep.subr.mxu0 0.0
    %2361 = vmatpush1.xpose.msra.mxu0 %v2356
    %2362 = vmatprep.subr.mxu0 0.0
    %2363 = vmatpush1.xpose.msra.mxu0 %v2358
    %2364 = vmatprep.subr.mxu0 0.0
    %2365 = vmatpush1.xpose.msra.mxu0 0.0
    %2366 = vmatprep.subr.mxu0 0.0
    %2367 = vmatpush1.xpose.msra.mxu0 0.0
    %2368 = vmatprep.subr.mxu0 0.0
    %2369 = vmatpush1.xpose.msra.mxu0 0.0
    %2370 = vmatprep.subr.mxu0 0.0
    %2371 = vmatpush1.xpose.msra.mxu0 0.0
    %2372 = vmatprep.subr.mxu0 0.0
    %2373 = vmatpush1.xpose.msra.mxu0 0.0
    %2374 = vmatprep.subr.mxu0 0.0
    %2375 = vmatpush1.xpose.msra.mxu0 0.0
    %2376 = vmatprep.subr.mxu0 0.0
    %2377 = vmatpush1.xpose.msra.mxu0 0.0
    %2378 = vmatprep.subr.mxu0 0.0
    %2379 = vmatpush1.xpose.msra.mxu0 0.0
    %2380 = vmatprep.subr.mxu0 0.0
    %2381 = vmatpush1.xpose.msra.mxu0 0.0
    %2382 = vmatprep.subr.mxu0 0.0
    %2383 = vmatpush1.xpose.msra.mxu0 0.0
    %2384 = vmatprep.subr.mxu0 0.0
    %2385 = vmatpush1.xpose.msra.mxu0 0.0
    %2386 = vmatprep.subr.mxu0 0.0
    %2387 = vmatpush1.xpose.msra.mxu0 0.0
    %2388 = vmatprep.subr.mxu0 0.0
    %2389 = vmatpush1.xpose.msra.mxu0 0.0
    %2390 = vmatprep.subr.mxu0 0.0
    %2391 = vmatpush1.xpose.msra.mxu0 0.0
    %2392 = vmatprep.subr.mxu0 0.0
    %2393 = vmatpush1.xpose.msra.mxu0 0.0
    %2394 = vmatprep.subr.mxu0 0.0
    %2395 = vmatpush1.xpose.msra.mxu0 0.0
    %2396 = vmatprep.subr.mxu0 0.0
    %2397 = vmatpush1.xpose.msra.mxu0 0.0
    %2398 = vmatprep.subr.mxu0 0.0
    %2399 = vmatpush1.xpose.msra.mxu0 0.0
    %2400 = vmatprep.subr.mxu0 0.0
    %2401 = vmatpush1.xpose.msra.mxu0 0.0
    %2402 = vmatprep.subr.mxu0 0.0
    %2403 = vmatpush1.xpose.msra.mxu0 0.0
    %2404 = vmatprep.subr.mxu0 0.0
    %2405 = vmatpush1.xpose.msra.mxu0 0.0
    %2406 = vmatprep.subr.mxu0 0.0
    %2407 = vmatpush1.xpose.msra.mxu0 0.0
    %2408 = vmatprep.subr.mxu0 0.0
    %2409 = vmatpush1.xpose.msra.mxu0 0.0
    %2410 = vmatprep.subr.mxu0 0.0
    %2411 = vmatpush1.xpose.msra.mxu0 0.0
    %2412 = vmatprep.subr.mxu0 0.0
    %2413 = vmatpush1.xpose.msra.mxu0 0.0
    %2414 = vmatprep.subr.mxu0 0.0
    %2415 = vmatpush1.xpose.msra.mxu0 0.0
    %2416 = vmatprep.subr.mxu0 0.0
    %2417 = vmatpush1.xpose.msra.mxu0 0.0
    %2418 = vmatprep.subr.mxu0 0.0
    %2419 = vmatpush1.xpose.msra.mxu0 0.0
    %2420 = vmatprep.subr.mxu0 0.0
    %2421 = vmatpush1.xpose.msra.mxu0 0.0
    %2422 = vmatprep.subr.mxu0 0.0
    %2423 = vmatpush1.xpose.msra.mxu0 0.0
    %2424 = vmatprep.mubr.f32.mxu0 0.0
    %2425 = vmatmul.mubr.f32.gmra.mrb[0].mxu0 %v2354
    %v2426 = vpop.f32.mrb[0].mxu0
    %v2427 = vadd.f32 0.0, %v2426
    %v2428 = vpop.f32.mrb[0].mxu0
    %2429 = vdwg.mxu0
    %v2430 = vmul.f32 %v2427, 0.35355338
    %v2431 = vadd.f32 %v2430, %v2077
    %v2432 = vsel %vm2080, %v2431, -inf
    %2433 = vmax.xlane.f32.xlu0 %v2432
    %v2434 = vpop.xlane.xlu0 %2433
    %v2435 = vsub.f32 %v2431, %v2434
    %v2436 = vmul.f32 %v2435, 1.442695
    %v2437 = vpow.pop %v2436
    %v2438 = vsel %vm2080, %v2437, 0.0
    %2439 = vadd.xlane.f32.xlu0 %v2438
    %v2440 = vpop.xlane.xlu0 %2439
    %v2441 = vrcp.pop %v2440
    %v2442 = vmul.f32 %v2437, %v2441
    %2443 = vrot.lane.b32.xlu0 %v1974, 80
    %v2444 = vpop.permute.xlu0 %2443
    %2445 = vrot.lane.b32.xlu0 %v1979, 80
    %v2446 = vpop.permute.xlu0 %2445
    %v2449 = vsel %vm2080, %v2442, 0
    %v2451 = vsel %vm2100, %v2446, 0
    %2453 = vmatprep.subr.mxu0 0.0
    %2454 = vmatpush1.msra.mxu0 %v2444
    %2455 = vmatprep.subr.mxu0 0.0
    %2456 = vmatpush1.msra.mxu0 %v2451
    %2457 = vmatprep.subr.mxu0 0.0
    %2458 = vmatpush1.msra.mxu0 0.0
    %2459 = vmatprep.subr.mxu0 0.0
    %2460 = vmatpush1.msra.mxu0 0.0
    %2461 = vmatprep.subr.mxu0 0.0
    %2462 = vmatpush1.msra.mxu0 0.0
    %2463 = vmatprep.subr.mxu0 0.0
    %2464 = vmatpush1.msra.mxu0 0.0
    %2465 = vmatprep.subr.mxu0 0.0
    %2466 = vmatpush1.msra.mxu0 0.0
    %2467 = vmatprep.subr.mxu0 0.0
    %2468 = vmatpush1.msra.mxu0 0.0
    %2469 = vmatprep.subr.mxu0 0.0
    %2470 = vmatpush1.msra.mxu0 0.0
    %2471 = vmatprep.subr.mxu0 0.0
    %2472 = vmatpush1.msra.mxu0 0.0
    %2473 = vmatprep.subr.mxu0 0.0
    %2474 = vmatpush1.msra.mxu0 0.0
    %2475 = vmatprep.subr.mxu0 0.0
    %2476 = vmatpush1.msra.mxu0 0.0
    %2477 = vmatprep.subr.mxu0 0.0
    %2478 = vmatpush1.msra.mxu0 0.0
    %2479 = vmatprep.subr.mxu0 0.0
    %2480 = vmatpush1.msra.mxu0 0.0
    %2481 = vmatprep.subr.mxu0 0.0
    %2482 = vmatpush1.msra.mxu0 0.0
    %2483 = vmatprep.subr.mxu0 0.0
    %2484 = vmatpush1.msra.mxu0 0.0
    %2485 = vmatprep.subr.mxu0 0.0
    %2486 = vmatpush1.msra.mxu0 0.0
    %2487 = vmatprep.subr.mxu0 0.0
    %2488 = vmatpush1.msra.mxu0 0.0
    %2489 = vmatprep.subr.mxu0 0.0
    %2490 = vmatpush1.msra.mxu0 0.0
    %2491 = vmatprep.subr.mxu0 0.0
    %2492 = vmatpush1.msra.mxu0 0.0
    %2493 = vmatprep.subr.mxu0 0.0
    %2494 = vmatpush1.msra.mxu0 0.0
    %2495 = vmatprep.subr.mxu0 0.0
    %2496 = vmatpush1.msra.mxu0 0.0
    %2497 = vmatprep.subr.mxu0 0.0
    %2498 = vmatpush1.msra.mxu0 0.0
    %2499 = vmatprep.subr.mxu0 0.0
    %2500 = vmatpush1.msra.mxu0 0.0
    %2501 = vmatprep.subr.mxu0 0.0
    %2502 = vmatpush1.msra.mxu0 0.0
    %2503 = vmatprep.subr.mxu0 0.0
    %2504 = vmatpush1.msra.mxu0 0.0
    %2505 = vmatprep.subr.mxu0 0.0
    %2506 = vmatpush1.msra.mxu0 0.0
    %2507 = vmatprep.subr.mxu0 0.0
    %2508 = vmatpush1.msra.mxu0 0.0
    %2509 = vmatprep.subr.mxu0 0.0
    %2510 = vmatpush1.msra.mxu0 0.0
    %2511 = vmatprep.subr.mxu0 0.0
    %2512 = vmatpush1.msra.mxu0 0.0
    %2513 = vmatprep.subr.mxu0 0.0
    %2514 = vmatpush1.msra.mxu0 0.0
    %2515 = vmatprep.subr.mxu0 0.0
    %2516 = vmatpush1.msra.mxu0 0.0
    %2517 = vmatprep.mubr.f32.mxu0 0.0
    %2518 = vmatmul.mubr.f32.gmra.mrb[0].mxu0 %v2449
    %v2519 = vpop.f32.mrb[0].mxu0
    %v2520 = vadd.f32 0.0, %v2519
    %v2521 = vpop.f32.mrb[0].mxu0
    %2522 = vdwg.mxu0
    %2523 = vrot.lane.b32.xlu0 %v1879, 104
    %v2524 = vpop.permute.xlu0 %2523
    %2525 = vrot.lane.b32.xlu0 %v1974, 104
    %v2526 = vpop.permute.xlu0 %2525
    %2527 = vrot.lane.b32.xlu0 %v1979, 104
    %v2528 = vpop.permute.xlu0 %2527
    %v2529 = vsel %vm292, %v2524, 0
    %v2531 = vsel %vm292, %v2526, 0
    %v2533 = vsel %vm292, %v2528, 0
    %2535 = vmatprep.subr.mxu0 0.0
    %2536 = vmatpush1.xpose.msra.mxu0 %v2531
    %2537 = vmatprep.subr.mxu0 0.0
    %2538 = vmatpush1.xpose.msra.mxu0 %v2533
    %2539 = vmatprep.subr.mxu0 0.0
    %2540 = vmatpush1.xpose.msra.mxu0 0.0
    %2541 = vmatprep.subr.mxu0 0.0
    %2542 = vmatpush1.xpose.msra.mxu0 0.0
    %2543 = vmatprep.subr.mxu0 0.0
    %2544 = vmatpush1.xpose.msra.mxu0 0.0
    %2545 = vmatprep.subr.mxu0 0.0
    %2546 = vmatpush1.xpose.msra.mxu0 0.0
    %2547 = vmatprep.subr.mxu0 0.0
    %2548 = vmatpush1.xpose.msra.mxu0 0.0
    %2549 = vmatprep.subr.mxu0 0.0
    %2550 = vmatpush1.xpose.msra.mxu0 0.0
    %2551 = vmatprep.subr.mxu0 0.0
    %2552 = vmatpush1.xpose.msra.mxu0 0.0
    %2553 = vmatprep.subr.mxu0 0.0
    %2554 = vmatpush1.xpose.msra.mxu0 0.0
    %2555 = vmatprep.subr.mxu0 0.0
    %2556 = vmatpush1.xpose.msra.mxu0 0.0
    %2557 = vmatprep.subr.mxu0 0.0
    %2558 = vmatpush1.xpose.msra.mxu0 0.0
    %2559 = vmatprep.subr.mxu0 0.0
    %2560 = vmatpush1.xpose.msra.mxu0 0.0
    %2561 = vmatprep.subr.mxu0 0.0
    %2562 = vmatpush1.xpose.msra.mxu0 0.0
    %2563 = vmatprep.subr.mxu0 0.0
    %2564 = vmatpush1.xpose.msra.mxu0 0.0
    %2565 = vmatprep.subr.mxu0 0.0
    %2566 = vmatpush1.xpose.msra.mxu0 0.0
    %2567 = vmatprep.subr.mxu0 0.0
    %2568 = vmatpush1.xpose.msra.mxu0 0.0
    %2569 = vmatprep.subr.mxu0 0.0
    %2570 = vmatpush1.xpose.msra.mxu0 0.0
    %2571 = vmatprep.subr.mxu0 0.0
    %2572 = vmatpush1.xpose.msra.mxu0 0.0
    %2573 = vmatprep.subr.mxu0 0.0
    %2574 = vmatpush1.xpose.msra.mxu0 0.0
    %2575 = vmatprep.subr.mxu0 0.0
    %2576 = vmatpush1.xpose.msra.mxu0 0.0
    %2577 = vmatprep.subr.mxu0 0.0
    %2578 = vmatpush1.xpose.msra.mxu0 0.0
    %2579 = vmatprep.subr.mxu0 0.0
    %2580 = vmatpush1.xpose.msra.mxu0 0.0
    %2581 = vmatprep.subr.mxu0 0.0
    %2582 = vmatpush1.xpose.msra.mxu0 0.0
    %2583 = vmatprep.subr.mxu0 0.0
    %2584 = vmatpush1.xpose.msra.mxu0 0.0
    %2585 = vmatprep.subr.mxu0 0.0
    %2586 = vmatpush1.xpose.msra.mxu0 0.0
    %2587 = vmatprep.subr.mxu0 0.0
    %2588 = vmatpush1.xpose.msra.mxu0 0.0
    %2589 = vmatprep.subr.mxu0 0.0
    %2590 = vmatpush1.xpose.msra.mxu0 0.0
    %2591 = vmatprep.subr.mxu0 0.0
    %2592 = vmatpush1.xpose.msra.mxu0 0.0
    %2593 = vmatprep.subr.mxu0 0.0
    %2594 = vmatpush1.xpose.msra.mxu0 0.0
    %2595 = vmatprep.subr.mxu0 0.0
    %2596 = vmatpush1.xpose.msra.mxu0 0.0
    %2597 = vmatprep.subr.mxu0 0.0
    %2598 = vmatpush1.xpose.msra.mxu0 0.0
    %2599 = vmatprep.mubr.f32.mxu0 0.0
    %2600 = vmatmul.mubr.f32.gmra.mrb[0].mxu0 %v2529
    %v2601 = vpop.f32.mrb[0].mxu0
    %v2602 = vadd.f32 0.0, %v2601
    %v2603 = vpop.f32.mrb[0].mxu0
    %2604 = vdwg.mxu0
    %v2605 = vmul.f32 %v2602, 0.35355338
    %v2606 = vadd.f32 %v2605, %v2077
    %v2607 = vsel %vm2080, %v2606, -inf
    %2608 = vmax.xlane.f32.xlu0 %v2607
    %v2609 = vpop.xlane.xlu0 %2608
    %v2610 = vsub.f32 %v2606, %v2609
    %v2611 = vmul.f32 %v2610, 1.442695
    %v2612 = vpow.pop %v2611
    %v2613 = vsel %vm2080, %v2612, 0.0
    %2614 = vadd.xlane.f32.xlu0 %v2613
    %v2615 = vpop.xlane.xlu0 %2614
    %v2616 = vrcp.pop %v2615
    %v2617 = vmul.f32 %v2612, %v2616
    %2618 = vrot.lane.b32.xlu0 %v1974, 72
    %v2619 = vpop.permute.xlu0 %2618
    %2620 = vrot.lane.b32.xlu0 %v1979, 72
    %v2621 = vpop.permute.xlu0 %2620
    %v2624 = vsel %vm2080, %v2617, 0
    %v2626 = vsel %vm2100, %v2621, 0
    %2628 = vmatprep.subr.mxu0 0.0
    %2629 = vmatpush1.msra.mxu0 %v2619
    %2630 = vmatprep.subr.mxu0 0.0
    %2631 = vmatpush1.msra.mxu0 %v2626
    %2632 = vmatprep.subr.mxu0 0.0
    %2633 = vmatpush1.msra.mxu0 0.0
    %2634 = vmatprep.subr.mxu0 0.0
    %2635 = vmatpush1.msra.mxu0 0.0
    %2636 = vmatprep.subr.mxu0 0.0
    %2637 = vmatpush1.msra.mxu0 0.0
    %2638 = vmatprep.subr.mxu0 0.0
    %2639 = vmatpush1.msra.mxu0 0.0
    %2640 = vmatprep.subr.mxu0 0.0
    %2641 = vmatpush1.msra.mxu0 0.0
    %2642 = vmatprep.subr.mxu0 0.0
    %2643 = vmatpush1.msra.mxu0 0.0
    %2644 = vmatprep.subr.mxu0 0.0
    %2645 = vmatpush1.msra.mxu0 0.0
    %2646 = vmatprep.subr.mxu0 0.0
    %2647 = vmatpush1.msra.mxu0 0.0
    %2648 = vmatprep.subr.mxu0 0.0
    %2649 = vmatpush1.msra.mxu0 0.0
    %2650 = vmatprep.subr.mxu0 0.0
    %2651 = vmatpush1.msra.mxu0 0.0
    %2652 = vmatprep.subr.mxu0 0.0
    %2653 = vmatpush1.msra.mxu0 0.0
    %2654 = vmatprep.subr.mxu0 0.0
    %2655 = vmatpush1.msra.mxu0 0.0
    %2656 = vmatprep.subr.mxu0 0.0
    %2657 = vmatpush1.msra.mxu0 0.0
    %2658 = vmatprep.subr.mxu0 0.0
    %2659 = vmatpush1.msra.mxu0 0.0
    %2660 = vmatprep.subr.mxu0 0.0
    %2661 = vmatpush1.msra.mxu0 0.0
    %2662 = vmatprep.subr.mxu0 0.0
    %2663 = vmatpush1.msra.mxu0 0.0
    %2664 = vmatprep.subr.mxu0 0.0
    %2665 = vmatpush1.msra.mxu0 0.0
    %2666 = vmatprep.subr.mxu0 0.0
    %2667 = vmatpush1.msra.mxu0 0.0
    %2668 = vmatprep.subr.mxu0 0.0
    %2669 = vmatpush1.msra.mxu0 0.0
    %2670 = vmatprep.subr.mxu0 0.0
    %2671 = vmatpush1.msra.mxu0 0.0
    %2672 = vmatprep.subr.mxu0 0.0
    %2673 = vmatpush1.msra.mxu0 0.0
    %2674 = vmatprep.subr.mxu0 0.0
    %2675 = vmatpush1.msra.mxu0 0.0
    %2676 = vmatprep.subr.mxu0 0.0
    %2677 = vmatpush1.msra.mxu0 0.0
    %2678 = vmatprep.subr.mxu0 0.0
    %2679 = vmatpush1.msra.mxu0 0.0
    %2680 = vmatprep.subr.mxu0 0.0
    %2681 = vmatpush1.msra.mxu0 0.0
    %2682 = vmatprep.subr.mxu0 0.0
    %2683 = vmatpush1.msra.mxu0 0.0
    %2684 = vmatprep.subr.mxu0 0.0
    %2685 = vmatpush1.msra.mxu0 0.0
    %2686 = vmatprep.subr.mxu0 0.0
    %2687 = vmatpush1.msra.mxu0 0.0
    %2688 = vmatprep.subr.mxu0 0.0
    %2689 = vmatpush1.msra.mxu0 0.0
    %2690 = vmatprep.subr.mxu0 0.0
    %2691 = vmatpush1.msra.mxu0 0.0
    %2692 = vmatprep.mubr.f32.mxu0 0.0
    %2693 = vmatmul.mubr.f32.gmra.mrb[0].mxu0 %v2624
    %v2694 = vpop.f32.mrb[0].mxu0
    %v2695 = vadd.f32 0.0, %v2694
    %v2696 = vpop.f32.mrb[0].mxu0
    %2697 = vdwg.mxu0
    %2699 = vrot.lane.b32.xlu0 %v2345, 8
    %v2700 = vpop.permute.xlu0 %2699
    %2703 = vrot.lane.b32.xlu0 %v2520, 16
    %v2704 = vpop.permute.xlu0 %2703
    %2707 = vrot.lane.b32.xlu0 %v2695, 24
    %v2708 = vpop.permute.xlu0 %2707
    %v2710 = vsel %vm292, %v2170, %v2700
    %v2711 = vsel %vm970, %v2710, %v2704
    %v2712 = vsel %vm972, %v2711, %v2708
    %2713 = vst.msk [vmem:[#allocation18] sm:$0xff] %vm2080, %v2091
    %2714 = vst.msk [vmem:[#allocation18 + $0x8] sm:$0xff] %vm2080, %v2267
    %2715 = vst.msk [vmem:[#allocation18 + $0x10] sm:$0xff] %vm2080, %v2442
    %2716 = vst.msk [vmem:[#allocation18 + $0x18] sm:$0xff] %vm2080, %v2617
    %vm2718 = vcmask 1045504
    %v2719 = vrot.slane %v1979, 2
    %v2720 = vrot.slane %v1984, 2
    %v2721 = vsel %vm2718, %v2719, %v2720
    %v2723 = vsel %vm292, %v1884, 0
    %v2725 = vsel %vm292, %v2721, 0
    %v2727 = vsel %vm292, %v2720, 0
    %2729 = vmatprep.subr.mxu0 0.0
    %2730 = vmatpush1.xpose.msra.mxu0 %v2725
    %2731 = vmatprep.subr.mxu0 0.0
    %2732 = vmatpush1.xpose.msra.mxu0 %v2727
    %2733 = vmatprep.subr.mxu0 0.0
    %2734 = vmatpush1.xpose.msra.mxu0 0.0
    %2735 = vmatprep.subr.mxu0 0.0
    %2736 = vmatpush1.xpose.msra.mxu0 0.0
    %2737 = vmatprep.subr.mxu0 0.0
    %2738 = vmatpush1.xpose.msra.mxu0 0.0
    %2739 = vmatprep.subr.mxu0 0.0
    %2740 = vmatpush1.xpose.msra.mxu0 0.0
    %2741 = vmatprep.subr.mxu0 0.0
    %2742 = vmatpush1.xpose.msra.mxu0 0.0
    %2743 = vmatprep.subr.mxu0 0.0
    %2744 = vmatpush1.xpose.msra.mxu0 0.0
    %2745 = vmatprep.subr.mxu0 0.0
    %2746 = vmatpush1.xpose.msra.mxu0 0.0
    %2747 = vmatprep.subr.mxu0 0.0
    %2748 = vmatpush1.xpose.msra.mxu0 0.0
    %2749 = vmatprep.subr.mxu0 0.0
    %2750 = vmatpush1.xpose.msra.mxu0 0.0
    %2751 = vmatprep.subr.mxu0 0.0
    %2752 = vmatpush1.xpose.msra.mxu0 0.0
    %2753 = vmatprep.subr.mxu0 0.0
    %2754 = vmatpush1.xpose.msra.mxu0 0.0
    %2755 = vmatprep.subr.mxu0 0.0
    %2756 = vmatpush1.xpose.msra.mxu0 0.0
    %2757 = vmatprep.subr.mxu0 0.0
    %2758 = vmatpush1.xpose.msra.mxu0 0.0
    %2759 = vmatprep.subr.mxu0 0.0
    %2760 = vmatpush1.xpose.msra.mxu0 0.0
    %2761 = vmatprep.subr.mxu0 0.0
    %2762 = vmatpush1.xpose.msra.mxu0 0.0
    %2763 = vmatprep.subr.mxu0 0.0
    %2764 = vmatpush1.xpose.msra.mxu0 0.0
    %2765 = vmatprep.subr.mxu0 0.0
    %2766 = vmatpush1.xpose.msra.mxu0 0.0
    %2767 = vmatprep.subr.mxu0 0.0
    %2768 = vmatpush1.xpose.msra.mxu0 0.0
    %2769 = vmatprep.subr.mxu0 0.0
    %2770 = vmatpush1.xpose.msra.mxu0 0.0
    %2771 = vmatprep.subr.mxu0 0.0
    %2772 = vmatpush1.xpose.msra.mxu0 0.0
    %2773 = vmatprep.subr.mxu0 0.0
    %2774 = vmatpush1.xpose.msra.mxu0 0.0
    %2775 = vmatprep.subr.mxu0 0.0
    %2776 = vmatpush1.xpose.msra.mxu0 0.0
    %2777 = vmatprep.subr.mxu0 0.0
    %2778 = vmatpush1.xpose.msra.mxu0 0.0
    %2779 = vmatprep.subr.mxu0 0.0
    %2780 = vmatpush1.xpose.msra.mxu0 0.0
    %2781 = vmatprep.subr.mxu0 0.0
    %2782 = vmatpush1.xpose.msra.mxu0 0.0
    %2783 = vmatprep.subr.mxu0 0.0
    %2784 = vmatpush1.xpose.msra.mxu0 0.0
    %2785 = vmatprep.subr.mxu0 0.0
    %2786 = vmatpush1.xpose.msra.mxu0 0.0
    %2787 = vmatprep.subr.mxu0 0.0
    %2788 = vmatpush1.xpose.msra.mxu0 0.0
    %2789 = vmatprep.subr.mxu0 0.0
    %2790 = vmatpush1.xpose.msra.mxu0 0.0
    %2791 = vmatprep.subr.mxu0 0.0
    %2792 = vmatpush1.xpose.msra.mxu0 0.0
    %2793 = vmatprep.mubr.f32.mxu0 0.0
    %2794 = vmatmul.mubr.f32.gmra.mrb[0].mxu0 %v2723
    %v2795 = vpop.f32.mrb[0].mxu0
    %v2796 = vadd.f32 0.0, %v2795
    %v2797 = vpop.f32.mrb[0].mxu0
    %2798 = vdwg.mxu0
    %v2799 = vmul.f32 %v2796, 0.35355338
    %v2801 = vlaneseq
    %v2802 = vshrl.u32 %v2801, 7
    %v2803 = vsub.s32 0, %v2802
    %v2804 = vrot.slane %v1992, %v2803
    %v2806 = vadd.f32 %v2799, %v2804
    %v2807 = vsel %vm2080, %v2806, -inf
    %2808 = vmax.xlane.f32.xlu0 %v2807
    %v2809 = vpop.xlane.xlu0 %2808
    %v2810 = vsub.f32 %v2806, %v2809
    %v2811 = vmul.f32 %v2810, 1.442695
    %v2812 = vpow.pop %v2811
    %v2813 = vsel %vm2080, %v2812, 0.0
    %2814 = vadd.xlane.f32.xlu0 %v2813
    %v2815 = vpop.xlane.xlu0 %2814
    %v2816 = vrcp.pop %v2815
    %v2817 = vmul.f32 %v2812, %v2816
    %2818 = vrot.lane.b32.xlu0 %v2721, 96
    %v2819 = vpop.permute.xlu0 %2818
    %2820 = vrot.lane.b32.xlu0 %v2720, 96
    %v2821 = vpop.permute.xlu0 %2820
    %v2824 = vsel %vm2080, %v2817, 0
    %v2826 = vsel %vm2100, %v2821, 0
    %2828 = vmatprep.subr.mxu0 0.0
    %2829 = vmatpush1.msra.mxu0 %v2819
    %2830 = vmatprep.subr.mxu0 0.0
    %2831 = vmatpush1.msra.mxu0 %v2826
    %2832 = vmatprep.subr.mxu0 0.0
    %2833 = vmatpush1.msra.mxu0 0.0
    %2834 = vmatprep.subr.mxu0 0.0
    %2835 = vmatpush1.msra.mxu0 0.0
    %2836 = vmatprep.subr.mxu0 0.0
    %2837 = vmatpush1.msra.mxu0 0.0
    %2838 = vmatprep.subr.mxu0 0.0
    %2839 = vmatpush1.msra.mxu0 0.0
    %2840 = vmatprep.subr.mxu0 0.0
    %2841 = vmatpush1.msra.mxu0 0.0
    %2842 = vmatprep.subr.mxu0 0.0
    %2843 = vmatpush1.msra.mxu0 0.0
    %2844 = vmatprep.subr.mxu0 0.0
    %2845 = vmatpush1.msra.mxu0 0.0
    %2846 = vmatprep.subr.mxu0 0.0
    %2847 = vmatpush1.msra.mxu0 0.0
    %2848 = vmatprep.subr.mxu0 0.0
    %2849 = vmatpush1.msra.mxu0 0.0
    %2850 = vmatprep.subr.mxu0 0.0
    %2851 = vmatpush1.msra.mxu0 0.0
    %2852 = vmatprep.subr.mxu0 0.0
    %2853 = vmatpush1.msra.mxu0 0.0
    %2854 = vmatprep.subr.mxu0 0.0
    %2855 = vmatpush1.msra.mxu0 0.0
    %2856 = vmatprep.subr.mxu0 0.0
    %2857 = vmatpush1.msra.mxu0 0.0
    %2858 = vmatprep.subr.mxu0 0.0
    %2859 = vmatpush1.msra.mxu0 0.0
    %2860 = vmatprep.subr.mxu0 0.0
    %2861 = vmatpush1.msra.mxu0 0.0
    %2862 = vmatprep.subr.mxu0 0.0
    %2863 = vmatpush1.msra.mxu0 0.0
    %2864 = vmatprep.subr.mxu0 0.0
    %2865 = vmatpush1.msra.mxu0 0.0
    %2866 = vmatprep.subr.mxu0 0.0
    %2867 = vmatpush1.msra.mxu0 0.0
    %2868 = vmatprep.subr.mxu0 0.0
    %2869 = vmatpush1.msra.mxu0 0.0
    %2870 = vmatprep.subr.mxu0 0.0
    %2871 = vmatpush1.msra.mxu0 0.0
    %2872 = vmatprep.subr.mxu0 0.0
    %2873 = vmatpush1.msra.mxu0 0.0
    %2874 = vmatprep.subr.mxu0 0.0
    %2875 = vmatpush1.msra.mxu0 0.0
    %2876 = vmatprep.subr.mxu0 0.0
    %2877 = vmatpush1.msra.mxu0 0.0
    %2878 = vmatprep.subr.mxu0 0.0
    %2879 = vmatpush1.msra.mxu0 0.0
    %2880 = vmatprep.subr.mxu0 0.0
    %2881 = vmatpush1.msra.mxu0 0.0
    %2882 = vmatprep.subr.mxu0 0.0
    %2883 = vmatpush1.msra.mxu0 0.0
    %2884 = vmatprep.subr.mxu0 0.0
    %2885 = vmatpush1.msra.mxu0 0.0
    %2886 = vmatprep.subr.mxu0 0.0
    %2887 = vmatpush1.msra.mxu0 0.0
    %2888 = vmatprep.subr.mxu0 0.0
    %2889 = vmatpush1.msra.mxu0 0.0
    %2890 = vmatprep.subr.mxu0 0.0
    %2891 = vmatpush1.msra.mxu0 0.0
    %2892 = vmatprep.mubr.f32.mxu0 0.0
    %2893 = vmatmul.mubr.f32.gmra.mrb[0].mxu0 %v2824
    %v2894 = vpop.f32.mrb[0].mxu0
    %v2895 = vadd.f32 0.0, %v2894
    %v2896 = vpop.f32.mrb[0].mxu0
    %2897 = vdwg.mxu0
    %2898 = vrot.lane.b32.xlu0 %v1884, 120
    %v2899 = vpop.permute.xlu0 %2898
    %2900 = vrot.lane.b32.xlu0 %v2721, 120
    %v2901 = vpop.permute.xlu0 %2900
    %2902 = vrot.lane.b32.xlu0 %v2720, 120
    %v2903 = vpop.permute.xlu0 %2902
    %v2904 = vsel %vm292, %v2899, 0
    %v2906 = vsel %vm292, %v2901, 0
    %v2908 = vsel %vm292, %v2903, 0
    %2910 = vmatprep.subr.mxu0 0.0
    %2911 = vmatpush1.xpose.msra.mxu0 %v2906
    %2912 = vmatprep.subr.mxu0 0.0
    %2913 = vmatpush1.xpose.msra.mxu0 %v2908
    %2914 = vmatprep.subr.mxu0 0.0
    %2915 = vmatpush1.xpose.msra.mxu0 0.0
    %2916 = vmatprep.subr.mxu0 0.0
    %2917 = vmatpush1.xpose.msra.mxu0 0.0
    %2918 = vmatprep.subr.mxu0 0.0
    %2919 = vmatpush1.xpose.msra.mxu0 0.0
    %2920 = vmatprep.subr.mxu0 0.0
    %2921 = vmatpush1.xpose.msra.mxu0 0.0
    %2922 = vmatprep.subr.mxu0 0.0
    %2923 = vmatpush1.xpose.msra.mxu0 0.0
    %2924 = vmatprep.subr.mxu0 0.0
    %2925 = vmatpush1.xpose.msra.mxu0 0.0
    %2926 = vmatprep.subr.mxu0 0.0
    %2927 = vmatpush1.xpose.msra.mxu0 0.0
    %2928 = vmatprep.subr.mxu0 0.0
    %2929 = vmatpush1.xpose.msra.mxu0 0.0
    %2930 = vmatprep.subr.mxu0 0.0
    %2931 = vmatpush1.xpose.msra.mxu0 0.0
    %2932 = vmatprep.subr.mxu0 0.0
    %2933 = vmatpush1.xpose.msra.mxu0 0.0
    %2934 = vmatprep.subr.mxu0 0.0
    %2935 = vmatpush1.xpose.msra.mxu0 0.0
    %2936 = vmatprep.subr.mxu0 0.0
    %2937 = vmatpush1.xpose.msra.mxu0 0.0
    %2938 = vmatprep.subr.mxu0 0.0
    %2939 = vmatpush1.xpose.msra.mxu0 0.0
    %2940 = vmatprep.subr.mxu0 0.0
    %2941 = vmatpush1.xpose.msra.mxu0 0.0
    %2942 = vmatprep.subr.mxu0 0.0
    %2943 = vmatpush1.xpose.msra.mxu0 0.0
    %2944 = vmatprep.subr.mxu0 0.0
    %2945 = vmatpush1.xpose.msra.mxu0 0.0
    %2946 = vmatprep.subr.mxu0 0.0
    %2947 = vmatpush1.xpose.msra.mxu0 0.0
    %2948 = vmatprep.subr.mxu0 0.0
    %2949 = vmatpush1.xpose.msra.mxu0 0.0
    %2950 = vmatprep.subr.mxu0 0.0
    %2951 = vmatpush1.xpose.msra.mxu0 0.0
    %2952 = vmatprep.subr.mxu0 0.0
    %2953 = vmatpush1.xpose.msra.mxu0 0.0
    %2954 = vmatprep.subr.mxu0 0.0
    %2955 = vmatpush1.xpose.msra.mxu0 0.0
    %2956 = vmatprep.subr.mxu0 0.0
    %2957 = vmatpush1.xpose.msra.mxu0 0.0
    %2958 = vmatprep.subr.mxu0 0.0
    %2959 = vmatpush1.xpose.msra.mxu0 0.0
    %2960 = vmatprep.subr.mxu0 0.0
    %2961 = vmatpush1.xpose.msra.mxu0 0.0
    %2962 = vmatprep.subr.mxu0 0.0
    %2963 = vmatpush1.xpose.msra.mxu0 0.0
    %2964 = vmatprep.subr.mxu0 0.0
    %2965 = vmatpush1.xpose.msra.mxu0 0.0
    %2966 = vmatprep.subr.mxu0 0.0
    %2967 = vmatpush1.xpose.msra.mxu0 0.0
    %2968 = vmatprep.subr.mxu0 0.0
    %2969 = vmatpush1.xpose.msra.mxu0 0.0
    %2970 = vmatprep.subr.mxu0 0.0
    %2971 = vmatpush1.xpose.msra.mxu0 0.0
    %2972 = vmatprep.subr.mxu0 0.0
    %2973 = vmatpush1.xpose.msra.mxu0 0.0
    %2974 = vmatprep.mubr.f32.mxu0 0.0
    %2975 = vmatmul.mubr.f32.gmra.mrb[0].mxu0 %v2904
    %v2976 = vpop.f32.mrb[0].mxu0
    %v2977 = vadd.f32 0.0, %v2976
    %v2978 = vpop.f32.mrb[0].mxu0
    %2979 = vdwg.mxu0
    %v2980 = vmul.f32 %v2977, 0.35355338
    %v2981 = vadd.f32 %v2980, %v2804
    %v2982 = vsel %vm2080, %v2981, -inf
    %2983 = vmax.xlane.f32.xlu0 %v2982
    %v2984 = vpop.xlane.xlu0 %2983
    %v2985 = vsub.f32 %v2981, %v2984
    %v2986 = vmul.f32 %v2985, 1.442695
    %v2987 = vpow.pop %v2986
    %v2988 = vsel %vm2080, %v2987, 0.0
    %2989 = vadd.xlane.f32.xlu0 %v2988
    %v2990 = vpop.xlane.xlu0 %2989
    %v2991 = vrcp.pop %v2990
    %v2992 = vmul.f32 %v2987, %v2991
    %2993 = vrot.lane.b32.xlu0 %v2721, 88
    %v2994 = vpop.permute.xlu0 %2993
    %2995 = vrot.lane.b32.xlu0 %v2720, 88
    %v2996 = vpop.permute.xlu0 %2995
    %v2999 = vsel %vm2080, %v2992, 0
    %v3001 = vsel %vm2100, %v2996, 0
    %3003 = vmatprep.subr.mxu0 0.0
    %3004 = vmatpush1.msra.mxu0 %v2994
    %3005 = vmatprep.subr.mxu0 0.0
    %3006 = vmatpush1.msra.mxu0 %v3001
    %3007 = vmatprep.subr.mxu0 0.0
    %3008 = vmatpush1.msra.mxu0 0.0
    %3009 = vmatprep.subr.mxu0 0.0
    %3010 = vmatpush1.msra.mxu0 0.0
    %3011 = vmatprep.subr.mxu0 0.0
    %3012 = vmatpush1.msra.mxu0 0.0
    %3013 = vmatprep.subr.mxu0 0.0
    %3014 = vmatpush1.msra.mxu0 0.0
    %3015 = vmatprep.subr.mxu0 0.0
    %3016 = vmatpush1.msra.mxu0 0.0
    %3017 = vmatprep.subr.mxu0 0.0
    %3018 = vmatpush1.msra.mxu0 0.0
    %3019 = vmatprep.subr.mxu0 0.0
    %3020 = vmatpush1.msra.mxu0 0.0
    %3021 = vmatprep.subr.mxu0 0.0
    %3022 = vmatpush1.msra.mxu0 0.0
    %3023 = vmatprep.subr.mxu0 0.0
    %3024 = vmatpush1.msra.mxu0 0.0
    %3025 = vmatprep.subr.mxu0 0.0
    %3026 = vmatpush1.msra.mxu0 0.0
    %3027 = vmatprep.subr.mxu0 0.0
    %3028 = vmatpush1.msra.mxu0 0.0
    %3029 = vmatprep.subr.mxu0 0.0
    %3030 = vmatpush1.msra.mxu0 0.0
    %3031 = vmatprep.subr.mxu0 0.0
    %3032 = vmatpush1.msra.mxu0 0.0
    %3033 = vmatprep.subr.mxu0 0.0
    %3034 = vmatpush1.msra.mxu0 0.0
    %3035 = vmatprep.subr.mxu0 0.0
    %3036 = vmatpush1.msra.mxu0 0.0
    %3037 = vmatprep.subr.mxu0 0.0
    %3038 = vmatpush1.msra.mxu0 0.0
    %3039 = vmatprep.subr.mxu0 0.0
    %3040 = vmatpush1.msra.mxu0 0.0
    %3041 = vmatprep.subr.mxu0 0.0
    %3042 = vmatpush1.msra.mxu0 0.0
    %3043 = vmatprep.subr.mxu0 0.0
    %3044 = vmatpush1.msra.mxu0 0.0
    %3045 = vmatprep.subr.mxu0 0.0
    %3046 = vmatpush1.msra.mxu0 0.0
    %3047 = vmatprep.subr.mxu0 0.0
    %3048 = vmatpush1.msra.mxu0 0.0
    %3049 = vmatprep.subr.mxu0 0.0
    %3050 = vmatpush1.msra.mxu0 0.0
    %3051 = vmatprep.subr.mxu0 0.0
    %3052 = vmatpush1.msra.mxu0 0.0
    %3053 = vmatprep.subr.mxu0 0.0
    %3054 = vmatpush1.msra.mxu0 0.0
    %3055 = vmatprep.subr.mxu0 0.0
    %3056 = vmatpush1.msra.mxu0 0.0
    %3057 = vmatprep.subr.mxu0 0.0
    %3058 = vmatpush1.msra.mxu0 0.0
    %3059 = vmatprep.subr.mxu0 0.0
    %3060 = vmatpush1.msra.mxu0 0.0
    %3061 = vmatprep.subr.mxu0 0.0
    %3062 = vmatpush1.msra.mxu0 0.0
    %3063 = vmatprep.subr.mxu0 0.0
    %3064 = vmatpush1.msra.mxu0 0.0
    %3065 = vmatprep.subr.mxu0 0.0
    %3066 = vmatpush1.msra.mxu0 0.0
    %3067 = vmatprep.mubr.f32.mxu0 0.0
    %3068 = vmatmul.mubr.f32.gmra.mrb[0].mxu0 %v2999
    %v3069 = vpop.f32.mrb[0].mxu0
    %v3070 = vadd.f32 0.0, %v3069
    %v3071 = vpop.f32.mrb[0].mxu0
    %3072 = vdwg.mxu0
    %3073 = vrot.lane.b32.xlu0 %v1884, 112
    %v3074 = vpop.permute.xlu0 %3073
    %3075 = vrot.lane.b32.xlu0 %v2721, 112
    %v3076 = vpop.permute.xlu0 %3075
    %3077 = vrot.lane.b32.xlu0 %v2720, 112
    %v3078 = vpop.permute.xlu0 %3077
    %v3079 = vsel %vm292, %v3074, 0
    %v3081 = vsel %vm292, %v3076, 0
    %v3083 = vsel %vm292, %v3078, 0
    %3085 = vmatprep.subr.mxu0 0.0
    %3086 = vmatpush1.xpose.msra.mxu0 %v3081
    %3087 = vmatprep.subr.mxu0 0.0
    %3088 = vmatpush1.xpose.msra.mxu0 %v3083
    %3089 = vmatprep.subr.mxu0 0.0
    %3090 = vmatpush1.xpose.msra.mxu0 0.0
    %3091 = vmatprep.subr.mxu0 0.0
    %3092 = vmatpush1.xpose.msra.mxu0 0.0
    %3093 = vmatprep.subr.mxu0 0.0
    %3094 = vmatpush1.xpose.msra.mxu0 0.0
    %3095 = vmatprep.subr.mxu0 0.0
    %3096 = vmatpush1.xpose.msra.mxu0 0.0
    %3097 = vmatprep.subr.mxu0 0.0
    %3098 = vmatpush1.xpose.msra.mxu0 0.0
    %3099 = vmatprep.subr.mxu0 0.0
    %3100 = vmatpush1.xpose.msra.mxu0 0.0
    %3101 = vmatprep.subr.mxu0 0.0
    %3102 = vmatpush1.xpose.msra.mxu0 0.0
    %3103 = vmatprep.subr.mxu0 0.0
    %3104 = vmatpush1.xpose.msra.mxu0 0.0
    %3105 = vmatprep.subr.mxu0 0.0
    %3106 = vmatpush1.xpose.msra.mxu0 0.0
    %3107 = vmatprep.subr.mxu0 0.0
    %3108 = vmatpush1.xpose.msra.mxu0 0.0
    %3109 = vmatprep.subr.mxu0 0.0
    %3110 = vmatpush1.xpose.msra.mxu0 0.0
    %3111 = vmatprep.subr.mxu0 0.0
    %3112 = vmatpush1.xpose.msra.mxu0 0.0
    %3113 = vmatprep.subr.mxu0 0.0
    %3114 = vmatpush1.xpose.msra.mxu0 0.0
    %3115 = vmatprep.subr.mxu0 0.0
    %3116 = vmatpush1.xpose.msra.mxu0 0.0
    %3117 = vmatprep.subr.mxu0 0.0
    %3118 = vmatpush1.xpose.msra.mxu0 0.0
    %3119 = vmatprep.subr.mxu0 0.0
    %3120 = vmatpush1.xpose.msra.mxu0 0.0
    %3121 = vmatprep.subr.mxu0 0.0
    %3122 = vmatpush1.xpose.msra.mxu0 0.0
    %3123 = vmatprep.subr.mxu0 0.0
    %3124 = vmatpush1.xpose.msra.mxu0 0.0
    %3125 = vmatprep.subr.mxu0 0.0
    %3126 = vmatpush1.xpose.msra.mxu0 0.0
    %3127 = vmatprep.subr.mxu0 0.0
    %3128 = vmatpush1.xpose.msra.mxu0 0.0
    %3129 = vmatprep.subr.mxu0 0.0
    %3130 = vmatpush1.xpose.msra.mxu0 0.0
    %3131 = vmatprep.subr.mxu0 0.0
    %3132 = vmatpush1.xpose.msra.mxu0 0.0
    %3133 = vmatprep.subr.mxu0 0.0
    %3134 = vmatpush1.xpose.msra.mxu0 0.0
    %3135 = vmatprep.subr.mxu0 0.0
    %3136 = vmatpush1.xpose.msra.mxu0 0.0
    %3137 = vmatprep.subr.mxu0 0.0
    %3138 = vmatpush1.xpose.msra.mxu0 0.0
    %3139 = vmatprep.subr.mxu0 0.0
    %3140 = vmatpush1.xpose.msra.mxu0 0.0
    %3141 = vmatprep.subr.mxu0 0.0
    %3142 = vmatpush1.xpose.msra.mxu0 0.0
    %3143 = vmatprep.subr.mxu0 0.0
    %3144 = vmatpush1.xpose.msra.mxu0 0.0
    %3145 = vmatprep.subr.mxu0 0.0
    %3146 = vmatpush1.xpose.msra.mxu0 0.0
    %3147 = vmatprep.subr.mxu0 0.0
    %3148 = vmatpush1.xpose.msra.mxu0 0.0
    %3149 = vmatprep.mubr.f32.mxu0 0.0
    %3150 = vmatmul.mubr.f32.gmra.mrb[0].mxu0 %v3079
    %v3151 = vpop.f32.mrb[0].mxu0
    %v3152 = vadd.f32 0.0, %v3151
    %v3153 = vpop.f32.mrb[0].mxu0
    %3154 = vdwg.mxu0
    %v3155 = vmul.f32 %v3152, 0.35355338
    %v3156 = vadd.f32 %v3155, %v2804
    %v3157 = vsel %vm2080, %v3156, -inf
    %3158 = vmax.xlane.f32.xlu0 %v3157
    %v3159 = vpop.xlane.xlu0 %3158
    %v3160 = vsub.f32 %v3156, %v3159
    %v3161 = vmul.f32 %v3160, 1.442695
    %v3162 = vpow.pop %v3161
    %v3163 = vsel %vm2080, %v3162, 0.0
    %3164 = vadd.xlane.f32.xlu0 %v3163
    %v3165 = vpop.xlane.xlu0 %3164
    %v3166 = vrcp.pop %v3165
    %v3167 = vmul.f32 %v3162, %v3166
    %3168 = vrot.lane.b32.xlu0 %v2721, 80
    %v3169 = vpop.permute.xlu0 %3168
    %3170 = vrot.lane.b32.xlu0 %v2720, 80
    %v3171 = vpop.permute.xlu0 %3170
    %v3174 = vsel %vm2080, %v3167, 0
    %v3176 = vsel %vm2100, %v3171, 0
    %3178 = vmatprep.subr.mxu0 0.0
    %3179 = vmatpush1.msra.mxu0 %v3169
    %3180 = vmatprep.subr.mxu0 0.0
    %3181 = vmatpush1.msra.mxu0 %v3176
    %3182 = vmatprep.subr.mxu0 0.0
    %3183 = vmatpush1.msra.mxu0 0.0
    %3184 = vmatprep.subr.mxu0 0.0
    %3185 = vmatpush1.msra.mxu0 0.0
    %3186 = vmatprep.subr.mxu0 0.0
    %3187 = vmatpush1.msra.mxu0 0.0
    %3188 = vmatprep.subr.mxu0 0.0
    %3189 = vmatpush1.msra.mxu0 0.0
    %3190 = vmatprep.subr.mxu0 0.0
    %3191 = vmatpush1.msra.mxu0 0.0
    %3192 = vmatprep.subr.mxu0 0.0
    %3193 = vmatpush1.msra.mxu0 0.0
    %3194 = vmatprep.subr.mxu0 0.0
    %3195 = vmatpush1.msra.mxu0 0.0
    %3196 = vmatprep.subr.mxu0 0.0
    %3197 = vmatpush1.msra.mxu0 0.0
    %3198 = vmatprep.subr.mxu0 0.0
    %3199 = vmatpush1.msra.mxu0 0.0
    %3200 = vmatprep.subr.mxu0 0.0
    %3201 = vmatpush1.msra.mxu0 0.0
    %3202 = vmatprep.subr.mxu0 0.0
    %3203 = vmatpush1.msra.mxu0 0.0
    %3204 = vmatprep.subr.mxu0 0.0
    %3205 = vmatpush1.msra.mxu0 0.0
    %3206 = vmatprep.subr.mxu0 0.0
    %3207 = vmatpush1.msra.mxu0 0.0
    %3208 = vmatprep.subr.mxu0 0.0
    %3209 = vmatpush1.msra.mxu0 0.0
    %3210 = vmatprep.subr.mxu0 0.0
    %3211 = vmatpush1.msra.mxu0 0.0
    %3212 = vmatprep.subr.mxu0 0.0
    %3213 = vmatpush1.msra.mxu0 0.0
    %3214 = vmatprep.subr.mxu0 0.0
    %3215 = vmatpush1.msra.mxu0 0.0
    %3216 = vmatprep.subr.mxu0 0.0
    %3217 = vmatpush1.msra.mxu0 0.0
    %3218 = vmatprep.subr.mxu0 0.0
    %3219 = vmatpush1.msra.mxu0 0.0
    %3220 = vmatprep.subr.mxu0 0.0
    %3221 = vmatpush1.msra.mxu0 0.0
    %3222 = vmatprep.subr.mxu0 0.0
    %3223 = vmatpush1.msra.mxu0 0.0
    %3224 = vmatprep.subr.mxu0 0.0
    %3225 = vmatpush1.msra.mxu0 0.0
    %3226 = vmatprep.subr.mxu0 0.0
    %3227 = vmatpush1.msra.mxu0 0.0
    %3228 = vmatprep.subr.mxu0 0.0
    %3229 = vmatpush1.msra.mxu0 0.0
    %3230 = vmatprep.subr.mxu0 0.0
    %3231 = vmatpush1.msra.mxu0 0.0
    %3232 = vmatprep.subr.mxu0 0.0
    %3233 = vmatpush1.msra.mxu0 0.0
    %3234 = vmatprep.subr.mxu0 0.0
    %3235 = vmatpush1.msra.mxu0 0.0
    %3236 = vmatprep.subr.mxu0 0.0
    %3237 = vmatpush1.msra.mxu0 0.0
    %3238 = vmatprep.subr.mxu0 0.0
    %3239 = vmatpush1.msra.mxu0 0.0
    %3240 = vmatprep.subr.mxu0 0.0
    %3241 = vmatpush1.msra.mxu0 0.0
    %3242 = vmatprep.mubr.f32.mxu0 0.0
    %3243 = vmatmul.mubr.f32.gmra.mrb[0].mxu0 %v3174
    %v3244 = vpop.f32.mrb[0].mxu0
    %v3245 = vadd.f32 0.0, %v3244
    %v3246 = vpop.f32.mrb[0].mxu0
    %3247 = vdwg.mxu0
    %3248 = vrot.lane.b32.xlu0 %v1884, 104
    %v3249 = vpop.permute.xlu0 %3248
    %3250 = vrot.lane.b32.xlu0 %v2721, 104
    %v3251 = vpop.permute.xlu0 %3250
    %3252 = vrot.lane.b32.xlu0 %v2720, 104
    %v3253 = vpop.permute.xlu0 %3252
    %v3254 = vsel %vm292, %v3249, 0
    %v3256 = vsel %vm292, %v3251, 0
    %v3258 = vsel %vm292, %v3253, 0
    %3260 = vmatprep.subr.mxu0 0.0
    %3261 = vmatpush1.xpose.msra.mxu0 %v3256
    %3262 = vmatprep.subr.mxu0 0.0
    %3263 = vmatpush1.xpose.msra.mxu0 %v3258
    %3264 = vmatprep.subr.mxu0 0.0
    %3265 = vmatpush1.xpose.msra.mxu0 0.0
    %3266 = vmatprep.subr.mxu0 0.0
    %3267 = vmatpush1.xpose.msra.mxu0 0.0
    %3268 = vmatprep.subr.mxu0 0.0
    %3269 = vmatpush1.xpose.msra.mxu0 0.0
    %3270 = vmatprep.subr.mxu0 0.0
    %3271 = vmatpush1.xpose.msra.mxu0 0.0
    %3272 = vmatprep.subr.mxu0 0.0
    %3273 = vmatpush1.xpose.msra.mxu0 0.0
    %3274 = vmatprep.subr.mxu0 0.0
    %3275 = vmatpush1.xpose.msra.mxu0 0.0
    %3276 = vmatprep.subr.mxu0 0.0
    %3277 = vmatpush1.xpose.msra.mxu0 0.0
    %3278 = vmatprep.subr.mxu0 0.0
    %3279 = vmatpush1.xpose.msra.mxu0 0.0
    %3280 = vmatprep.subr.mxu0 0.0
    %3281 = vmatpush1.xpose.msra.mxu0 0.0
    %3282 = vmatprep.subr.mxu0 0.0
    %3283 = vmatpush1.xpose.msra.mxu0 0.0
    %3284 = vmatprep.subr.mxu0 0.0
    %3285 = vmatpush1.xpose.msra.mxu0 0.0
    %3286 = vmatprep.subr.mxu0 0.0
    %3287 = vmatpush1.xpose.msra.mxu0 0.0
    %3288 = vmatprep.subr.mxu0 0.0
    %3289 = vmatpush1.xpose.msra.mxu0 0.0
    %3290 = vmatprep.subr.mxu0 0.0
    %3291 = vmatpush1.xpose.msra.mxu0 0.0
    %3292 = vmatprep.subr.mxu0 0.0
    %3293 = vmatpush1.xpose.msra.mxu0 0.0
    %3294 = vmatprep.subr.mxu0 0.0
    %3295 = vmatpush1.xpose.msra.mxu0 0.0
    %3296 = vmatprep.subr.mxu0 0.0
    %3297 = vmatpush1.xpose.msra.mxu0 0.0
    %3298 = vmatprep.subr.mxu0 0.0
    %3299 = vmatpush1.xpose.msra.mxu0 0.0
    %3300 = vmatprep.subr.mxu0 0.0
    %3301 = vmatpush1.xpose.msra.mxu0 0.0
    %3302 = vmatprep.subr.mxu0 0.0
    %3303 = vmatpush1.xpose.msra.mxu0 0.0
    %3304 = vmatprep.subr.mxu0 0.0
    %3305 = vmatpush1.xpose.msra.mxu0 0.0
    %3306 = vmatprep.subr.mxu0 0.0
    %3307 = vmatpush1.xpose.msra.mxu0 0.0
    %3308 = vmatprep.subr.mxu0 0.0
    %3309 = vmatpush1.xpose.msra.mxu0 0.0
    %3310 = vmatprep.subr.mxu0 0.0
    %3311 = vmatpush1.xpose.msra.mxu0 0.0
    %3312 = vmatprep.subr.mxu0 0.0
    %3313 = vmatpush1.xpose.msra.mxu0 0.0
    %3314 = vmatprep.subr.mxu0 0.0
    %3315 = vmatpush1.xpose.msra.mxu0 0.0
    %3316 = vmatprep.subr.mxu0 0.0
    %3317 = vmatpush1.xpose.msra.mxu0 0.0
    %3318 = vmatprep.subr.mxu0 0.0
    %3319 = vmatpush1.xpose.msra.mxu0 0.0
    %3320 = vmatprep.subr.mxu0 0.0
    %3321 = vmatpush1.xpose.msra.mxu0 0.0
    %3322 = vmatprep.subr.mxu0 0.0
    %3323 = vmatpush1.xpose.msra.mxu0 0.0
    %3324 = vmatprep.mubr.f32.mxu0 0.0
    %3325 = vmatmul.mubr.f32.gmra.mrb[0].mxu0 %v3254
    %v3326 = vpop.f32.mrb[0].mxu0
    %v3327 = vadd.f32 0.0, %v3326
    %v3328 = vpop.f32.mrb[0].mxu0
    %3329 = vdwg.mxu0
    %v3330 = vmul.f32 %v3327, 0.35355338
    %v3331 = vadd.f32 %v3330, %v2804
    %v3332 = vsel %vm2080, %v3331, -inf
    %3333 = vmax.xlane.f32.xlu0 %v3332
    %v3334 = vpop.xlane.xlu0 %3333
    %v3335 = vsub.f32 %v3331, %v3334
    %v3336 = vmul.f32 %v3335, 1.442695
    %v3337 = vpow.pop %v3336
    %v3338 = vsel %vm2080, %v3337, 0.0
    %3339 = vadd.xlane.f32.xlu0 %v3338
    %v3340 = vpop.xlane.xlu0 %3339
    %v3341 = vrcp.pop %v3340
    %v3342 = vmul.f32 %v3337, %v3341
    %3343 = vrot.lane.b32.xlu0 %v2721, 72
    %v3344 = vpop.permute.xlu0 %3343
    %3345 = vrot.lane.b32.xlu0 %v2720, 72
    %v3346 = vpop.permute.xlu0 %3345
    %v3349 = vsel %vm2080, %v3342, 0
    %v3351 = vsel %vm2100, %v3346, 0
    %3353 = vmatprep.subr.mxu0 0.0
    %3354 = vmatpush1.msra.mxu0 %v3344
    %3355 = vmatprep.subr.mxu0 0.0
    %3356 = vmatpush1.msra.mxu0 %v3351
    %3357 = vmatprep.subr.mxu0 0.0
    %3358 = vmatpush1.msra.mxu0 0.0
    %3359 = vmatprep.subr.mxu0 0.0
    %3360 = vmatpush1.msra.mxu0 0.0
    %3361 = vmatprep.subr.mxu0 0.0
    %3362 = vmatpush1.msra.mxu0 0.0
    %3363 = vmatprep.subr.mxu0 0.0
    %3364 = vmatpush1.msra.mxu0 0.0
    %3365 = vmatprep.subr.mxu0 0.0
    %3366 = vmatpush1.msra.mxu0 0.0
    %3367 = vmatprep.subr.mxu0 0.0
    %3368 = vmatpush1.msra.mxu0 0.0
    %3369 = vmatprep.subr.mxu0 0.0
    %3370 = vmatpush1.msra.mxu0 0.0
    %3371 = vmatprep.subr.mxu0 0.0
    %3372 = vmatpush1.msra.mxu0 0.0
    %3373 = vmatprep.subr.mxu0 0.0
    %3374 = vmatpush1.msra.mxu0 0.0
    %3375 = vmatprep.subr.mxu0 0.0
    %3376 = vmatpush1.msra.mxu0 0.0
    %3377 = vmatprep.subr.mxu0 0.0
    %3378 = vmatpush1.msra.mxu0 0.0
    %3379 = vmatprep.subr.mxu0 0.0
    %3380 = vmatpush1.msra.mxu0 0.0
    %3381 = vmatprep.subr.mxu0 0.0
    %3382 = vmatpush1.msra.mxu0 0.0
    %3383 = vmatprep.subr.mxu0 0.0
    %3384 = vmatpush1.msra.mxu0 0.0
    %3385 = vmatprep.subr.mxu0 0.0
    %3386 = vmatpush1.msra.mxu0 0.0
    %3387 = vmatprep.subr.mxu0 0.0
    %3388 = vmatpush1.msra.mxu0 0.0
    %3389 = vmatprep.subr.mxu0 0.0
    %3390 = vmatpush1.msra.mxu0 0.0
    %3391 = vmatprep.subr.mxu0 0.0
    %3392 = vmatpush1.msra.mxu0 0.0
    %3393 = vmatprep.subr.mxu0 0.0
    %3394 = vmatpush1.msra.mxu0 0.0
    %3395 = vmatprep.subr.mxu0 0.0
    %3396 = vmatpush1.msra.mxu0 0.0
    %3397 = vmatprep.subr.mxu0 0.0
    %3398 = vmatpush1.msra.mxu0 0.0
    %3399 = vmatprep.subr.mxu0 0.0
    %3400 = vmatpush1.msra.mxu0 0.0
    %3401 = vmatprep.subr.mxu0 0.0
    %3402 = vmatpush1.msra.mxu0 0.0
    %3403 = vmatprep.subr.mxu0 0.0
    %3404 = vmatpush1.msra.mxu0 0.0
    %3405 = vmatprep.subr.mxu0 0.0
    %3406 = vmatpush1.msra.mxu0 0.0
    %3407 = vmatprep.subr.mxu0 0.0
    %3408 = vmatpush1.msra.mxu0 0.0
    %3409 = vmatprep.subr.mxu0 0.0
    %3410 = vmatpush1.msra.mxu0 0.0
    %3411 = vmatprep.subr.mxu0 0.0
    %3412 = vmatpush1.msra.mxu0 0.0
    %3413 = vmatprep.subr.mxu0 0.0
    %3414 = vmatpush1.msra.mxu0 0.0
    %3415 = vmatprep.subr.mxu0 0.0
    %3416 = vmatpush1.msra.mxu0 0.0
    %3417 = vmatprep.mubr.f32.mxu0 0.0
    %3418 = vmatmul.mubr.f32.gmra.mrb[0].mxu0 %v3349
    %v3419 = vpop.f32.mrb[0].mxu0
    %v3420 = vadd.f32 0.0, %v3419
    %v3421 = vpop.f32.mrb[0].mxu0
    %3422 = vdwg.mxu0
    %3424 = vrot.lane.b32.xlu0 %v3070, 8
    %v3425 = vpop.permute.xlu0 %3424
    %3428 = vrot.lane.b32.xlu0 %v3245, 16
    %v3429 = vpop.permute.xlu0 %3428
    %3432 = vrot.lane.b32.xlu0 %v3420, 24
    %v3433 = vpop.permute.xlu0 %3432
    %v3435 = vsel %vm292, %v2895, %v3425
    %v3436 = vsel %vm970, %v3435, %v3429
    %v3437 = vsel %vm972, %v3436, %v3433
    %s3438 = scalar_lea.vmem [#allocation18], 32
    %3439 = vst.msk [vmem:[%s3438] sm:$0xff] %vm2080, %v2817
    %3440 = vst.msk [vmem:[%s3438 + $0x8] sm:$0xff] %vm2080, %v2992
    %3441 = vst.msk [vmem:[%s3438 + $0x10] sm:$0xff] %vm2080, %v3167
    %3442 = vst.msk [vmem:[%s3438 + $0x18] sm:$0xff] %vm2080, %v3342
    %v3443 = vld [vmem:[%s14] sm:$0xff]
    %v3444 = vld [vmem:[%s14 + $0x8] sm:$0xff]
    %v3445 = vld [vmem:[%s14 + $0x10] sm:$0xff]
    %v3446 = vld [vmem:[%s14 + $0x18] sm:$0xff]
    %v3447 = vld [vmem:[#allocation10] sm:$0x1]
    %v3449 = vlaneseq
    %v3450 = vshrl.u32 %v3449, 7
    %v3451 = vsub.s32 0, %v3450
    %v3452 = vrot.slane %v3447, %v3451
    %v3455 = vsel %vm201, %v2712, 0
    %v3458 = vsel %vm201, %v3437, 0
    %3460 = vmatprep.subr.mxu0 0.0
    %3461 = vmatpush1.msra.mxu0 %v3443
    %3462 = vmatprep.subr.mxu0 0.0
    %3463 = vmatpush1.msra.mxu0 %v3444
    %3464 = vmatprep.subr.mxu0 0.0
    %3465 = vmatpush1.msra.mxu0 %v3445
    %3466 = vmatprep.subr.mxu0 0.0
    %3467 = vmatpush1.msra.mxu0 %v3446
    %3468 = vmatprep.subr.mxu0 0.0
    %3469 = vmatpush1.msra.mxu0 0.0
    %3470 = vmatprep.subr.mxu0 0.0
    %3471 = vmatpush1.msra.mxu0 0.0
    %3472 = vmatprep.subr.mxu0 0.0
    %3473 = vmatpush1.msra.mxu0 0.0
    %3474 = vmatprep.subr.mxu0 0.0
    %3475 = vmatpush1.msra.mxu0 0.0
    %3476 = vmatprep.subr.mxu0 0.0
    %3477 = vmatpush1.msra.mxu0 0.0
    %3478 = vmatprep.subr.mxu0 0.0
    %3479 = vmatpush1.msra.mxu0 0.0
    %3480 = vmatprep.subr.mxu0 0.0
    %3481 = vmatpush1.msra.mxu0 0.0
    %3482 = vmatprep.subr.mxu0 0.0
    %3483 = vmatpush1.msra.mxu0 0.0
    %3484 = vmatprep.subr.mxu0 0.0
    %3485 = vmatpush1.msra.mxu0 0.0
    %3486 = vmatprep.subr.mxu0 0.0
    %3487 = vmatpush1.msra.mxu0 0.0
    %3488 = vmatprep.subr.mxu0 0.0
    %3489 = vmatpush1.msra.mxu0 0.0
    %3490 = vmatprep.subr.mxu0 0.0
    %3491 = vmatpush1.msra.mxu0 0.0
    %3492 = vmatprep.subr.mxu0 0.0
    %3493 = vmatpush1.msra.mxu0 0.0
    %3494 = vmatprep.subr.mxu0 0.0
    %3495 = vmatpush1.msra.mxu0 0.0
    %3496 = vmatprep.subr.mxu0 0.0
    %3497 = vmatpush1.msra.mxu0 0.0
    %3498 = vmatprep.subr.mxu0 0.0
    %3499 = vmatpush1.msra.mxu0 0.0
    %3500 = vmatprep.subr.mxu0 0.0
    %3501 = vmatpush1.msra.mxu0 0.0
    %3502 = vmatprep.subr.mxu0 0.0
    %3503 = vmatpush1.msra.mxu0 0.0
    %3504 = vmatprep.subr.mxu0 0.0
    %3505 = vmatpush1.msra.mxu0 0.0
    %3506 = vmatprep.subr.mxu0 0.0
    %3507 = vmatpush1.msra.mxu0 0.0
    %3508 = vmatprep.subr.mxu0 0.0
    %3509 = vmatpush1.msra.mxu0 0.0
    %3510 = vmatprep.subr.mxu0 0.0
    %3511 = vmatpush1.msra.mxu0 0.0
    %3512 = vmatprep.subr.mxu0 0.0
    %3513 = vmatpush1.msra.mxu0 0.0
    %3514 = vmatprep.subr.mxu0 0.0
    %3515 = vmatpush1.msra.mxu0 0.0
    %3516 = vmatprep.subr.mxu0 0.0
    %3517 = vmatpush1.msra.mxu0 0.0
    %3518 = vmatprep.subr.mxu0 0.0
    %3519 = vmatpush1.msra.mxu0 0.0
    %3520 = vmatprep.subr.mxu0 0.0
    %3521 = vmatpush1.msra.mxu0 0.0
    %3522 = vmatprep.subr.mxu0 0.0
    %3523 = vmatpush1.msra.mxu0 0.0
    %3524 = vmatprep.mubr.f32.mxu0 0.0
    %3525 = vmatmul.mubr.f32.gmra.mrb[0].mxu0 %v3455
    %v3526 = vpop.f32.mrb[0].mxu0
    %v3527 = vadd.f32 %v3452, %v3526
    %v3528 = vpop.f32.mrb[0].mxu0
    %3529 = vmatprep.mubr.f32.mxu0 0.0
    %3530 = vmatmul.mubr.f32.gmra.mrb[0].mxu0 %v3458
    %v3531 = vpop.f32.mrb[0].mxu0
    %v3532 = vadd.f32 %v3452, %v3531
    %v3533 = vpop.f32.mrb[0].mxu0
    %3534 = vdwg.mxu0
    %v3535 = vadd.f32 %v1793, %v3527
    %v3536 = vadd.f32 %v1794, %v3532
    %v3537 = vld [vmem:[%s16] sm:$0x1]
    %v3538 = vld [vmem:[#allocation11] sm:$0x1]
    %v3539 = vsel %vm201, %v3535, 0.0
    %3540 = vadd.xlane.f32.xlu0 %v3539
    %v3541 = vpop.xlane.xlu0 %3540
    %v3542 = vsel %vm201, %v3536, 0.0
    %3543 = vadd.xlane.f32.xlu0 %v3542
    %v3544 = vpop.xlane.xlu0 %3543
    %v3545 = vmul.f32 %v3541, %v1758
    %v3546 = vmul.f32 %v3544, %v1758
    %v3547 = vsub.f32 %v3535, %v3545
    %v3548 = vsub.f32 %v3536, %v3546
    %v3549 = vmul.f32 %v3547, %v3547
    %v3550 = vmul.f32 %v3548, %v3548
    %v3551 = vsel %vm201, %v3549, 0.0
    %3552 = vadd.xlane.f32.xlu0 %v3551
    %v3553 = vpop.xlane.xlu0 %3552
    %v3554 = vsel %vm201, %v3550, 0.0
    %3555 = vadd.xlane.f32.xlu0 %v3554
    %v3556 = vpop.xlane.xlu0 %3555
    %v3557 = vmul.f32 %v3553, %v1758
    %v3558 = vmul.f32 %v3556, %v1758
    %v3559 = vadd.f32 %v3557, 1e-05
    %v3560 = vadd.f32 %v3558, 1e-05
    %v3561 = vrsqrt.pop %v3559
    %v3562 = vrsqrt.pop %v3560
    %v3563 = vmul.f32 %v3547, %v3561
    %v3564 = vmul.f32 %v3548, %v3562
    %v3566 = vlaneseq
    %v3567 = vshrl.u32 %v3566, 7
    %v3568 = vsub.s32 0, %v3567
    %v3569 = vrot.slane %v3537, %v3568
    %v3571 = vmul.f32 %v3563, %v3569
    %v3572 = vmul.f32 %v3564, %v3569
    %v3574 = vlaneseq
    %v3575 = vshrl.u32 %v3574, 7
    %v3576 = vsub.s32 0, %v3575
    %v3577 = vrot.slane %v3538, %v3576
    %v3579 = vadd.f32 %v3571, %v3577
    %v3580 = vadd.f32 %v3572, %v3577
    %v3581 = vld [vmem:[%s18] sm:$0xff]
    %v3582 = vld [vmem:[%s18 + $0x8] sm:$0xff]
    %v3583 = vld [vmem:[%s18 + $0x10] sm:$0xff]
    %v3584 = vld [vmem:[%s18 + $0x18] sm:$0xff]
    %v3585 = vld [vmem:[#allocation13] sm:$0x1]
    %v3587 = vlaneseq
    %v3588 = vshrl.u32 %v3587, 7
    %v3589 = vsub.s32 0, %v3588
    %v3590 = vrot.slane %v3585, %v3589
    %v3593 = vsel %vm201, %v3579, 0
    %v3596 = vsel %vm201, %v3580, 0
    %3598 = vmatprep.subr.mxu0 0.0
    %3599 = vmatpush1.msra.mxu0 %v3581
    %3600 = vmatprep.subr.mxu0 0.0
    %3601 = vmatpush1.msra.mxu0 %v3582
    %3602 = vmatprep.subr.mxu0 0.0
    %3603 = vmatpush1.msra.mxu0 %v3583
    %3604 = vmatprep.subr.mxu0 0.0
    %3605 = vmatpush1.msra.mxu0 %v3584
    %3606 = vmatprep.subr.mxu0 0.0
    %3607 = vmatpush1.msra.mxu0 0.0
    %3608 = vmatprep.subr.mxu0 0.0
    %3609 = vmatpush1.msra.mxu0 0.0
    %3610 = vmatprep.subr.mxu0 0.0
    %3611 = vmatpush1.msra.mxu0 0.0
    %3612 = vmatprep.subr.mxu0 0.0
    %3613 = vmatpush1.msra.mxu0 0.0
    %3614 = vmatprep.subr.mxu0 0.0
    %3615 = vmatpush1.msra.mxu0 0.0
    %3616 = vmatprep.subr.mxu0 0.0
    %3617 = vmatpush1.msra.mxu0 0.0
    %3618 = vmatprep.subr.mxu0 0.0
    %3619 = vmatpush1.msra.mxu0 0.0
    %3620 = vmatprep.subr.mxu0 0.0
    %3621 = vmatpush1.msra.mxu0 0.0
    %3622 = vmatprep.subr.mxu0 0.0
    %3623 = vmatpush1.msra.mxu0 0.0
    %3624 = vmatprep.subr.mxu0 0.0
    %3625 = vmatpush1.msra.mxu0 0.0
    %3626 = vmatprep.subr.mxu0 0.0
    %3627 = vmatpush1.msra.mxu0 0.0
    %3628 = vmatprep.subr.mxu0 0.0
    %3629 = vmatpush1.msra.mxu0 0.0
    %3630 = vmatprep.subr.mxu0 0.0
    %3631 = vmatpush1.msra.mxu0 0.0
    %3632 = vmatprep.subr.mxu0 0.0
    %3633 = vmatpush1.msra.mxu0 0.0
    %3634 = vmatprep.subr.mxu0 0.0
    %3635 = vmatpush1.msra.mxu0 0.0
    %3636 = vmatprep.subr.mxu0 0.0
    %3637 = vmatpush1.msra.mxu0 0.0
    %3638 = vmatprep.subr.mxu0 0.0
    %3639 = vmatpush1.msra.mxu0 0.0
    %3640 = vmatprep.subr.mxu0 0.0
    %3641 = vmatpush1.msra.mxu0 0.0
    %3642 = vmatprep.subr.mxu0 0.0
    %3643 = vmatpush1.msra.mxu0 0.0
    %3644 = vmatprep.subr.mxu0 0.0
    %3645 = vmatpush1.msra.mxu0 0.0
    %3646 = vmatprep.subr.mxu0 0.0
    %3647 = vmatpush1.msra.mxu0 0.0
    %3648 = vmatprep.subr.mxu0 0.0
    %3649 = vmatpush1.msra.mxu0 0.0
    %3650 = vmatprep.subr.mxu0 0.0
    %3651 = vmatpush1.msra.mxu0 0.0
    %3652 = vmatprep.subr.mxu0 0.0
    %3653 = vmatpush1.msra.mxu0 0.0
    %3654 = vmatprep.subr.mxu0 0.0
    %3655 = vmatpush1.msra.mxu0 0.0
    %3656 = vmatprep.subr.mxu0 0.0
    %3657 = vmatpush1.msra.mxu0 0.0
    %3658 = vmatprep.subr.mxu0 0.0
    %3659 = vmatpush1.msra.mxu0 0.0
    %3660 = vmatprep.subr.mxu0 0.0
    %3661 = vmatpush1.msra.mxu0 0.0
    %3662 = vmatprep.mubr.f32.mxu0 0.0
    %3663 = vmatmul.mubr.f32.gmra.mrb[0].mxu0 %v3593
    %v3664 = vpop.f32.mrb[0].mxu0
    %v3665 = vadd.f32 %v3590, %v3664
    %v3666 = vpop.f32.mrb[0].mxu0
    %3667 = vmatprep.mubr.f32.mxu0 0.0
    %3668 = vmatmul.mubr.f32.gmra.mrb[0].mxu0 %v3596
    %v3669 = vpop.f32.mrb[0].mxu0
    %v3670 = vadd.f32 %v3590, %v3669
    %v3671 = vpop.f32.mrb[0].mxu0
    %3672 = vdwg.mxu0
    %v3673 = vmax.f32 %v3665, 0.0
    %v3674 = vmax.f32 %v3670, 0.0
    %v3675 = vld [vmem:[%s20] sm:$0xff]
    %v3676 = vld [vmem:[%s20 + $0x8] sm:$0xff]
    %v3677 = vld [vmem:[%s20 + $0x10] sm:$0xff]
    %v3678 = vld [vmem:[%s20 + $0x18] sm:$0xff]
    %v3679 = vld [vmem:[%s20 + $0x20] sm:$0xff]
    %v3680 = vld [vmem:[%s20 + $0x28] sm:$0xff]
    %v3681 = vld [vmem:[%s20 + $0x30] sm:$0xff]
    %v3682 = vld [vmem:[%s20 + $0x38] sm:$0xff]
    %v3683 = vld [vmem:[#allocation14] sm:$0x1]
    %v3685 = vlaneseq
    %v3686 = vshrl.u32 %v3685, 7
    %v3687 = vsub.s32 0, %v3686
    %v3688 = vrot.slane %v3683, %v3687
    %vm3690 = vcmask 523264
    %v3692 = vsel %vm3690, %v3673, 0
    %v3695 = vsel %vm3690, %v3674, 0
    %3697 = vmatprep.subr.mxu0 0.0
    %3698 = vmatpush1.msra.mxu0 %v3675
    %3699 = vmatprep.subr.mxu0 0.0
    %3700 = vmatpush1.msra.mxu0 %v3676
    %3701 = vmatprep.subr.mxu0 0.0
    %3702 = vmatpush1.msra.mxu0 %v3677
    %3703 = vmatprep.subr.mxu0 0.0
    %3704 = vmatpush1.msra.mxu0 %v3678
    %3705 = vmatprep.subr.mxu0 0.0
    %3706 = vmatpush1.msra.mxu0 %v3679
    %3707 = vmatprep.subr.mxu0 0.0
    %3708 = vmatpush1.msra.mxu0 %v3680
    %3709 = vmatprep.subr.mxu0 0.0
    %3710 = vmatpush1.msra.mxu0 %v3681
    %3711 = vmatprep.subr.mxu0 0.0
    %3712 = vmatpush1.msra.mxu0 %v3682
    %3713 = vmatprep.subr.mxu0 0.0
    %3714 = vmatpush1.msra.mxu0 0.0
    %3715 = vmatprep.subr.mxu0 0.0
    %3716 = vmatpush1.msra.mxu0 0.0
    %3717 = vmatprep.subr.mxu0 0.0
    %3718 = vmatpush1.msra.mxu0 0.0
    %3719 = vmatprep.subr.mxu0 0.0
    %3720 = vmatpush1.msra.mxu0 0.0
    %3721 = vmatprep.subr.mxu0 0.0
    %3722 = vmatpush1.msra.mxu0 0.0
    %3723 = vmatprep.subr.mxu0 0.0
    %3724 = vmatpush1.msra.mxu0 0.0
    %3725 = vmatprep.subr.mxu0 0.0
    %3726 = vmatpush1.msra.mxu0 0.0
    %3727 = vmatprep.subr.mxu0 0.0
    %3728 = vmatpush1.msra.mxu0 0.0
    %3729 = vmatprep.subr.mxu0 0.0
    %3730 = vmatpush1.msra.mxu0 0.0
    %3731 = vmatprep.subr.mxu0 0.0
    %3732 = vmatpush1.msra.mxu0 0.0
    %3733 = vmatprep.subr.mxu0 0.0
    %3734 = vmatpush1.msra.mxu0 0.0
    %3735 = vmatprep.subr.mxu0 0.0
    %3736 = vmatpush1.msra.mxu0 0.0
    %3737 = vmatprep.subr.mxu0 0.0
    %3738 = vmatpush1.msra.mxu0 0.0
    %3739 = vmatprep.subr.mxu0 0.0
    %3740 = vmatpush1.msra.mxu0 0.0
    %3741 = vmatprep.subr.mxu0 0.0
    %3742 = vmatpush1.msra.mxu0 0.0
    %3743 = vmatprep.subr.mxu0 0.0
    %3744 = vmatpush1.msra.mxu0 0.0
    %3745 = vmatprep.subr.mxu0 0.0
    %3746 = vmatpush1.msra.mxu0 0.0
    %3747 = vmatprep.subr.mxu0 0.0
    %3748 = vmatpush1.msra.mxu0 0.0
    %3749 = vmatprep.subr.mxu0 0.0
    %3750 = vmatpush1.msra.mxu0 0.0
    %3751 = vmatprep.subr.mxu0 0.0
    %3752 = vmatpush1.msra.mxu0 0.0
    %3753 = vmatprep.subr.mxu0 0.0
    %3754 = vmatpush1.msra.mxu0 0.0
    %3755 = vmatprep.subr.mxu0 0.0
    %3756 = vmatpush1.msra.mxu0 0.0
    %3757 = vmatprep.subr.mxu0 0.0
    %3758 = vmatpush1.msra.mxu0 0.0
    %3759 = vmatprep.subr.mxu0 0.0
    %3760 = vmatpush1.msra.mxu0 0.0
    %3761 = vmatprep.mubr.f32.mxu0 0.0
    %3762 = vmatmul.mubr.f32.gmra.mrb[0].mxu0 %v3692
    %v3763 = vpop.f32.mrb[0].mxu0
    %v3764 = vadd.f32 %v3688, %v3763
    %v3765 = vpop.f32.mrb[0].mxu0
    %3766 = vmatprep.mubr.f32.mxu0 0.0
    %3767 = vmatmul.mubr.f32.gmra.mrb[0].mxu0 %v3695
    %v3768 = vpop.f32.mrb[0].mxu0
    %v3769 = vadd.f32 %v3688, %v3768
    %v3770 = vpop.f32.mrb[0].mxu0
    %3771 = vdwg.mxu0
    %v3772 = vadd.f32 %v3579, %v3764
    %v3773 = vadd.f32 %v3580, %v3769
    %v3774 = vld [vmem:[%s22] sm:$0x1]
    %v3775 = vld [vmem:[#allocation16] sm:$0x1]
    %v3776 = vsel %vm201, %v3772, 0.0
    %3777 = vadd.xlane.f32.xlu0 %v3776
    %v3778 = vpop.xlane.xlu0 %3777
    %v3779 = vsel %vm201, %v3773, 0.0
    %3780 = vadd.xlane.f32.xlu0 %v3779
    %v3781 = vpop.xlane.xlu0 %3780
    %v3782 = vmul.f32 %v3778, %v1758
    %v3783 = vmul.f32 %v3781, %v1758
    %v3784 = vsub.f32 %v3772, %v3782
    %v3785 = vsub.f32 %v3773, %v3783
    %v3786 = vmul.f32 %v3784, %v3784
    %v3787 = vmul.f32 %v3785, %v3785
    %v3788 = vsel %vm201, %v3786, 0.0
    %3789 = vadd.xlane.f32.xlu0 %v3788
    %v3790 = vpop.xlane.xlu0 %3789
    %v3791 = vsel %vm201, %v3787, 0.0
    %3792 = vadd.xlane.f32.xlu0 %v3791
    %v3793 = vpop.xlane.xlu0 %3792
    %v3794 = vmul.f32 %v3790, %v1758
    %v3795 = vmul.f32 %v3793, %v1758
    %v3796 = vadd.f32 %v3794, 1e-05
    %v3797 = vadd.f32 %v3795, 1e-05
    %v3798 = vrsqrt.pop %v3796
    %v3799 = vrsqrt.pop %v3797
    %v3800 = vmul.f32 %v3784, %v3798
    %v3801 = vmul.f32 %v3785, %v3799
    %v3803 = vlaneseq
    %v3804 = vshrl.u32 %v3803, 7
    %v3805 = vsub.s32 0, %v3804
    %v3806 = vrot.slane %v3774, %v3805
    %v3808 = vmul.f32 %v3800, %v3806
    %v3809 = vmul.f32 %v3801, %v3806
    %v3811 = vlaneseq
    %v3812 = vshrl.u32 %v3811, 7
    %v3813 = vsub.s32 0, %v3812
    %v3814 = vrot.slane %v3775, %v3813
    %v3816 = vadd.f32 %v3808, %v3814
    %v3817 = vadd.f32 %v3809, %v3814
    %3818 = vst.msk [vmem:[#allocation17] sm:$0xff] %vm201, %v3816
    %3819 = vst.msk [vmem:[#allocation17 + $0x8] sm:$0xff] %vm201, %v3817
    // Predicated region
    $region134: #{decoder_layer_forward.1} parent=1 // pred_check
      _
    $region135: #{decoder_layer_forward.1} parent=1 // pred_check_branch
      %3821 = sbr.rel (0) target = $region137
    $region136: #{decoder_layer_forward.1} parent=1 // pred_region
      %s3823 = ssub.s32 256, 256
      %3824 = vsyncadd [#allocation4], %s3823
      %s3825 = sshll.u32 [#allocation17], 4
      %s3826 = int_to_ptr.vmem [resolvable:$true] %s3825
      %3831 = dma.vmem_to_hbm [thread:$0]  %s3826, 256, %s24, [#allocation4], 128, 128, 8
    $region137: #{decoder_layer_forward.1} parent=1 // pred_fallthru
      _
    // Predicated region
    $region138: #{decoder_layer_forward.1} parent=1 // pred_check
      _
    $region139: #{decoder_layer_forward.1} parent=1 // pred_check_branch
      %3833 = sbr.rel (0) target = $region141
    $region140: #{decoder_layer_forward.1} parent=1 // pred_region
      %s3835 = ssub.s32 1024, 1024
      %3836 = vsyncadd [#allocation19], %s3835
      %s3837 = sshll.u32 [#allocation18], 4
      %s3838 = int_to_ptr.vmem [resolvable:$true] %s3837
      %3843 = dma.vmem_to_hbm [thread:$0]  %s3838, 1024, %s25, [#allocation19], 128, 128, 8
    $region141: #{decoder_layer_forward.1} parent=1 // pred_fallthru
      _
    // Predicated region
    $region142: #{decoder_layer_forward.1} parent=1 // pred_check
      _
    $region143: #{decoder_layer_forward.1} parent=1 // pred_check_branch
      %3845 = sbr.rel (0) target = $region145
    $region144: #{decoder_layer_forward.1} parent=1 // pred_region
      %3846 = dma.done [#allocation4], 256
    $region145: #{decoder_layer_forward.1} parent=1 // pred_fallthru
      _
    // Predicated region
    $region146: #{decoder_layer_forward.1} parent=1 // pred_check
      _
    $region147: #{decoder_layer_forward.1} parent=1 // pred_check_branch
      %3848 = sbr.rel (0) target = $region149
    $region148: #{decoder_layer_forward.1} parent=1 // pred_region
      %3849 = dma.done [#allocation19], 1024
    $region149: #{decoder_layer_forward.1} parent=1 // pred_fallthru
      _
    %3850 = vsyncpa [#allocation3], 1
    %3851 = vsyncpa [#allocation6], 1
    %3852 = vsyncpa [#allocation9], 1
    %3853 = vsyncpa [#allocation12], 1
    %3854 = vsyncpa [#allocation15], 1
    %3855 = vsyncpa [#allocation4], 1
    %3856 = vsyncpa [#allocation19], 1

</llo_original>
